<compile_context>
chip_gen: v5e
topology: v5e:2x2
jax: 0.10.0
libtpu: 0.0.40
codegen_flags: <defaults>
</compile_context>

<pallas_src>
import jax
import jax.numpy as jnp
from jax.experimental import pallas as pl
from jax.experimental.pallas import tpu as pltpu

LATENT = 20
LATENT_PAD = 128            # 20  -> 128 lanes (latent vectors inside the kernel)
IN_DIM = 784                # natural input / recon width (no lane padding)
H1_PAD = 512                # 400 -> 512
H2_PAD = 256                # 200 -> 256
HEAD_PAD = 2 * LATENT_PAD   # fused mean|log_var head output width (256)
LAT_SLAB = 3 * LATENT_PAD   # packed output slab: mean | log_var | z (384)

ENCODER_LAYER_SIZES = [784, 400, 200]   # 784 -> 400 -> 200
DECODER_LAYER_SIZES = [200, 400, 784]   # 20 -> 200 -> 400 -> 784 (sigmoid)


def _vae_kernel(
    # batch-tiled inputs
    x_ref, eps_ref,
    # resident weights (bf16) / biases (f32)
    ew0_ref, eb0_ref, ew1_ref, eb1_ref,          # encoder MLP
    wh_ref, bh_ref,                              # fused mean|log_var head
    dw0_ref, db0_ref, dw1_ref, db1_ref, dw2_ref, db2_ref,   # decoder MLP
    # batch-tiled outputs
    recon_ref, lat_ref,
):
    f32 = jnp.float32
    bf16 = jnp.bfloat16

    x = x_ref[...]                               # (TB, 784) bf16

    # ---------- Encoder MLP: 784 -> 512 (ReLU) -> 256 (ReLU) (padded hidden dims) ----------
    h = jnp.dot(x, ew0_ref[...], preferred_element_type=f32) + eb0_ref[...]
    h = jnp.maximum(h, 0.0)
    h = jnp.dot(h.astype(bf16), ew1_ref[...], preferred_element_type=f32) + eb1_ref[...]
    h = jnp.maximum(h, 0.0)

    # ---------- Fused latent heads: one MXU pass, mean in lanes [0:128), log_var in [128:256) ----------
    head = jnp.dot(h.astype(bf16), wh_ref[...], preferred_element_type=f32) + bh_ref[...]
    mean = head[:, :LATENT_PAD]
    log_var = head[:, LATENT_PAD:]

    # ---------- Reparameterize: z = mu + eps * exp(0.5 * log_var) (f32 elementwise) ----------
    # Pad lanes: mean = log_var = 0 -> std = 1, eps pad = 0 -> z pad = 0 (invariant).
    std = jnp.exp(0.5 * log_var)
    z = mean + eps_ref[...].astype(f32) * std
    zb = z.astype(bf16)

    # ---------- Decoder MLP: 128 -> 256 (ReLU) -> 512 (ReLU) -> 784 (Sigmoid) ----------
    d = jnp.dot(zb, dw0_ref[...], preferred_element_type=f32) + db0_ref[...]
    d = jnp.maximum(d, 0.0)
    d = jnp.dot(d.astype(bf16), dw1_ref[...], preferred_element_type=f32) + db1_ref[...]
    d = jnp.maximum(d, 0.0)
    d = jnp.dot(d.astype(bf16), dw2_ref[...], preferred_element_type=f32) + db2_ref[...]

    # ---------- Stores ----------
    # sigmoid(x) = 0.5 * tanh(0.5 * x) + 0.5 : a single EUP transcendental.
    recon_ref[...] = (0.5 * jnp.tanh(0.5 * d) + 0.5).astype(recon_ref.dtype)
    lat_ref[:, 0:HEAD_PAD] = head.astype(lat_ref.dtype)                 # mean | log_var
    lat_ref[:, HEAD_PAD:LAT_SLAB] = z.astype(lat_ref.dtype)            # z


def _round_up(n, m):
    return ((n + m - 1) // m) * m


def _pick_tiling(batch, block_b, min_grid):
    """Adaptive batch tiling: small batches get small tiles; medium batches are
    split into >= min_grid blocks (keeps both v7x TensorCores busy)."""
    nb = pl.cdiv(batch, block_b)
    nb = max(nb, min(min_grid, pl.cdiv(batch, 16)))
    block_b = _round_up(pl.cdiv(batch, nb), 16)     # 16-row granule (bf16 sublane tile)
    return nb, block_b


def vae_forward(x, eps, params, *, block_b=512, min_grid=2,
                out_dtype=jnp.bfloat16):
    """x: (B, 784) or (B, 1, 28, 28); eps: (B, latent).

    Returns (recon, mean, log_var, z) in `out_dtype` (bf16 by default; upcast
    downstream if a strictly-f32 loss is required)."""
    if x.ndim > 2:
        x = x.reshape(-1, 28 * 28)   # matches torch `x.view(-1, 784)`
    B = x.shape[0]

    nb, tb = _pick_tiling(B, block_b, min_grid)
    b_pad = nb * tb

    # Inputs: x as bf16, natural 784-lane width; eps zero-padded to 128 lanes (bf16).
    x_in = x.astype(jnp.bfloat16)
    if b_pad != B:
        x_in = jnp.pad(x_in, ((0, b_pad - B), (0, 0)))
    eps_in = jnp.zeros((b_pad, LATENT_PAD), jnp.bfloat16).at[:B, :LATENT].set(
        eps.astype(jnp.bfloat16))

    def batch_spec(cols):
        return pl.BlockSpec((tb, cols), lambda i: (i, 0))

    def resident(arr):
        # Full-array block, constant index -> stays in VMEM across all grid steps.
        return pl.BlockSpec(arr.shape, lambda i: (0, 0))

    weights = (
        params["ew0"], params["eb0"], params["ew1"], params["eb1"],
        params["wh"], params["bh"],
        params["dw0"], params["db0"], params["dw1"], params["db1"],
        params["dw2"], params["db2"],
    )

    in_specs = [batch_spec(IN_DIM), batch_spec(LATENT_PAD)] + [resident(w) for w in weights]

    recon_pad, lat_pad = pl.pallas_call(
        _vae_kernel,
        grid=(nb,),
        out_shape=(
            jax.ShapeDtypeStruct((b_pad, IN_DIM), out_dtype),     # recon
            jax.ShapeDtypeStruct((b_pad, LAT_SLAB), out_dtype),   # mean | log_var | z slab
        ),
        in_specs=in_specs,
        out_specs=(batch_spec(IN_DIM), batch_spec(LAT_SLAB)),
        compiler_params=pltpu.CompilerParams(
            dimension_semantics=("parallel",),        # megacore split on v7x
            vmem_limit_bytes=32 * 1024 * 1024,        # safe under v7x's 64 MiB per-TC VMEM
        ),
    )(x_in, eps_in, *weights)

    recon = recon_pad[:B, :IN_DIM]
    mean = lat_pad[:B, 0:LATENT]
    log_var = lat_pad[:B, LATENT_PAD:LATENT_PAD + LATENT]
    z = lat_pad[:B, 2 * LATENT_PAD:2 * LATENT_PAD + LATENT]
    return recon, mean, log_var, z


# ----------------------------- parameter handling -----------------------------

def _init_linear(key, in_size, out_size):
    """Mimics torch.nn.Linear default init: U(-1/sqrt(in), 1/sqrt(in)).
    Weight returned already transposed to (in, out); bias as (1, out)."""
    kw, kb = jax.random.split(key)
    bound = 1.0 / jnp.sqrt(jnp.float32(in_size))
    w = jax.random.uniform(kw, (in_size, out_size), jnp.float32, -bound, bound)
    b = jax.random.uniform(kb, (1, out_size), jnp.float32, -bound, bound)
    return w, b


def init_vae_params(key):
    """Logical (unpadded, f32) parameters in (in, out) layout."""
    keys = jax.random.split(key, 7)
    p = {}
    p["ew0"], p["eb0"] = _init_linear(keys[0], 784, 400)
    p["ew1"], p["eb1"] = _init_linear(keys[1], 400, 200)
    p["wm"], p["bm"] = _init_linear(keys[2], 200, LATENT)
    p["wv"], p["bv"] = _init_linear(keys[3], 200, LATENT)
    p["dw0"], p["db0"] = _init_linear(keys[4], LATENT, 200)
    p["dw1"], p["db1"] = _init_linear(keys[5], 200, 400)
    p["dw2"], p["db2"] = _init_linear(keys[6], 400, 784)
    return p


def _pad2(a, rows, cols, dtype):
    out = jnp.zeros((rows, cols), dtype)
    return out.at[:a.shape[0], :a.shape[1]].set(a.astype(dtype))


def prepare_params(p):
    """Pad hidden dims to 128-aligned widths, cast weights to bf16 (biases f32),
    and fuse the mean/log_var heads into a single (256, 256) weight.
    The 784-wide input/output dims are left unpadded (784 = 49*16 is sublane
    aligned for bf16, and the MXU handles the 784-lane N of the last matmul)."""
    bf16, f32 = jnp.bfloat16, jnp.float32
    q = {}
    q["ew0"] = _pad2(p["ew0"], IN_DIM, H1_PAD, bf16)        # (784, 512)
    q["eb0"] = _pad2(p["eb0"], 1, H1_PAD, f32)
    q["ew1"] = _pad2(p["ew1"], H1_PAD, H2_PAD, bf16)        # (512, 256)
    q["eb1"] = _pad2(p["eb1"], 1, H2_PAD, f32)

    wh = jnp.zeros((H2_PAD, HEAD_PAD), bf16)
    wh = wh.at[:200, :LATENT].set(p["wm"].astype(bf16))
    wh = wh.at[:200, LATENT_PAD:LATENT_PAD + LATENT].set(p["wv"].astype(bf16))
    bh = jnp.zeros((1, HEAD_PAD), f32)
    bh = bh.at[:, :LATENT].set(p["bm"])
    bh = bh.at[:, LATENT_PAD:LATENT_PAD + LATENT].set(p["bv"])
    q["wh"], q["bh"] = wh, bh

    q["dw0"] = _pad2(p["dw0"], LATENT_PAD, H2_PAD, bf16)    # (128, 256), rows >= 20 are zero
    q["db0"] = _pad2(p["db0"], 1, H2_PAD, f32)
    q["dw1"] = _pad2(p["dw1"], H2_PAD, H1_PAD, bf16)        # (256, 512)
    q["db1"] = _pad2(p["db1"], 1, H1_PAD, f32)
    q["dw2"] = _pad2(p["dw2"], H1_PAD, IN_DIM, bf16)        # (512, 784)
    q["db2"] = _pad2(p["db2"], 1, IN_DIM, f32)
    return q


# ------------------------------- reference ------------------------------------

def _reference_forward(x, eps, p):
    """Pure-JAX reference matching the kernel's precision recipe
    (bf16 matmuls, f32 accumulation/elementwise, bf16-transported eps)."""
    if x.ndim > 2:
        x = x.reshape(-1, 28 * 28)
    bf16, f32 = jnp.bfloat16, jnp.float32
    eps = eps.astype(bf16).astype(f32)   # kernel receives eps through a bf16 slab

    def mm(a, w):
        return jnp.dot(a.astype(bf16), w.astype(bf16), preferred_element_type=f32)

    h = jax.nn.relu(mm(x, p["ew0"]) + p["eb0"])
    h = jax.nn.relu(mm(h, p["ew1"]) + p["eb1"])
    mean = mm(h, p["wm"]) + p["bm"]
    log_var = mm(h, p["wv"]) + p["bv"]
    z = mean + eps * jnp.exp(0.5 * log_var)
    d = jax.nn.relu(mm(z, p["dw0"]) + p["db0"])
    d = jax.nn.relu(mm(d, p["dw1"]) + p["db1"])
    recon = jax.nn.sigmoid(mm(d, p["dw2"]) + p["db2"])
    return recon, mean, log_var, z


if __name__ == "__main__":
    key = jax.random.PRNGKey(0)
    k_params, k_x, k_eps = jax.random.split(key, 3)

    B = 8
    logical_params = init_vae_params(k_params)
    params = prepare_params(logical_params)

    # Input images in NCHW like the torch DataLoader would give: (B, 1, 28, 28)
    x = jax.random.uniform(k_x, (B, 1, 28, 28), jnp.float32)
    eps = jax.random.normal(k_eps, (B, LATENT), jnp.float32)

    fwd = jax.jit(vae_forward)
    recon_x, means, log_var, z = jax.block_until_ready(fwd(x, eps, params))

    # Sanity check against pure-JAX reference (same bf16/f32 precision recipe).
    # Outputs are stored in bf16 (per perf review), so allow ~3e-2 abs error.
    ref = _reference_forward(x, eps, logical_params)
    for got, want in zip((recon_x, means, log_var, z), ref):
        assert got.shape == want.shape, (got.shape, want.shape)
        err = float(jnp.max(jnp.abs(got.astype(jnp.float32) - want)))
        assert err < 3e-2, err

    assert recon_x.shape == (B, 784)
    assert means.shape == (B, LATENT)
    assert log_var.shape == (B, LATENT)
    assert z.shape == (B, LATENT)

    print("KERNEL_OK")
</pallas_src>

<mosaic_0001>
module attributes {stable_mosaic.version = 11 : i64} {
  func.func @_vae_kernel(%arg0: i32, %arg1: memref<16x784xbf16, #tpu.memory_space<vmem>>, %arg2: memref<16x128xbf16, #tpu.memory_space<vmem>>, %arg3: memref<784x512xbf16, #tpu.memory_space<vmem>>, %arg4: memref<1x512xf32, #tpu.memory_space<vmem>>, %arg5: memref<512x256xbf16, #tpu.memory_space<vmem>>, %arg6: memref<1x256xf32, #tpu.memory_space<vmem>>, %arg7: memref<256x256xbf16, #tpu.memory_space<vmem>>, %arg8: memref<1x256xf32, #tpu.memory_space<vmem>>, %arg9: memref<128x256xbf16, #tpu.memory_space<vmem>>, %arg10: memref<1x256xf32, #tpu.memory_space<vmem>>, %arg11: memref<256x512xbf16, #tpu.memory_space<vmem>>, %arg12: memref<1x512xf32, #tpu.memory_space<vmem>>, %arg13: memref<512x784xbf16, #tpu.memory_space<vmem>>, %arg14: memref<1x784xf32, #tpu.memory_space<vmem>>, %arg15: memref<16x784xbf16, #tpu.memory_space<vmem>>, %arg16: memref<16x384xbf16, #tpu.memory_space<vmem>>) attributes {dimension_semantics = [#tpu.dimension_semantics<parallel>], iteration_bounds = array<i64: 1>, scalar_prefetch = 0 : i64, scratch_operands = 0 : i64, tpu.core_type = #tpu.core_type<tc>, window_params = [{transform_indices = @transform_0, window_bounds = array<i64: 16, 784>}, {transform_indices = @transform_1, window_bounds = array<i64: 16, 128>}, {pipeline_mode = #tpu.pipeline_mode<synchronous>, transform_indices = @transform_2, window_bounds = array<i64: 784, 512>}, {pipeline_mode = #tpu.pipeline_mode<synchronous>, transform_indices = @transform_3, window_bounds = array<i64: 1, 512>}, {pipeline_mode = #tpu.pipeline_mode<synchronous>, transform_indices = @transform_4, window_bounds = array<i64: 512, 256>}, {pipeline_mode = #tpu.pipeline_mode<synchronous>, transform_indices = @transform_5, window_bounds = array<i64: 1, 256>}, {pipeline_mode = #tpu.pipeline_mode<synchronous>, transform_indices = @transform_6, window_bounds = array<i64: 256, 256>}, {pipeline_mode = #tpu.pipeline_mode<synchronous>, transform_indices = @transform_7, window_bounds = array<i64: 1, 256>}, {pipeline_mode = #tpu.pipeline_mode<synchronous>, transform_indices = @transform_8, window_bounds = array<i64: 128, 256>}, {pipeline_mode = #tpu.pipeline_mode<synchronous>, transform_indices = @transform_9, window_bounds = array<i64: 1, 256>}, {pipeline_mode = #tpu.pipeline_mode<synchronous>, transform_indices = @transform_10, window_bounds = array<i64: 256, 512>}, {pipeline_mode = #tpu.pipeline_mode<synchronous>, transform_indices = @transform_11, window_bounds = array<i64: 1, 512>}, {pipeline_mode = #tpu.pipeline_mode<synchronous>, transform_indices = @transform_12, window_bounds = array<i64: 512, 784>}, {pipeline_mode = #tpu.pipeline_mode<synchronous>, transform_indices = @transform_13, window_bounds = array<i64: 1, 784>}, {transform_indices = @transform_14, window_bounds = array<i64: 16, 784>}, {transform_indices = @transform_15, window_bounds = array<i64: 16, 384>}]} {
    %c0 = arith.constant 0 : index
    %c0_0 = arith.constant 0 : index
    %0 = vector.load %arg1[%c0, %c0_0] : memref<16x784xbf16, #tpu.memory_space<vmem>>, vector<16x784xbf16>
    %c0_1 = arith.constant 0 : index
    %c0_2 = arith.constant 0 : index
    %1 = vector.load %arg3[%c0_1, %c0_2] : memref<784x512xbf16, #tpu.memory_space<vmem>>, vector<784x512xbf16>
    %cst = arith.constant dense<0.000000e+00> : vector<16x512xf32>
    %2 = tpu.matmul %0, %1, %cst {dimension_numbers = #tpu.dot_dimension_numbers<[1], [0], [0], [1], [0, 0, 1, 1], [], []>} : vector<16x784xbf16>, vector<784x512xbf16>, vector<16x512xf32> -> vector<16x512xf32>
    %c0_3 = arith.constant 0 : index
    %c0_4 = arith.constant 0 : index
    %3 = vector.load %arg4[%c0_3, %c0_4] : memref<1x512xf32, #tpu.memory_space<vmem>>, vector<1x512xf32>
    %4 = vector.broadcast %3 : vector<1x512xf32> to vector<16x512xf32>
    %5 = arith.addf %2, %4 : vector<16x512xf32>
    %cst_5 = arith.constant 0.000000e+00 : f32
    %6 = vector.broadcast %cst_5 : f32 to vector<16x512xf32>
    %7 = arith.maximumf %5, %6 : vector<16x512xf32>
    %8 = arith.truncf %7 : vector<16x512xf32> to vector<16x512xbf16>
    %c0_6 = arith.constant 0 : index
    %c0_7 = arith.constant 0 : index
    %9 = vector.load %arg5[%c0_6, %c0_7] : memref<512x256xbf16, #tpu.memory_space<vmem>>, vector<512x256xbf16>
    %cst_8 = arith.constant dense<0.000000e+00> : vector<16x256xf32>
    %10 = tpu.matmul %8, %9, %cst_8 {dimension_numbers = #tpu.dot_dimension_numbers<[1], [0], [0], [1], [0, 0, 1, 1], [], []>} : vector<16x512xbf16>, vector<512x256xbf16>, vector<16x256xf32> -> vector<16x256xf32>
    %c0_9 = arith.constant 0 : index
    %c0_10 = arith.constant 0 : index
    %11 = vector.load %arg6[%c0_9, %c0_10] : memref<1x256xf32, #tpu.memory_space<vmem>>, vector<1x256xf32>
    %12 = vector.broadcast %11 : vector<1x256xf32> to vector<16x256xf32>
    %13 = arith.addf %10, %12 : vector<16x256xf32>
    %cst_11 = arith.constant 0.000000e+00 : f32
    %14 = vector.broadcast %cst_11 : f32 to vector<16x256xf32>
    %15 = arith.maximumf %13, %14 : vector<16x256xf32>
    %16 = arith.truncf %15 : vector<16x256xf32> to vector<16x256xbf16>
    %c0_12 = arith.constant 0 : index
    %c0_13 = arith.constant 0 : index
    %17 = vector.load %arg7[%c0_12, %c0_13] : memref<256x256xbf16, #tpu.memory_space<vmem>>, vector<256x256xbf16>
    %cst_14 = arith.constant dense<0.000000e+00> : vector<16x256xf32>
    %18 = tpu.matmul %16, %17, %cst_14 {dimension_numbers = #tpu.dot_dimension_numbers<[1], [0], [0], [1], [0, 0, 1, 1], [], []>} : vector<16x256xbf16>, vector<256x256xbf16>, vector<16x256xf32> -> vector<16x256xf32>
    %c0_15 = arith.constant 0 : index
    %c0_16 = arith.constant 0 : index
    %19 = vector.load %arg8[%c0_15, %c0_16] : memref<1x256xf32, #tpu.memory_space<vmem>>, vector<1x256xf32>
    %20 = vector.broadcast %19 : vector<1x256xf32> to vector<16x256xf32>
    %21 = arith.addf %18, %20 : vector<16x256xf32>
    %22 = vector.extract_strided_slice %21 {offsets = [0, 0], sizes = [16, 128], strides = [1, 1]} : vector<16x256xf32> to vector<16x128xf32>
    %23 = vector.extract_strided_slice %21 {offsets = [0, 128], sizes = [16, 128], strides = [1, 1]} : vector<16x256xf32> to vector<16x128xf32>
    %cst_17 = arith.constant 5.000000e-01 : f32
    %24 = vector.broadcast %cst_17 : f32 to vector<16x128xf32>
    %25 = arith.mulf %24, %23 : vector<16x128xf32>
    %26 = math.exp %25 : vector<16x128xf32>
    %c0_18 = arith.constant 0 : index
    %c0_19 = arith.constant 0 : index
    %27 = vector.load %arg2[%c0_18, %c0_19] : memref<16x128xbf16, #tpu.memory_space<vmem>>, vector<16x128xbf16>
    %28 = arith.extf %27 : vector<16x128xbf16> to vector<16x128xf32>
    %29 = arith.mulf %28, %26 : vector<16x128xf32>
    %30 = arith.addf %22, %29 : vector<16x128xf32>
    %31 = arith.truncf %30 : vector<16x128xf32> to vector<16x128xbf16>
    %c0_20 = arith.constant 0 : index
    %c0_21 = arith.constant 0 : index
    %32 = vector.load %arg9[%c0_20, %c0_21] : memref<128x256xbf16, #tpu.memory_space<vmem>>, vector<128x256xbf16>
    %cst_22 = arith.constant dense<0.000000e+00> : vector<16x256xf32>
    %33 = tpu.matmul %31, %32, %cst_22 {dimension_numbers = #tpu.dot_dimension_numbers<[1], [0], [0], [1], [0, 0, 1, 1], [], []>} : vector<16x128xbf16>, vector<128x256xbf16>, vector<16x256xf32> -> vector<16x256xf32>
    %c0_23 = arith.constant 0 : index
    %c0_24 = arith.constant 0 : index
    %34 = vector.load %arg10[%c0_23, %c0_24] : memref<1x256xf32, #tpu.memory_space<vmem>>, vector<1x256xf32>
    %35 = vector.broadcast %34 : vector<1x256xf32> to vector<16x256xf32>
    %36 = arith.addf %33, %35 : vector<16x256xf32>
    %cst_25 = arith.constant 0.000000e+00 : f32
    %37 = vector.broadcast %cst_25 : f32 to vector<16x256xf32>
    %38 = arith.maximumf %36, %37 : vector<16x256xf32>
    %39 = arith.truncf %38 : vector<16x256xf32> to vector<16x256xbf16>
    %c0_26 = arith.constant 0 : index
    %c0_27 = arith.constant 0 : index
    %40 = vector.load %arg11[%c0_26, %c0_27] : memref<256x512xbf16, #tpu.memory_space<vmem>>, vector<256x512xbf16>
    %cst_28 = arith.constant dense<0.000000e+00> : vector<16x512xf32>
    %41 = tpu.matmul %39, %40, %cst_28 {dimension_numbers = #tpu.dot_dimension_numbers<[1], [0], [0], [1], [0, 0, 1, 1], [], []>} : vector<16x256xbf16>, vector<256x512xbf16>, vector<16x512xf32> -> vector<16x512xf32>
    %c0_29 = arith.constant 0 : index
    %c0_30 = arith.constant 0 : index
    %42 = vector.load %arg12[%c0_29, %c0_30] : memref<1x512xf32, #tpu.memory_space<vmem>>, vector<1x512xf32>
    %43 = vector.broadcast %42 : vector<1x512xf32> to vector<16x512xf32>
    %44 = arith.addf %41, %43 : vector<16x512xf32>
    %cst_31 = arith.constant 0.000000e+00 : f32
    %45 = vector.broadcast %cst_31 : f32 to vector<16x512xf32>
    %46 = arith.maximumf %44, %45 : vector<16x512xf32>
    %47 = arith.truncf %46 : vector<16x512xf32> to vector<16x512xbf16>
    %c0_32 = arith.constant 0 : index
    %c0_33 = arith.constant 0 : index
    %48 = vector.load %arg13[%c0_32, %c0_33] : memref<512x784xbf16, #tpu.memory_space<vmem>>, vector<512x784xbf16>
    %cst_34 = arith.constant dense<0.000000e+00> : vector<16x784xf32>
    %49 = tpu.matmul %47, %48, %cst_34 {dimension_numbers = #tpu.dot_dimension_numbers<[1], [0], [0], [1], [0, 0, 1, 1], [], []>} : vector<16x512xbf16>, vector<512x784xbf16>, vector<16x784xf32> -> vector<16x784xf32>
    %c0_35 = arith.constant 0 : index
    %c0_36 = arith.constant 0 : index
    %50 = vector.load %arg14[%c0_35, %c0_36] : memref<1x784xf32, #tpu.memory_space<vmem>>, vector<1x784xf32>
    %51 = vector.broadcast %50 : vector<1x784xf32> to vector<16x784xf32>
    %52 = arith.addf %49, %51 : vector<16x784xf32>
    %cst_37 = arith.constant 5.000000e-01 : f32
    %53 = vector.broadcast %cst_37 : f32 to vector<16x784xf32>
    %54 = arith.mulf %53, %52 : vector<16x784xf32>
    %55 = math.tanh %54 : vector<16x784xf32>
    %cst_38 = arith.constant 5.000000e-01 : f32
    %56 = vector.broadcast %cst_38 : f32 to vector<16x784xf32>
    %57 = arith.mulf %56, %55 : vector<16x784xf32>
    %cst_39 = arith.constant 5.000000e-01 : f32
    %58 = vector.broadcast %cst_39 : f32 to vector<16x784xf32>
    %59 = arith.addf %57, %58 : vector<16x784xf32>
    %60 = arith.truncf %59 : vector<16x784xf32> to vector<16x784xbf16>
    %c0_40 = arith.constant 0 : index
    %c0_41 = arith.constant 0 : index
    %61 = vector.load %arg15[%c0_40, %c0_41] : memref<16x784xbf16, #tpu.memory_space<vmem>>, vector<16x784xbf16>
    tpu.vector_store %arg15[%c0_40, %c0_41], %60 {strides = array<i32>} : memref<16x784xbf16, #tpu.memory_space<vmem>>, vector<16x784xbf16>,
    %62 = arith.truncf %21 : vector<16x256xf32> to vector<16x256xbf16>
    %c0_42 = arith.constant 0 : index
    %c0_43 = arith.constant 0 : index
    %63 = vector.load %arg16[%c0_42, %c0_43] : memref<16x384xbf16, #tpu.memory_space<vmem>>, vector<16x256xbf16>
    tpu.vector_store %arg16[%c0_42, %c0_43], %62 {strides = array<i32>} : memref<16x384xbf16, #tpu.memory_space<vmem>>, vector<16x256xbf16>,
    %64 = arith.truncf %30 : vector<16x128xf32> to vector<16x128xbf16>
    %c0_44 = arith.constant 0 : index
    %c256 = arith.constant 256 : index
    %65 = vector.load %arg16[%c0_44, %c256] : memref<16x384xbf16, #tpu.memory_space<vmem>>, vector<16x128xbf16>
    tpu.vector_store %arg16[%c0_44, %c256], %64 {strides = array<i32>} : memref<16x384xbf16, #tpu.memory_space<vmem>>, vector<16x128xbf16>,
    return
  }
  func.func @transform_0(%arg0: i32) -> (i32, i32) {
    %c0_i32 = arith.constant 0 : i32
    %c0_i32_0 = arith.constant 0 : i32
    return %arg0, %c0_i32 : i32, i32
  }
  func.func @transform_1(%arg0: i32) -> (i32, i32) {
    %c0_i32 = arith.constant 0 : i32
    %c0_i32_0 = arith.constant 0 : i32
    return %arg0, %c0_i32 : i32, i32
  }
  func.func @transform_2(%arg0: i32) -> (i32, i32) {
    %c0_i32 = arith.constant 0 : i32
    %c0_i32_0 = arith.constant 0 : i32
    %c0_i32_1 = arith.constant 0 : i32
    return %c0_i32, %c0_i32_0 : i32, i32
  }
  func.func @transform_3(%arg0: i32) -> (i32, i32) {
    %c0_i32 = arith.constant 0 : i32
    %c0_i32_0 = arith.constant 0 : i32
    %c0_i32_1 = arith.constant 0 : i32
    return %c0_i32, %c0_i32_0 : i32, i32
  }
  func.func @transform_4(%arg0: i32) -> (i32, i32) {
    %c0_i32 = arith.constant 0 : i32
    %c0_i32_0 = arith.constant 0 : i32
    %c0_i32_1 = arith.constant 0 : i32
    return %c0_i32, %c0_i32_0 : i32, i32
  }
  func.func @transform_5(%arg0: i32) -> (i32, i32) {
    %c0_i32 = arith.constant 0 : i32
    %c0_i32_0 = arith.constant 0 : i32
    %c0_i32_1 = arith.constant 0 : i32
    return %c0_i32, %c0_i32_0 : i32, i32
  }
  func.func @transform_6(%arg0: i32) -> (i32, i32) {
    %c0_i32 = arith.constant 0 : i32
    %c0_i32_0 = arith.constant 0 : i32
    %c0_i32_1 = arith.constant 0 : i32
    return %c0_i32, %c0_i32_0 : i32, i32
  }
  func.func @transform_7(%arg0: i32) -> (i32, i32) {
    %c0_i32 = arith.constant 0 : i32
    %c0_i32_0 = arith.constant 0 : i32
    %c0_i32_1 = arith.constant 0 : i32
    return %c0_i32, %c0_i32_0 : i32, i32
  }
  func.func @transform_8(%arg0: i32) -> (i32, i32) {
    %c0_i32 = arith.constant 0 : i32
    %c0_i32_0 = arith.constant 0 : i32
    %c0_i32_1 = arith.constant 0 : i32
    return %c0_i32, %c0_i32_0 : i32, i32
  }
  func.func @transform_9(%arg0: i32) -> (i32, i32) {
    %c0_i32 = arith.constant 0 : i32
    %c0_i32_0 = arith.constant 0 : i32
    %c0_i32_1 = arith.constant 0 : i32
    return %c0_i32, %c0_i32_0 : i32, i32
  }
  func.func @transform_10(%arg0: i32) -> (i32, i32) {
    %c0_i32 = arith.constant 0 : i32
    %c0_i32_0 = arith.constant 0 : i32
    %c0_i32_1 = arith.constant 0 : i32
    return %c0_i32, %c0_i32_0 : i32, i32
  }
  func.func @transform_11(%arg0: i32) -> (i32, i32) {
    %c0_i32 = arith.constant 0 : i32
    %c0_i32_0 = arith.constant 0 : i32
    %c0_i32_1 = arith.constant 0 : i32
    return %c0_i32, %c0_i32_0 : i32, i32
  }
  func.func @transform_12(%arg0: i32) -> (i32, i32) {
    %c0_i32 = arith.constant 0 : i32
    %c0_i32_0 = arith.constant 0 : i32
    %c0_i32_1 = arith.constant 0 : i32
    return %c0_i32, %c0_i32_0 : i32, i32
  }
  func.func @transform_13(%arg0: i32) -> (i32, i32) {
    %c0_i32 = arith.constant 0 : i32
    %c0_i32_0 = arith.constant 0 : i32
    %c0_i32_1 = arith.constant 0 : i32
    return %c0_i32, %c0_i32_0 : i32, i32
  }
  func.func @transform_14(%arg0: i32) -> (i32, i32) {
    %c0_i32 = arith.constant 0 : i32
    %c0_i32_0 = arith.constant 0 : i32
    return %arg0, %c0_i32 : i32, i32
  }
  func.func @transform_15(%arg0: i32) -> (i32, i32) {
    %c0_i32 = arith.constant 0 : i32
    %c0_i32_0 = arith.constant 0 : i32
    return %arg0, %c0_i32 : i32, i32
  }
}

</mosaic_0001>

<llo_original>
// kernel: vae_forward.1
$region0: #{vae_forward.1}
  #allocation0 [shape = 'u32[]', space=smem, size = 0x4, offset = 0x4, fixed_abs, tag = 'smem constant byte address 0x4 - core index']
  #allocation1 [shape = 'u32[72,128]{1,0:T(1,128)}', space=vmem, size = 0x9000, scoped, tag = 'internal scratch']
  %s0 = inlined_call_operand.vmem [shape: bf16[16,784], index: 0, kind: input, shape index: {}]
  %s1 = inlined_call_operand.vmem [shape: bf16[16,128], index: 1, kind: input, shape index: {}]
  %s2 = inlined_call_operand.vmem [shape: bf16[784,512], index: 2, kind: input, shape index: {}]
  %s3 = inlined_call_operand.vmem [shape: f32[1,512], index: 3, kind: input, shape index: {}]
  %s4 = inlined_call_operand.vmem [shape: bf16[512,256], index: 4, kind: input, shape index: {}]
  %s5 = inlined_call_operand.vmem [shape: f32[1,256], index: 5, kind: input, shape index: {}]
  %s6 = inlined_call_operand.vmem [shape: bf16[256,256], index: 6, kind: input, shape index: {}]
  %s7 = inlined_call_operand.vmem [shape: f32[1,256], index: 7, kind: input, shape index: {}]
  %s8 = inlined_call_operand.vmem [shape: bf16[128,256], index: 8, kind: input, shape index: {}]
  %s9 = inlined_call_operand.vmem [shape: f32[1,256], index: 9, kind: input, shape index: {}]
  %s10 = inlined_call_operand.vmem [shape: bf16[256,512], index: 10, kind: input, shape index: {}]
  %s11 = inlined_call_operand.vmem [shape: f32[1,512], index: 11, kind: input, shape index: {}]
  %s12 = inlined_call_operand.vmem [shape: bf16[512,784], index: 12, kind: input, shape index: {}]
  %s13 = inlined_call_operand.vmem [shape: f32[1,784], index: 13, kind: input, shape index: {}]
  %s14 = inlined_call_operand.vmem [shape: bf16[16,784], index: 14, kind: output, shape index: {0}]
  %s15 = inlined_call_operand.vmem [shape: bf16[16,384], index: 15, kind: output, shape index: {1}]
  %16 = xla_tuple %s14, %s15
  %s17 = sld [smem:[#allocation0]]
  $region74: #{vae_forward.1} parent=0
    _
  %s19 = ssub.s32 1, %s17
  %s20 = scalar_select 0, %s19, %s17
  // Predicated region
  $region2: #{vae_forward.1} parent=0 // pred_check
    _
  $region3: #{vae_forward.1} parent=0 // pred_check_branch
    %22 = sbr.rel (0) target = $region5
  $region4: #{vae_forward.1} parent=0 // pred_region
    _
  $region5: #{vae_forward.1} parent=0 // pred_fallthru
    _
  // Predicated region
  $region6: #{vae_forward.1} parent=0 // pred_check
    _
  $region7: #{vae_forward.1} parent=0 // pred_check_branch
    %24 = sbr.rel (0) target = $region9
  $region8: #{vae_forward.1} parent=0 // pred_region
    _
  $region9: #{vae_forward.1} parent=0 // pred_fallthru
    _
  // Predicated region
  $region10: #{vae_forward.1} parent=0 // pred_check
    _
  $region11: #{vae_forward.1} parent=0 // pred_check_branch
    %26 = sbr.rel (0) target = $region13
  $region12: #{vae_forward.1} parent=0 // pred_region
    _
  $region13: #{vae_forward.1} parent=0 // pred_fallthru
    _
  // Predicated region
  $region14: #{vae_forward.1} parent=0 // pred_check
    _
  $region15: #{vae_forward.1} parent=0 // pred_check_branch
    %28 = sbr.rel (0) target = $region17
  $region16: #{vae_forward.1} parent=0 // pred_region
    _
  $region17: #{vae_forward.1} parent=0 // pred_fallthru
    _
  // Predicated region
  $region18: #{vae_forward.1} parent=0 // pred_check
    _
  $region19: #{vae_forward.1} parent=0 // pred_check_branch
    %30 = sbr.rel (0) target = $region21
  $region20: #{vae_forward.1} parent=0 // pred_region
    _
  $region21: #{vae_forward.1} parent=0 // pred_fallthru
    _
  // Predicated region
  $region22: #{vae_forward.1} parent=0 // pred_check
    _
  $region23: #{vae_forward.1} parent=0 // pred_check_branch
    %32 = sbr.rel (0) target = $region25
  $region24: #{vae_forward.1} parent=0 // pred_region
    _
  $region25: #{vae_forward.1} parent=0 // pred_fallthru
    _
  // Predicated region
  $region26: #{vae_forward.1} parent=0 // pred_check
    _
  $region27: #{vae_forward.1} parent=0 // pred_check_branch
    %34 = sbr.rel (0) target = $region29
  $region28: #{vae_forward.1} parent=0 // pred_region
    _
  $region29: #{vae_forward.1} parent=0 // pred_fallthru
    _
  // Predicated region
  $region30: #{vae_forward.1} parent=0 // pred_check
    _
  $region31: #{vae_forward.1} parent=0 // pred_check_branch
    %36 = sbr.rel (0) target = $region33
  $region32: #{vae_forward.1} parent=0 // pred_region
    _
  $region33: #{vae_forward.1} parent=0 // pred_fallthru
    _
  // Predicated region
  $region34: #{vae_forward.1} parent=0 // pred_check
    _
  $region35: #{vae_forward.1} parent=0 // pred_check_branch
    %38 = sbr.rel (0) target = $region37
  $region36: #{vae_forward.1} parent=0 // pred_region
    _
  $region37: #{vae_forward.1} parent=0 // pred_fallthru
    _
  // Predicated region
  $region38: #{vae_forward.1} parent=0 // pred_check
    _
  $region39: #{vae_forward.1} parent=0 // pred_check_branch
    %40 = sbr.rel (0) target = $region41
  $region40: #{vae_forward.1} parent=0 // pred_region
    _
  $region41: #{vae_forward.1} parent=0 // pred_fallthru
    _
  // Predicated region
  $region42: #{vae_forward.1} parent=0 // pred_check
    _
  $region43: #{vae_forward.1} parent=0 // pred_check_branch
    %42 = sbr.rel (0) target = $region45
  $region44: #{vae_forward.1} parent=0 // pred_region
    _
  $region45: #{vae_forward.1} parent=0 // pred_fallthru
    _
  // Predicated region
  $region46: #{vae_forward.1} parent=0 // pred_check
    _
  $region47: #{vae_forward.1} parent=0 // pred_check_branch
    %44 = sbr.rel (0) target = $region49
  $region48: #{vae_forward.1} parent=0 // pred_region
    _
  $region49: #{vae_forward.1} parent=0 // pred_fallthru
    _
  // Predicated region
  $region50: #{vae_forward.1} parent=0 // pred_check
    _
  $region51: #{vae_forward.1} parent=0 // pred_check_branch
    %46 = sbr.rel (0) target = $region53
  $region52: #{vae_forward.1} parent=0 // pred_region
    _
  $region53: #{vae_forward.1} parent=0 // pred_fallthru
    _
  // Predicated region
  $region54: #{vae_forward.1} parent=0 // pred_check
    _
  $region55: #{vae_forward.1} parent=0 // pred_check_branch
    %48 = sbr.rel (0) target = $region57
  $region56: #{vae_forward.1} parent=0 // pred_region
    _
  $region57: #{vae_forward.1} parent=0 // pred_fallthru
    _
  %v50 = vld [vmem:[%s0] sm:$0xff]
  %v51 = vld [vmem:[%s0 + $0x8] sm:$0xff]
  %v52 = vld [vmem:[%s0 + $0x10] sm:$0xff]
  %v53 = vld [vmem:[%s0 + $0x18] sm:$0xf]
  %v54 = vld [vmem:[%s0 + $0x1c] sm:$0xff]
  %v55 = vld [vmem:[%s0 + $0x24] sm:$0xff]
  %v56 = vld [vmem:[%s0 + $0x2c] sm:$0xff]
  %v57 = vld [vmem:[%s0 + $0x34] sm:$0xf]
  %v58 = vld [vmem:[%s2] sm:$0xff]
  %v59 = vld [vmem:[%s2 + $0x8] sm:$0xff]
  %v60 = vld [vmem:[%s2 + $0x10] sm:$0xff]
  %v61 = vld [vmem:[%s2 + $0x18] sm:$0xff]
  %v62 = vld [vmem:[%s2 + $0x20] sm:$0xff]
  %v63 = vld [vmem:[%s2 + $0x28] sm:$0xff]
  %v64 = vld [vmem:[%s2 + $0x30] sm:$0xff]
  %v65 = vld [vmem:[%s2 + $0x38] sm:$0xff]
  %v66 = vld [vmem:[%s2 + $0x40] sm:$0xff]
  %v67 = vld [vmem:[%s2 + $0x48] sm:$0xff]
  %v68 = vld [vmem:[%s2 + $0x50] sm:$0xff]
  %v69 = vld [vmem:[%s2 + $0x58] sm:$0xff]
  %v70 = vld [vmem:[%s2 + $0x60] sm:$0xff]
  %v71 = vld [vmem:[%s2 + $0x68] sm:$0xff]
  %v72 = vld [vmem:[%s2 + $0x70] sm:$0xff]
  %v73 = vld [vmem:[%s2 + $0x78] sm:$0xff]
  %v74 = vld [vmem:[%s2 + $0x80] sm:$0xff]
  %v75 = vld [vmem:[%s2 + $0x88] sm:$0xff]
  %v76 = vld [vmem:[%s2 + $0x90] sm:$0xff]
  %v77 = vld [vmem:[%s2 + $0x98] sm:$0xff]
  %v78 = vld [vmem:[%s2 + $0xa0] sm:$0xff]
  %v79 = vld [vmem:[%s2 + $0xa8] sm:$0xff]
  %v80 = vld [vmem:[%s2 + $0xb0] sm:$0xff]
  %v81 = vld [vmem:[%s2 + $0xb8] sm:$0xff]
  %v82 = vld [vmem:[%s2 + $0xc0] sm:$0xff]
  %v83 = vld [vmem:[%s2 + $0xc8] sm:$0xff]
  %v84 = vld [vmem:[%s2 + $0xd0] sm:$0xff]
  %v85 = vld [vmem:[%s2 + $0xd8] sm:$0xff]
  %v86 = vld [vmem:[%s2 + $0xe0] sm:$0xff]
  %v87 = vld [vmem:[%s2 + $0xe8] sm:$0xff]
  %v88 = vld [vmem:[%s2 + $0xf0] sm:$0xff]
  %v89 = vld [vmem:[%s2 + $0xf8] sm:$0xff]
  %v90 = vld [vmem:[%s2 + $0x100] sm:$0xff]
  %v91 = vld [vmem:[%s2 + $0x108] sm:$0xff]
  %v92 = vld [vmem:[%s2 + $0x110] sm:$0xff]
  %v93 = vld [vmem:[%s2 + $0x118] sm:$0xff]
  %v94 = vld [vmem:[%s2 + $0x120] sm:$0xff]
  %v95 = vld [vmem:[%s2 + $0x128] sm:$0xff]
  %v96 = vld [vmem:[%s2 + $0x130] sm:$0xff]
  %v97 = vld [vmem:[%s2 + $0x138] sm:$0xff]
  %v98 = vld [vmem:[%s2 + $0x140] sm:$0xff]
  %v99 = vld [vmem:[%s2 + $0x148] sm:$0xff]
  %v100 = vld [vmem:[%s2 + $0x150] sm:$0xff]
  %v101 = vld [vmem:[%s2 + $0x158] sm:$0xff]
  %v102 = vld [vmem:[%s2 + $0x160] sm:$0xff]
  %v103 = vld [vmem:[%s2 + $0x168] sm:$0xff]
  %v104 = vld [vmem:[%s2 + $0x170] sm:$0xff]
  %v105 = vld [vmem:[%s2 + $0x178] sm:$0xff]
  %v106 = vld [vmem:[%s2 + $0x180] sm:$0xff]
  %v107 = vld [vmem:[%s2 + $0x188] sm:$0xff]
  %v108 = vld [vmem:[%s2 + $0x190] sm:$0xff]
  %v109 = vld [vmem:[%s2 + $0x198] sm:$0xff]
  %v110 = vld [vmem:[%s2 + $0x1a0] sm:$0xff]
  %v111 = vld [vmem:[%s2 + $0x1a8] sm:$0xff]
  %v112 = vld [vmem:[%s2 + $0x1b0] sm:$0xff]
  %v113 = vld [vmem:[%s2 + $0x1b8] sm:$0xff]
  %v114 = vld [vmem:[%s2 + $0x1c0] sm:$0xff]
  %v115 = vld [vmem:[%s2 + $0x1c8] sm:$0xff]
  %v116 = vld [vmem:[%s2 + $0x1d0] sm:$0xff]
  %v117 = vld [vmem:[%s2 + $0x1d8] sm:$0xff]
  %v118 = vld [vmem:[%s2 + $0x1e0] sm:$0xff]
  %v119 = vld [vmem:[%s2 + $0x1e8] sm:$0xff]
  %v120 = vld [vmem:[%s2 + $0x1f0] sm:$0xff]
  %v121 = vld [vmem:[%s2 + $0x1f8] sm:$0xff]
  %v122 = vld [vmem:[%s2 + $0x200] sm:$0xff]
  %v123 = vld [vmem:[%s2 + $0x208] sm:$0xff]
  %v124 = vld [vmem:[%s2 + $0x210] sm:$0xff]
  %v125 = vld [vmem:[%s2 + $0x218] sm:$0xff]
  %v126 = vld [vmem:[%s2 + $0x220] sm:$0xff]
  %v127 = vld [vmem:[%s2 + $0x228] sm:$0xff]
  %v128 = vld [vmem:[%s2 + $0x230] sm:$0xff]
  %v129 = vld [vmem:[%s2 + $0x238] sm:$0xff]
  %v130 = vld [vmem:[%s2 + $0x240] sm:$0xff]
  %v131 = vld [vmem:[%s2 + $0x248] sm:$0xff]
  %v132 = vld [vmem:[%s2 + $0x250] sm:$0xff]
  %v133 = vld [vmem:[%s2 + $0x258] sm:$0xff]
  %v134 = vld [vmem:[%s2 + $0x260] sm:$0xff]
  %v135 = vld [vmem:[%s2 + $0x268] sm:$0xff]
  %v136 = vld [vmem:[%s2 + $0x270] sm:$0xff]
  %v137 = vld [vmem:[%s2 + $0x278] sm:$0xff]
  %v138 = vld [vmem:[%s2 + $0x280] sm:$0xff]
  %v139 = vld [vmem:[%s2 + $0x288] sm:$0xff]
  %v140 = vld [vmem:[%s2 + $0x290] sm:$0xff]
  %v141 = vld [vmem:[%s2 + $0x298] sm:$0xff]
  %v142 = vld [vmem:[%s2 + $0x2a0] sm:$0xff]
  %v143 = vld [vmem:[%s2 + $0x2a8] sm:$0xff]
  %v144 = vld [vmem:[%s2 + $0x2b0] sm:$0xff]
  %v145 = vld [vmem:[%s2 + $0x2b8] sm:$0xff]
  %v146 = vld [vmem:[%s2 + $0x2c0] sm:$0xff]
  %v147 = vld [vmem:[%s2 + $0x2c8] sm:$0xff]
  %v148 = vld [vmem:[%s2 + $0x2d0] sm:$0xff]
  %v149 = vld [vmem:[%s2 + $0x2d8] sm:$0xff]
  %v150 = vld [vmem:[%s2 + $0x2e0] sm:$0xff]
  %v151 = vld [vmem:[%s2 + $0x2e8] sm:$0xff]
  %v152 = vld [vmem:[%s2 + $0x2f0] sm:$0xff]
  %v153 = vld [vmem:[%s2 + $0x2f8] sm:$0xff]
  %v154 = vld [vmem:[%s2 + $0x300] sm:$0xff]
  %v155 = vld [vmem:[%s2 + $0x308] sm:$0xff]
  %v156 = vld [vmem:[%s2 + $0x310] sm:$0xff]
  %v157 = vld [vmem:[%s2 + $0x318] sm:$0xff]
  %v158 = vld [vmem:[%s2 + $0x320] sm:$0xff]
  %v159 = vld [vmem:[%s2 + $0x328] sm:$0xff]
  %v160 = vld [vmem:[%s2 + $0x330] sm:$0xff]
  %v161 = vld [vmem:[%s2 + $0x338] sm:$0xff]
  %v162 = vld [vmem:[%s2 + $0x340] sm:$0xff]
  %v163 = vld [vmem:[%s2 + $0x348] sm:$0xff]
  %v164 = vld [vmem:[%s2 + $0x350] sm:$0xff]
  %v165 = vld [vmem:[%s2 + $0x358] sm:$0xff]
  %v166 = vld [vmem:[%s2 + $0x360] sm:$0xff]
  %v167 = vld [vmem:[%s2 + $0x368] sm:$0xff]
  %v168 = vld [vmem:[%s2 + $0x370] sm:$0xff]
  %v169 = vld [vmem:[%s2 + $0x378] sm:$0xff]
  %v170 = vld [vmem:[%s2 + $0x380] sm:$0xff]
  %v171 = vld [vmem:[%s2 + $0x388] sm:$0xff]
  %v172 = vld [vmem:[%s2 + $0x390] sm:$0xff]
  %v173 = vld [vmem:[%s2 + $0x398] sm:$0xff]
  %v174 = vld [vmem:[%s2 + $0x3a0] sm:$0xff]
  %v175 = vld [vmem:[%s2 + $0x3a8] sm:$0xff]
  %v176 = vld [vmem:[%s2 + $0x3b0] sm:$0xff]
  %v177 = vld [vmem:[%s2 + $0x3b8] sm:$0xff]
  %v178 = vld [vmem:[%s2 + $0x3c0] sm:$0xff]
  %v179 = vld [vmem:[%s2 + $0x3c8] sm:$0xff]
  %v180 = vld [vmem:[%s2 + $0x3d0] sm:$0xff]
  %v181 = vld [vmem:[%s2 + $0x3d8] sm:$0xff]
  %v182 = vld [vmem:[%s2 + $0x3e0] sm:$0xff]
  %v183 = vld [vmem:[%s2 + $0x3e8] sm:$0xff]
  %v184 = vld [vmem:[%s2 + $0x3f0] sm:$0xff]
  %v185 = vld [vmem:[%s2 + $0x3f8] sm:$0xff]
  %v186 = vld [vmem:[%s2 + $0x400] sm:$0xff]
  %v187 = vld [vmem:[%s2 + $0x408] sm:$0xff]
  %v188 = vld [vmem:[%s2 + $0x410] sm:$0xff]
  %v189 = vld [vmem:[%s2 + $0x418] sm:$0xff]
  %v190 = vld [vmem:[%s2 + $0x420] sm:$0xff]
  %v191 = vld [vmem:[%s2 + $0x428] sm:$0xff]
  %v192 = vld [vmem:[%s2 + $0x430] sm:$0xff]
  %v193 = vld [vmem:[%s2 + $0x438] sm:$0xff]
  %v194 = vld [vmem:[%s2 + $0x440] sm:$0xff]
  %v195 = vld [vmem:[%s2 + $0x448] sm:$0xff]
  %v196 = vld [vmem:[%s2 + $0x450] sm:$0xff]
  %v197 = vld [vmem:[%s2 + $0x458] sm:$0xff]
  %v198 = vld [vmem:[%s2 + $0x460] sm:$0xff]
  %v199 = vld [vmem:[%s2 + $0x468] sm:$0xff]
  %v200 = vld [vmem:[%s2 + $0x470] sm:$0xff]
  %v201 = vld [vmem:[%s2 + $0x478] sm:$0xff]
  %v202 = vld [vmem:[%s2 + $0x480] sm:$0xff]
  %v203 = vld [vmem:[%s2 + $0x488] sm:$0xff]
  %v204 = vld [vmem:[%s2 + $0x490] sm:$0xff]
  %v205 = vld [vmem:[%s2 + $0x498] sm:$0xff]
  %v206 = vld [vmem:[%s2 + $0x4a0] sm:$0xff]
  %v207 = vld [vmem:[%s2 + $0x4a8] sm:$0xff]
  %v208 = vld [vmem:[%s2 + $0x4b0] sm:$0xff]
  %v209 = vld [vmem:[%s2 + $0x4b8] sm:$0xff]
  %v210 = vld [vmem:[%s2 + $0x4c0] sm:$0xff]
  %v211 = vld [vmem:[%s2 + $0x4c8] sm:$0xff]
  %v212 = vld [vmem:[%s2 + $0x4d0] sm:$0xff]
  %v213 = vld [vmem:[%s2 + $0x4d8] sm:$0xff]
  %v214 = vld [vmem:[%s2 + $0x4e0] sm:$0xff]
  %v215 = vld [vmem:[%s2 + $0x4e8] sm:$0xff]
  %v216 = vld [vmem:[%s2 + $0x4f0] sm:$0xff]
  %v217 = vld [vmem:[%s2 + $0x4f8] sm:$0xff]
  %v218 = vld [vmem:[%s2 + $0x500] sm:$0xff]
  %v219 = vld [vmem:[%s2 + $0x508] sm:$0xff]
  %v220 = vld [vmem:[%s2 + $0x510] sm:$0xff]
  %v221 = vld [vmem:[%s2 + $0x518] sm:$0xff]
  %v222 = vld [vmem:[%s2 + $0x520] sm:$0xff]
  %v223 = vld [vmem:[%s2 + $0x528] sm:$0xff]
  %v224 = vld [vmem:[%s2 + $0x530] sm:$0xff]
  %v225 = vld [vmem:[%s2 + $0x538] sm:$0xff]
  %v226 = vld [vmem:[%s2 + $0x540] sm:$0xff]
  %v227 = vld [vmem:[%s2 + $0x548] sm:$0xff]
  %v228 = vld [vmem:[%s2 + $0x550] sm:$0xff]
  %v229 = vld [vmem:[%s2 + $0x558] sm:$0xff]
  %v230 = vld [vmem:[%s2 + $0x560] sm:$0xff]
  %v231 = vld [vmem:[%s2 + $0x568] sm:$0xff]
  %v232 = vld [vmem:[%s2 + $0x570] sm:$0xff]
  %v233 = vld [vmem:[%s2 + $0x578] sm:$0xff]
  %v234 = vld [vmem:[%s2 + $0x580] sm:$0xff]
  %v235 = vld [vmem:[%s2 + $0x588] sm:$0xff]
  %v236 = vld [vmem:[%s2 + $0x590] sm:$0xff]
  %v237 = vld [vmem:[%s2 + $0x598] sm:$0xff]
  %v238 = vld [vmem:[%s2 + $0x5a0] sm:$0xff]
  %v239 = vld [vmem:[%s2 + $0x5a8] sm:$0xff]
  %v240 = vld [vmem:[%s2 + $0x5b0] sm:$0xff]
  %v241 = vld [vmem:[%s2 + $0x5b8] sm:$0xff]
  %v242 = vld [vmem:[%s2 + $0x5c0] sm:$0xff]
  %v243 = vld [vmem:[%s2 + $0x5c8] sm:$0xff]
  %v244 = vld [vmem:[%s2 + $0x5d0] sm:$0xff]
  %v245 = vld [vmem:[%s2 + $0x5d8] sm:$0xff]
  %v246 = vld [vmem:[%s2 + $0x5e0] sm:$0xff]
  %v247 = vld [vmem:[%s2 + $0x5e8] sm:$0xff]
  %v248 = vld [vmem:[%s2 + $0x5f0] sm:$0xff]
  %v249 = vld [vmem:[%s2 + $0x5f8] sm:$0xff]
  %v250 = vld [vmem:[%s2 + $0x600] sm:$0xff]
  %v251 = vld [vmem:[%s2 + $0x608] sm:$0xff]
  %v252 = vld [vmem:[%s2 + $0x610] sm:$0xff]
  %v253 = vld [vmem:[%s2 + $0x618] sm:$0xff]
  %v254 = vld [vmem:[%s3] sm:$0xf]
  %v256 = vperm.slane %v254, 0
  %v257 = vperm.slane %v254, 1
  %v258 = vperm.slane %v254, 2
  %v259 = vperm.slane %v254, 3
  %v272 = vunpack.c.l.b16 %v50
  %v273 = vunpack.c.h.b16 %v50
  %v274 = vunpack.c.l.b16 %v51
  %v275 = vunpack.c.h.b16 %v51
  %v276 = vunpack.c.l.b16 %v52
  %v277 = vunpack.c.h.b16 %v52
  %v278 = vunpack.c.l.b16 %v53
  %v279 = vunpack.c.l.b16 %v54
  %v280 = vunpack.c.h.b16 %v54
  %v281 = vunpack.c.l.b16 %v55
  %v282 = vunpack.c.h.b16 %v55
  %v283 = vunpack.c.l.b16 %v56
  %v284 = vunpack.c.h.b16 %v56
  %v285 = vunpack.c.l.b16 %v57
  %v286 = vpack.c.b16 %v279, %v272
  %v287 = vpack.c.b16 %v280, %v273
  %v288 = vpack.c.b16 %v281, %v274
  %v289 = vpack.c.b16 %v282, %v275
  %v290 = vpack.c.b16 %v283, %v276
  %v291 = vpack.c.b16 %v284, %v277
  %v292 = vpack.c.b16 %v285, %v278
  %v495 = vunpack.c.l.b16 %v58
  %v496 = vunpack.c.h.b16 %v58
  %v497 = vunpack.c.l.b16 %v59
  %v498 = vunpack.c.h.b16 %v59
  %v499 = vunpack.c.l.b16 %v60
  %v500 = vunpack.c.h.b16 %v60
  %v501 = vunpack.c.l.b16 %v61
  %v502 = vunpack.c.h.b16 %v61
  %v503 = vunpack.c.l.b16 %v62
  %v504 = vunpack.c.h.b16 %v62
  %v505 = vunpack.c.l.b16 %v63
  %v506 = vunpack.c.h.b16 %v63
  %v507 = vunpack.c.l.b16 %v64
  %v508 = vunpack.c.h.b16 %v64
  %v509 = vunpack.c.l.b16 %v65
  %v510 = vunpack.c.h.b16 %v65
  %v511 = vunpack.c.l.b16 %v66
  %v512 = vunpack.c.h.b16 %v66
  %v513 = vunpack.c.l.b16 %v67
  %v514 = vunpack.c.h.b16 %v67
  %v515 = vunpack.c.l.b16 %v68
  %v516 = vunpack.c.h.b16 %v68
  %v517 = vunpack.c.l.b16 %v69
  %v518 = vunpack.c.h.b16 %v69
  %v519 = vunpack.c.l.b16 %v70
  %v520 = vunpack.c.h.b16 %v70
  %v521 = vunpack.c.l.b16 %v71
  %v522 = vunpack.c.h.b16 %v71
  %v523 = vunpack.c.l.b16 %v72
  %v524 = vunpack.c.h.b16 %v72
  %v525 = vunpack.c.l.b16 %v73
  %v526 = vunpack.c.h.b16 %v73
  %v527 = vunpack.c.l.b16 %v74
  %v528 = vunpack.c.h.b16 %v74
  %v529 = vunpack.c.l.b16 %v75
  %v530 = vunpack.c.h.b16 %v75
  %v531 = vunpack.c.l.b16 %v76
  %v532 = vunpack.c.h.b16 %v76
  %v533 = vunpack.c.l.b16 %v77
  %v534 = vunpack.c.h.b16 %v77
  %v535 = vunpack.c.l.b16 %v78
  %v536 = vunpack.c.h.b16 %v78
  %v537 = vunpack.c.l.b16 %v79
  %v538 = vunpack.c.h.b16 %v79
  %v539 = vunpack.c.l.b16 %v80
  %v540 = vunpack.c.h.b16 %v80
  %v541 = vunpack.c.l.b16 %v81
  %v542 = vunpack.c.h.b16 %v81
  %v543 = vunpack.c.l.b16 %v82
  %v544 = vunpack.c.h.b16 %v82
  %v545 = vunpack.c.l.b16 %v83
  %v546 = vunpack.c.h.b16 %v83
  %v547 = vunpack.c.l.b16 %v84
  %v548 = vunpack.c.h.b16 %v84
  %v549 = vunpack.c.l.b16 %v85
  %v550 = vunpack.c.h.b16 %v85
  %v551 = vunpack.c.l.b16 %v86
  %v552 = vunpack.c.h.b16 %v86
  %v553 = vunpack.c.l.b16 %v87
  %v554 = vunpack.c.h.b16 %v87
  %v555 = vunpack.c.l.b16 %v88
  %v556 = vunpack.c.h.b16 %v88
  %v557 = vunpack.c.l.b16 %v89
  %v558 = vunpack.c.h.b16 %v89
  %v559 = vunpack.c.l.b16 %v90
  %v560 = vunpack.c.h.b16 %v90
  %v561 = vunpack.c.l.b16 %v91
  %v562 = vunpack.c.h.b16 %v91
  %v563 = vunpack.c.l.b16 %v92
  %v564 = vunpack.c.h.b16 %v92
  %v565 = vunpack.c.l.b16 %v93
  %v566 = vunpack.c.h.b16 %v93
  %v567 = vunpack.c.l.b16 %v94
  %v568 = vunpack.c.h.b16 %v94
  %v569 = vunpack.c.l.b16 %v95
  %v570 = vunpack.c.h.b16 %v95
  %v571 = vunpack.c.l.b16 %v96
  %v572 = vunpack.c.h.b16 %v96
  %v573 = vunpack.c.l.b16 %v97
  %v574 = vunpack.c.h.b16 %v97
  %v575 = vunpack.c.l.b16 %v98
  %v576 = vunpack.c.h.b16 %v98
  %v577 = vunpack.c.l.b16 %v99
  %v578 = vunpack.c.h.b16 %v99
  %v579 = vunpack.c.l.b16 %v100
  %v580 = vunpack.c.h.b16 %v100
  %v581 = vunpack.c.l.b16 %v101
  %v582 = vunpack.c.h.b16 %v101
  %v583 = vunpack.c.l.b16 %v102
  %v584 = vunpack.c.h.b16 %v102
  %v585 = vunpack.c.l.b16 %v103
  %v586 = vunpack.c.h.b16 %v103
  %v587 = vunpack.c.l.b16 %v104
  %v588 = vunpack.c.h.b16 %v104
  %v589 = vunpack.c.l.b16 %v105
  %v590 = vunpack.c.h.b16 %v105
  %v591 = vunpack.c.l.b16 %v106
  %v592 = vunpack.c.h.b16 %v106
  %v593 = vunpack.c.l.b16 %v107
  %v594 = vunpack.c.h.b16 %v107
  %v595 = vunpack.c.l.b16 %v108
  %v596 = vunpack.c.h.b16 %v108
  %v597 = vunpack.c.l.b16 %v109
  %v598 = vunpack.c.h.b16 %v109
  %v599 = vunpack.c.l.b16 %v110
  %v600 = vunpack.c.h.b16 %v110
  %v601 = vunpack.c.l.b16 %v111
  %v602 = vunpack.c.h.b16 %v111
  %v603 = vunpack.c.l.b16 %v112
  %v604 = vunpack.c.h.b16 %v112
  %v605 = vunpack.c.l.b16 %v113
  %v606 = vunpack.c.h.b16 %v113
  %v607 = vunpack.c.l.b16 %v114
  %v608 = vunpack.c.h.b16 %v114
  %v609 = vunpack.c.l.b16 %v115
  %v610 = vunpack.c.h.b16 %v115
  %v611 = vunpack.c.l.b16 %v116
  %v612 = vunpack.c.h.b16 %v116
  %v613 = vunpack.c.l.b16 %v117
  %v614 = vunpack.c.h.b16 %v117
  %v615 = vunpack.c.l.b16 %v118
  %v616 = vunpack.c.h.b16 %v118
  %v617 = vunpack.c.l.b16 %v119
  %v618 = vunpack.c.h.b16 %v119
  %v619 = vunpack.c.l.b16 %v120
  %v620 = vunpack.c.h.b16 %v120
  %v621 = vunpack.c.l.b16 %v121
  %v622 = vunpack.c.h.b16 %v121
  %v623 = vunpack.c.l.b16 %v122
  %v624 = vunpack.c.h.b16 %v122
  %v625 = vunpack.c.l.b16 %v123
  %v626 = vunpack.c.h.b16 %v123
  %v627 = vunpack.c.l.b16 %v124
  %v628 = vunpack.c.h.b16 %v124
  %v629 = vunpack.c.l.b16 %v125
  %v630 = vunpack.c.h.b16 %v125
  %v631 = vunpack.c.l.b16 %v126
  %v632 = vunpack.c.h.b16 %v126
  %v633 = vunpack.c.l.b16 %v127
  %v634 = vunpack.c.h.b16 %v127
  %v635 = vunpack.c.l.b16 %v128
  %v636 = vunpack.c.h.b16 %v128
  %v637 = vunpack.c.l.b16 %v129
  %v638 = vunpack.c.h.b16 %v129
  %v639 = vunpack.c.l.b16 %v130
  %v640 = vunpack.c.h.b16 %v130
  %v641 = vunpack.c.l.b16 %v131
  %v642 = vunpack.c.h.b16 %v131
  %v643 = vunpack.c.l.b16 %v132
  %v644 = vunpack.c.h.b16 %v132
  %v645 = vunpack.c.l.b16 %v133
  %v646 = vunpack.c.h.b16 %v133
  %v647 = vunpack.c.l.b16 %v134
  %v648 = vunpack.c.h.b16 %v134
  %v649 = vunpack.c.l.b16 %v135
  %v650 = vunpack.c.h.b16 %v135
  %v651 = vunpack.c.l.b16 %v136
  %v652 = vunpack.c.h.b16 %v136
  %v653 = vunpack.c.l.b16 %v137
  %v654 = vunpack.c.h.b16 %v137
  %v655 = vunpack.c.l.b16 %v138
  %v656 = vunpack.c.h.b16 %v138
  %v657 = vunpack.c.l.b16 %v139
  %v658 = vunpack.c.h.b16 %v139
  %v659 = vunpack.c.l.b16 %v140
  %v660 = vunpack.c.h.b16 %v140
  %v661 = vunpack.c.l.b16 %v141
  %v662 = vunpack.c.h.b16 %v141
  %v663 = vunpack.c.l.b16 %v142
  %v664 = vunpack.c.h.b16 %v142
  %v665 = vunpack.c.l.b16 %v143
  %v666 = vunpack.c.h.b16 %v143
  %v667 = vunpack.c.l.b16 %v144
  %v668 = vunpack.c.h.b16 %v144
  %v669 = vunpack.c.l.b16 %v145
  %v670 = vunpack.c.h.b16 %v145
  %v671 = vunpack.c.l.b16 %v146
  %v672 = vunpack.c.h.b16 %v146
  %v673 = vunpack.c.l.b16 %v147
  %v674 = vunpack.c.h.b16 %v147
  %v675 = vunpack.c.l.b16 %v148
  %v676 = vunpack.c.h.b16 %v148
  %v677 = vunpack.c.l.b16 %v149
  %v678 = vunpack.c.h.b16 %v149
  %v679 = vunpack.c.l.b16 %v150
  %v680 = vunpack.c.h.b16 %v150
  %v681 = vunpack.c.l.b16 %v151
  %v682 = vunpack.c.h.b16 %v151
  %v683 = vunpack.c.l.b16 %v152
  %v684 = vunpack.c.h.b16 %v152
  %v685 = vunpack.c.l.b16 %v153
  %v686 = vunpack.c.h.b16 %v153
  %v687 = vunpack.c.l.b16 %v154
  %v688 = vunpack.c.h.b16 %v154
  %v689 = vunpack.c.l.b16 %v155
  %v690 = vunpack.c.h.b16 %v155
  %v691 = vunpack.c.l.b16 %v156
  %v692 = vunpack.c.h.b16 %v156
  %v693 = vunpack.c.l.b16 %v157
  %v694 = vunpack.c.h.b16 %v157
  %v695 = vunpack.c.l.b16 %v158
  %v696 = vunpack.c.h.b16 %v158
  %v697 = vunpack.c.l.b16 %v159
  %v698 = vunpack.c.h.b16 %v159
  %v699 = vunpack.c.l.b16 %v160
  %v700 = vunpack.c.h.b16 %v160
  %v701 = vunpack.c.l.b16 %v161
  %v702 = vunpack.c.h.b16 %v161
  %v703 = vunpack.c.l.b16 %v162
  %v704 = vunpack.c.h.b16 %v162
  %v705 = vunpack.c.l.b16 %v163
  %v706 = vunpack.c.h.b16 %v163
  %v707 = vunpack.c.l.b16 %v164
  %v708 = vunpack.c.h.b16 %v164
  %v709 = vunpack.c.l.b16 %v165
  %v710 = vunpack.c.h.b16 %v165
  %v711 = vunpack.c.l.b16 %v166
  %v712 = vunpack.c.h.b16 %v166
  %v713 = vunpack.c.l.b16 %v167
  %v714 = vunpack.c.h.b16 %v167
  %v715 = vunpack.c.l.b16 %v168
  %v716 = vunpack.c.h.b16 %v168
  %v717 = vunpack.c.l.b16 %v169
  %v718 = vunpack.c.h.b16 %v169
  %v719 = vunpack.c.l.b16 %v170
  %v720 = vunpack.c.h.b16 %v170
  %v721 = vunpack.c.l.b16 %v171
  %v722 = vunpack.c.h.b16 %v171
  %v723 = vunpack.c.l.b16 %v172
  %v724 = vunpack.c.h.b16 %v172
  %v725 = vunpack.c.l.b16 %v173
  %v726 = vunpack.c.h.b16 %v173
  %v727 = vunpack.c.l.b16 %v174
  %v728 = vunpack.c.h.b16 %v174
  %v729 = vunpack.c.l.b16 %v175
  %v730 = vunpack.c.h.b16 %v175
  %v731 = vunpack.c.l.b16 %v176
  %v732 = vunpack.c.h.b16 %v176
  %v733 = vunpack.c.l.b16 %v177
  %v734 = vunpack.c.h.b16 %v177
  %v735 = vunpack.c.l.b16 %v178
  %v736 = vunpack.c.h.b16 %v178
  %v737 = vunpack.c.l.b16 %v179
  %v738 = vunpack.c.h.b16 %v179
  %v739 = vunpack.c.l.b16 %v180
  %v740 = vunpack.c.h.b16 %v180
  %v741 = vunpack.c.l.b16 %v181
  %v742 = vunpack.c.h.b16 %v181
  %v743 = vunpack.c.l.b16 %v182
  %v744 = vunpack.c.h.b16 %v182
  %v745 = vunpack.c.l.b16 %v183
  %v746 = vunpack.c.h.b16 %v183
  %v747 = vunpack.c.l.b16 %v184
  %v748 = vunpack.c.h.b16 %v184
  %v749 = vunpack.c.l.b16 %v185
  %v750 = vunpack.c.h.b16 %v185
  %v751 = vunpack.c.l.b16 %v186
  %v752 = vunpack.c.h.b16 %v186
  %v753 = vunpack.c.l.b16 %v187
  %v754 = vunpack.c.h.b16 %v187
  %v755 = vunpack.c.l.b16 %v188
  %v756 = vunpack.c.h.b16 %v188
  %v757 = vunpack.c.l.b16 %v189
  %v758 = vunpack.c.h.b16 %v189
  %v759 = vunpack.c.l.b16 %v190
  %v760 = vunpack.c.h.b16 %v190
  %v761 = vunpack.c.l.b16 %v191
  %v762 = vunpack.c.h.b16 %v191
  %v763 = vunpack.c.l.b16 %v192
  %v764 = vunpack.c.h.b16 %v192
  %v765 = vunpack.c.l.b16 %v193
  %v766 = vunpack.c.h.b16 %v193
  %v767 = vunpack.c.l.b16 %v194
  %v768 = vunpack.c.h.b16 %v194
  %v769 = vunpack.c.l.b16 %v195
  %v770 = vunpack.c.h.b16 %v195
  %v771 = vunpack.c.l.b16 %v196
  %v772 = vunpack.c.h.b16 %v196
  %v773 = vunpack.c.l.b16 %v197
  %v774 = vunpack.c.h.b16 %v197
  %v775 = vunpack.c.l.b16 %v198
  %v776 = vunpack.c.h.b16 %v198
  %v777 = vunpack.c.l.b16 %v199
  %v778 = vunpack.c.h.b16 %v199
  %v779 = vunpack.c.l.b16 %v200
  %v780 = vunpack.c.h.b16 %v200
  %v781 = vunpack.c.l.b16 %v201
  %v782 = vunpack.c.h.b16 %v201
  %v783 = vunpack.c.l.b16 %v202
  %v784 = vunpack.c.h.b16 %v202
  %v785 = vunpack.c.l.b16 %v203
  %v786 = vunpack.c.h.b16 %v203
  %v787 = vunpack.c.l.b16 %v204
  %v788 = vunpack.c.h.b16 %v204
  %v789 = vunpack.c.l.b16 %v205
  %v790 = vunpack.c.h.b16 %v205
  %v791 = vunpack.c.l.b16 %v206
  %v792 = vunpack.c.h.b16 %v206
  %v793 = vunpack.c.l.b16 %v207
  %v794 = vunpack.c.h.b16 %v207
  %v795 = vunpack.c.l.b16 %v208
  %v796 = vunpack.c.h.b16 %v208
  %v797 = vunpack.c.l.b16 %v209
  %v798 = vunpack.c.h.b16 %v209
  %v799 = vunpack.c.l.b16 %v210
  %v800 = vunpack.c.h.b16 %v210
  %v801 = vunpack.c.l.b16 %v211
  %v802 = vunpack.c.h.b16 %v211
  %v803 = vunpack.c.l.b16 %v212
  %v804 = vunpack.c.h.b16 %v212
  %v805 = vunpack.c.l.b16 %v213
  %v806 = vunpack.c.h.b16 %v213
  %v807 = vunpack.c.l.b16 %v214
  %v808 = vunpack.c.h.b16 %v214
  %v809 = vunpack.c.l.b16 %v215
  %v810 = vunpack.c.h.b16 %v215
  %v811 = vunpack.c.l.b16 %v216
  %v812 = vunpack.c.h.b16 %v216
  %v813 = vunpack.c.l.b16 %v217
  %v814 = vunpack.c.h.b16 %v217
  %v815 = vunpack.c.l.b16 %v218
  %v816 = vunpack.c.h.b16 %v218
  %v817 = vunpack.c.l.b16 %v219
  %v818 = vunpack.c.h.b16 %v219
  %v819 = vunpack.c.l.b16 %v220
  %v820 = vunpack.c.h.b16 %v220
  %v821 = vunpack.c.l.b16 %v221
  %v822 = vunpack.c.h.b16 %v221
  %v823 = vunpack.c.l.b16 %v222
  %v824 = vunpack.c.h.b16 %v222
  %v825 = vunpack.c.l.b16 %v223
  %v826 = vunpack.c.h.b16 %v223
  %v827 = vunpack.c.l.b16 %v224
  %v828 = vunpack.c.h.b16 %v224
  %v829 = vunpack.c.l.b16 %v225
  %v830 = vunpack.c.h.b16 %v225
  %v831 = vunpack.c.l.b16 %v226
  %v832 = vunpack.c.h.b16 %v226
  %v833 = vunpack.c.l.b16 %v227
  %v834 = vunpack.c.h.b16 %v227
  %v835 = vunpack.c.l.b16 %v228
  %v836 = vunpack.c.h.b16 %v228
  %v837 = vunpack.c.l.b16 %v229
  %v838 = vunpack.c.h.b16 %v229
  %v839 = vunpack.c.l.b16 %v230
  %v840 = vunpack.c.h.b16 %v230
  %v841 = vunpack.c.l.b16 %v231
  %v842 = vunpack.c.h.b16 %v231
  %v843 = vunpack.c.l.b16 %v232
  %v844 = vunpack.c.h.b16 %v232
  %v845 = vunpack.c.l.b16 %v233
  %v846 = vunpack.c.h.b16 %v233
  %v847 = vunpack.c.l.b16 %v234
  %v848 = vunpack.c.h.b16 %v234
  %v849 = vunpack.c.l.b16 %v235
  %v850 = vunpack.c.h.b16 %v235
  %v851 = vunpack.c.l.b16 %v236
  %v852 = vunpack.c.h.b16 %v236
  %v853 = vunpack.c.l.b16 %v237
  %v854 = vunpack.c.h.b16 %v237
  %v855 = vunpack.c.l.b16 %v238
  %v856 = vunpack.c.h.b16 %v238
  %v857 = vunpack.c.l.b16 %v239
  %v858 = vunpack.c.h.b16 %v239
  %v859 = vunpack.c.l.b16 %v240
  %v860 = vunpack.c.h.b16 %v240
  %v861 = vunpack.c.l.b16 %v241
  %v862 = vunpack.c.h.b16 %v241
  %v863 = vunpack.c.l.b16 %v242
  %v864 = vunpack.c.h.b16 %v242
  %v865 = vunpack.c.l.b16 %v243
  %v866 = vunpack.c.h.b16 %v243
  %v867 = vunpack.c.l.b16 %v244
  %v868 = vunpack.c.h.b16 %v244
  %v869 = vunpack.c.l.b16 %v245
  %v870 = vunpack.c.h.b16 %v245
  %v871 = vunpack.c.l.b16 %v246
  %v872 = vunpack.c.h.b16 %v246
  %v873 = vunpack.c.l.b16 %v247
  %v874 = vunpack.c.h.b16 %v247
  %v875 = vunpack.c.l.b16 %v248
  %v876 = vunpack.c.h.b16 %v248
  %v877 = vunpack.c.l.b16 %v249
  %v878 = vunpack.c.h.b16 %v249
  %v879 = vunpack.c.l.b16 %v250
  %v880 = vunpack.c.h.b16 %v250
  %v881 = vunpack.c.l.b16 %v251
  %v882 = vunpack.c.h.b16 %v251
  %v883 = vunpack.c.l.b16 %v252
  %v884 = vunpack.c.h.b16 %v252
  %v885 = vunpack.c.l.b16 %v253
  %v886 = vunpack.c.h.b16 %v253
  %v887 = vpack.c.b16 %v499, %v495
  %v888 = vpack.c.b16 %v500, %v496
  %v889 = vpack.c.b16 %v501, %v497
  %v890 = vpack.c.b16 %v502, %v498
  %v891 = vpack.c.b16 %v507, %v503
  %v892 = vpack.c.b16 %v508, %v504
  %v893 = vpack.c.b16 %v509, %v505
  %v894 = vpack.c.b16 %v510, %v506
  %v895 = vpack.c.b16 %v515, %v511
  %v896 = vpack.c.b16 %v516, %v512
  %v897 = vpack.c.b16 %v517, %v513
  %v898 = vpack.c.b16 %v518, %v514
  %v899 = vpack.c.b16 %v523, %v519
  %v900 = vpack.c.b16 %v524, %v520
  %v901 = vpack.c.b16 %v525, %v521
  %v902 = vpack.c.b16 %v526, %v522
  %v903 = vpack.c.b16 %v531, %v527
  %v904 = vpack.c.b16 %v532, %v528
  %v905 = vpack.c.b16 %v533, %v529
  %v906 = vpack.c.b16 %v534, %v530
  %v907 = vpack.c.b16 %v539, %v535
  %v908 = vpack.c.b16 %v540, %v536
  %v909 = vpack.c.b16 %v541, %v537
  %v910 = vpack.c.b16 %v542, %v538
  %v911 = vpack.c.b16 %v547, %v543
  %v912 = vpack.c.b16 %v548, %v544
  %v913 = vpack.c.b16 %v549, %v545
  %v914 = vpack.c.b16 %v550, %v546
  %v915 = vpack.c.b16 %v555, %v551
  %v916 = vpack.c.b16 %v556, %v552
  %v917 = vpack.c.b16 %v557, %v553
  %v918 = vpack.c.b16 %v558, %v554
  %v919 = vpack.c.b16 %v563, %v559
  %v920 = vpack.c.b16 %v564, %v560
  %v921 = vpack.c.b16 %v565, %v561
  %v922 = vpack.c.b16 %v566, %v562
  %v923 = vpack.c.b16 %v571, %v567
  %v924 = vpack.c.b16 %v572, %v568
  %v925 = vpack.c.b16 %v573, %v569
  %v926 = vpack.c.b16 %v574, %v570
  %v927 = vpack.c.b16 %v579, %v575
  %v928 = vpack.c.b16 %v580, %v576
  %v929 = vpack.c.b16 %v581, %v577
  %v930 = vpack.c.b16 %v582, %v578
  %v931 = vpack.c.b16 %v587, %v583
  %v932 = vpack.c.b16 %v588, %v584
  %v933 = vpack.c.b16 %v589, %v585
  %v934 = vpack.c.b16 %v590, %v586
  %v935 = vpack.c.b16 %v595, %v591
  %v936 = vpack.c.b16 %v596, %v592
  %v937 = vpack.c.b16 %v597, %v593
  %v938 = vpack.c.b16 %v598, %v594
  %v939 = vpack.c.b16 %v603, %v599
  %v940 = vpack.c.b16 %v604, %v600
  %v941 = vpack.c.b16 %v605, %v601
  %v942 = vpack.c.b16 %v606, %v602
  %v943 = vpack.c.b16 %v611, %v607
  %v944 = vpack.c.b16 %v612, %v608
  %v945 = vpack.c.b16 %v613, %v609
  %v946 = vpack.c.b16 %v614, %v610
  %v947 = vpack.c.b16 %v619, %v615
  %v948 = vpack.c.b16 %v620, %v616
  %v949 = vpack.c.b16 %v621, %v617
  %v950 = vpack.c.b16 %v622, %v618
  %v951 = vpack.c.b16 %v627, %v623
  %v952 = vpack.c.b16 %v628, %v624
  %v953 = vpack.c.b16 %v629, %v625
  %v954 = vpack.c.b16 %v630, %v626
  %v955 = vpack.c.b16 %v635, %v631
  %v956 = vpack.c.b16 %v636, %v632
  %v957 = vpack.c.b16 %v637, %v633
  %v958 = vpack.c.b16 %v638, %v634
  %v959 = vpack.c.b16 %v643, %v639
  %v960 = vpack.c.b16 %v644, %v640
  %v961 = vpack.c.b16 %v645, %v641
  %v962 = vpack.c.b16 %v646, %v642
  %v963 = vpack.c.b16 %v651, %v647
  %v964 = vpack.c.b16 %v652, %v648
  %v965 = vpack.c.b16 %v653, %v649
  %v966 = vpack.c.b16 %v654, %v650
  %v967 = vpack.c.b16 %v659, %v655
  %v968 = vpack.c.b16 %v660, %v656
  %v969 = vpack.c.b16 %v661, %v657
  %v970 = vpack.c.b16 %v662, %v658
  %v971 = vpack.c.b16 %v667, %v663
  %v972 = vpack.c.b16 %v668, %v664
  %v973 = vpack.c.b16 %v669, %v665
  %v974 = vpack.c.b16 %v670, %v666
  %v975 = vpack.c.b16 %v675, %v671
  %v976 = vpack.c.b16 %v676, %v672
  %v977 = vpack.c.b16 %v677, %v673
  %v978 = vpack.c.b16 %v678, %v674
  %v979 = vpack.c.b16 %v683, %v679
  %v980 = vpack.c.b16 %v684, %v680
  %v981 = vpack.c.b16 %v685, %v681
  %v982 = vpack.c.b16 %v686, %v682
  %v983 = vpack.c.b16 %v691, %v687
  %v984 = vpack.c.b16 %v692, %v688
  %v985 = vpack.c.b16 %v693, %v689
  %v986 = vpack.c.b16 %v694, %v690
  %v987 = vpack.c.b16 %v699, %v695
  %v988 = vpack.c.b16 %v700, %v696
  %v989 = vpack.c.b16 %v701, %v697
  %v990 = vpack.c.b16 %v702, %v698
  %v991 = vpack.c.b16 %v707, %v703
  %v992 = vpack.c.b16 %v708, %v704
  %v993 = vpack.c.b16 %v709, %v705
  %v994 = vpack.c.b16 %v710, %v706
  %v995 = vpack.c.b16 %v715, %v711
  %v996 = vpack.c.b16 %v716, %v712
  %v997 = vpack.c.b16 %v717, %v713
  %v998 = vpack.c.b16 %v718, %v714
  %v999 = vpack.c.b16 %v723, %v719
  %v1000 = vpack.c.b16 %v724, %v720
  %v1001 = vpack.c.b16 %v725, %v721
  %v1002 = vpack.c.b16 %v726, %v722
  %v1003 = vpack.c.b16 %v731, %v727
  %v1004 = vpack.c.b16 %v732, %v728
  %v1005 = vpack.c.b16 %v733, %v729
  %v1006 = vpack.c.b16 %v734, %v730
  %v1007 = vpack.c.b16 %v739, %v735
  %v1008 = vpack.c.b16 %v740, %v736
  %v1009 = vpack.c.b16 %v741, %v737
  %v1010 = vpack.c.b16 %v742, %v738
  %v1011 = vpack.c.b16 %v747, %v743
  %v1012 = vpack.c.b16 %v748, %v744
  %v1013 = vpack.c.b16 %v749, %v745
  %v1014 = vpack.c.b16 %v750, %v746
  %v1015 = vpack.c.b16 %v755, %v751
  %v1016 = vpack.c.b16 %v756, %v752
  %v1017 = vpack.c.b16 %v757, %v753
  %v1018 = vpack.c.b16 %v758, %v754
  %v1019 = vpack.c.b16 %v763, %v759
  %v1020 = vpack.c.b16 %v764, %v760
  %v1021 = vpack.c.b16 %v765, %v761
  %v1022 = vpack.c.b16 %v766, %v762
  %v1023 = vpack.c.b16 %v771, %v767
  %v1024 = vpack.c.b16 %v772, %v768
  %v1025 = vpack.c.b16 %v773, %v769
  %v1026 = vpack.c.b16 %v774, %v770
  %v1027 = vpack.c.b16 %v779, %v775
  %v1028 = vpack.c.b16 %v780, %v776
  %v1029 = vpack.c.b16 %v781, %v777
  %v1030 = vpack.c.b16 %v782, %v778
  %v1031 = vpack.c.b16 %v787, %v783
  %v1032 = vpack.c.b16 %v788, %v784
  %v1033 = vpack.c.b16 %v789, %v785
  %v1034 = vpack.c.b16 %v790, %v786
  %v1035 = vpack.c.b16 %v795, %v791
  %v1036 = vpack.c.b16 %v796, %v792
  %v1037 = vpack.c.b16 %v797, %v793
  %v1038 = vpack.c.b16 %v798, %v794
  %v1039 = vpack.c.b16 %v803, %v799
  %v1040 = vpack.c.b16 %v804, %v800
  %v1041 = vpack.c.b16 %v805, %v801
  %v1042 = vpack.c.b16 %v806, %v802
  %v1043 = vpack.c.b16 %v811, %v807
  %v1044 = vpack.c.b16 %v812, %v808
  %v1045 = vpack.c.b16 %v813, %v809
  %v1046 = vpack.c.b16 %v814, %v810
  %v1047 = vpack.c.b16 %v819, %v815
  %v1048 = vpack.c.b16 %v820, %v816
  %v1049 = vpack.c.b16 %v821, %v817
  %v1050 = vpack.c.b16 %v822, %v818
  %v1051 = vpack.c.b16 %v827, %v823
  %v1052 = vpack.c.b16 %v828, %v824
  %v1053 = vpack.c.b16 %v829, %v825
  %v1054 = vpack.c.b16 %v830, %v826
  %v1055 = vpack.c.b16 %v835, %v831
  %v1056 = vpack.c.b16 %v836, %v832
  %v1057 = vpack.c.b16 %v837, %v833
  %v1058 = vpack.c.b16 %v838, %v834
  %v1059 = vpack.c.b16 %v843, %v839
  %v1060 = vpack.c.b16 %v844, %v840
  %v1061 = vpack.c.b16 %v845, %v841
  %v1062 = vpack.c.b16 %v846, %v842
  %v1063 = vpack.c.b16 %v851, %v847
  %v1064 = vpack.c.b16 %v852, %v848
  %v1065 = vpack.c.b16 %v853, %v849
  %v1066 = vpack.c.b16 %v854, %v850
  %v1067 = vpack.c.b16 %v859, %v855
  %v1068 = vpack.c.b16 %v860, %v856
  %v1069 = vpack.c.b16 %v861, %v857
  %v1070 = vpack.c.b16 %v862, %v858
  %v1071 = vpack.c.b16 %v867, %v863
  %v1072 = vpack.c.b16 %v868, %v864
  %v1073 = vpack.c.b16 %v869, %v865
  %v1074 = vpack.c.b16 %v870, %v866
  %v1075 = vpack.c.b16 %v875, %v871
  %v1076 = vpack.c.b16 %v876, %v872
  %v1077 = vpack.c.b16 %v877, %v873
  %v1078 = vpack.c.b16 %v878, %v874
  %v1079 = vpack.c.b16 %v883, %v879
  %v1080 = vpack.c.b16 %v884, %v880
  %v1081 = vpack.c.b16 %v885, %v881
  %v1082 = vpack.c.b16 %v886, %v882
  %vm1279 = vcmask 130048
  %v1281 = vsel %vm1279, %v292, 0
  %1283 = vmatpush.bf16.msra.mxu0 %v915
  %1284 = vmatpush.bf16.msra.mxu0 %v911
  %1285 = vmatpush.bf16.msra.mxu0 %v907
  %1286 = vmatpush.bf16.msra.mxu0 %v903
  %1287 = vmatpush.bf16.msra.mxu0 %v899
  %1288 = vmatpush.bf16.msra.mxu0 %v895
  %1289 = vmatpush.bf16.msra.mxu0 %v891
  %1290 = vmatpush.bf16.msra.mxu0 %v887
  %1291 = vmatmul.bf16.gmra.mxu0 %v286
  %v1292 = vpop.f32.mrf.mxu0
  %v1293 = vadd.f32 %v256, %v1292
  %v1294 = vpop.f32.mrf.mxu0
  %v1295 = vadd.f32 %v256, %v1294
  %1296 = vdwg.mxu0
  %1297 = vmatpush.bf16.msra.mxu0 %v947
  %1298 = vmatpush.bf16.msra.mxu0 %v943
  %1299 = vmatpush.bf16.msra.mxu0 %v939
  %1300 = vmatpush.bf16.msra.mxu0 %v935
  %1301 = vmatpush.bf16.msra.mxu0 %v931
  %1302 = vmatpush.bf16.msra.mxu0 %v927
  %1303 = vmatpush.bf16.msra.mxu0 %v923
  %1304 = vmatpush.bf16.msra.mxu0 %v919
  %1305 = vmatmul.bf16.gmra.mxu0 %v287
  %v1306 = vpop.f32.mrf.mxu0
  %v1307 = vadd.f32 %v1293, %v1306
  %v1308 = vpop.f32.mrf.mxu0
  %v1309 = vadd.f32 %v1295, %v1308
  %1310 = vdwg.mxu0
  %1311 = vmatpush.bf16.msra.mxu0 %v979
  %1312 = vmatpush.bf16.msra.mxu0 %v975
  %1313 = vmatpush.bf16.msra.mxu0 %v971
  %1314 = vmatpush.bf16.msra.mxu0 %v967
  %1315 = vmatpush.bf16.msra.mxu0 %v963
  %1316 = vmatpush.bf16.msra.mxu0 %v959
  %1317 = vmatpush.bf16.msra.mxu0 %v955
  %1318 = vmatpush.bf16.msra.mxu0 %v951
  %1319 = vmatmul.bf16.gmra.mxu0 %v288
  %v1320 = vpop.f32.mrf.mxu0
  %v1321 = vadd.f32 %v1307, %v1320
  %v1322 = vpop.f32.mrf.mxu0
  %v1323 = vadd.f32 %v1309, %v1322
  %1324 = vdwg.mxu0
  %1325 = vmatpush.bf16.msra.mxu0 %v1011
  %1326 = vmatpush.bf16.msra.mxu0 %v1007
  %1327 = vmatpush.bf16.msra.mxu0 %v1003
  %1328 = vmatpush.bf16.msra.mxu0 %v999
  %1329 = vmatpush.bf16.msra.mxu0 %v995
  %1330 = vmatpush.bf16.msra.mxu0 %v991
  %1331 = vmatpush.bf16.msra.mxu0 %v987
  %1332 = vmatpush.bf16.msra.mxu0 %v983
  %1333 = vmatmul.bf16.gmra.mxu0 %v289
  %v1334 = vpop.f32.mrf.mxu0
  %v1335 = vadd.f32 %v1321, %v1334
  %v1336 = vpop.f32.mrf.mxu0
  %v1337 = vadd.f32 %v1323, %v1336
  %1338 = vdwg.mxu0
  %1339 = vmatpush.bf16.msra.mxu0 %v1043
  %1340 = vmatpush.bf16.msra.mxu0 %v1039
  %1341 = vmatpush.bf16.msra.mxu0 %v1035
  %1342 = vmatpush.bf16.msra.mxu0 %v1031
  %1343 = vmatpush.bf16.msra.mxu0 %v1027
  %1344 = vmatpush.bf16.msra.mxu0 %v1023
  %1345 = vmatpush.bf16.msra.mxu0 %v1019
  %1346 = vmatpush.bf16.msra.mxu0 %v1015
  %1347 = vmatmul.bf16.gmra.mxu0 %v290
  %v1348 = vpop.f32.mrf.mxu0
  %v1349 = vadd.f32 %v1335, %v1348
  %v1350 = vpop.f32.mrf.mxu0
  %v1351 = vadd.f32 %v1337, %v1350
  %1352 = vdwg.mxu0
  %1353 = vmatpush.bf16.msra.mxu0 %v1075
  %1354 = vmatpush.bf16.msra.mxu0 %v1071
  %1355 = vmatpush.bf16.msra.mxu0 %v1067
  %1356 = vmatpush.bf16.msra.mxu0 %v1063
  %1357 = vmatpush.bf16.msra.mxu0 %v1059
  %1358 = vmatpush.bf16.msra.mxu0 %v1055
  %1359 = vmatpush.bf16.msra.mxu0 %v1051
  %1360 = vmatpush.bf16.msra.mxu0 %v1047
  %1361 = vmatmul.bf16.gmra.mxu0 %v291
  %v1362 = vpop.f32.mrf.mxu0
  %v1363 = vadd.f32 %v1349, %v1362
  %v1364 = vpop.f32.mrf.mxu0
  %v1365 = vadd.f32 %v1351, %v1364
  %1366 = vdwg.mxu0
  %1367 = vmatpush.bf16.msra.mxu0 0
  %1368 = vmatpush.bf16.msra.mxu0 0
  %1369 = vmatpush.bf16.msra.mxu0 0
  %1370 = vmatpush.bf16.msra.mxu0 0
  %1371 = vmatpush.bf16.msra.mxu0 0
  %1372 = vmatpush.bf16.msra.mxu0 0
  %1373 = vmatpush.bf16.msra.mxu0 0
  %1374 = vmatpush.bf16.msra.mxu0 %v1079
  %1375 = vmatmul.bf16.gmra.mxu0 %v1281
  %v1376 = vpop.f32.mrf.mxu0
  %v1377 = vadd.f32 %v1363, %v1376
  %v1378 = vpop.f32.mrf.mxu0
  %v1379 = vadd.f32 %v1365, %v1378
  %1380 = vdwg.mxu0
  %1381 = vmatpush.bf16.msra.mxu0 %v916
  %1382 = vmatpush.bf16.msra.mxu0 %v912
  %1383 = vmatpush.bf16.msra.mxu0 %v908
  %1384 = vmatpush.bf16.msra.mxu0 %v904
  %1385 = vmatpush.bf16.msra.mxu0 %v900
  %1386 = vmatpush.bf16.msra.mxu0 %v896
  %1387 = vmatpush.bf16.msra.mxu0 %v892
  %1388 = vmatpush.bf16.msra.mxu0 %v888
  %1389 = vmatmul.bf16.gmra.mxu0 %v286
  %v1390 = vpop.f32.mrf.mxu0
  %v1391 = vadd.f32 %v257, %v1390
  %v1392 = vpop.f32.mrf.mxu0
  %v1393 = vadd.f32 %v257, %v1392
  %1394 = vdwg.mxu0
  %1395 = vmatpush.bf16.msra.mxu0 %v948
  %1396 = vmatpush.bf16.msra.mxu0 %v944
  %1397 = vmatpush.bf16.msra.mxu0 %v940
  %1398 = vmatpush.bf16.msra.mxu0 %v936
  %1399 = vmatpush.bf16.msra.mxu0 %v932
  %1400 = vmatpush.bf16.msra.mxu0 %v928
  %1401 = vmatpush.bf16.msra.mxu0 %v924
  %1402 = vmatpush.bf16.msra.mxu0 %v920
  %1403 = vmatmul.bf16.gmra.mxu0 %v287
  %v1404 = vpop.f32.mrf.mxu0
  %v1405 = vadd.f32 %v1391, %v1404
  %v1406 = vpop.f32.mrf.mxu0
  %v1407 = vadd.f32 %v1393, %v1406
  %1408 = vdwg.mxu0
  %1409 = vmatpush.bf16.msra.mxu0 %v980
  %1410 = vmatpush.bf16.msra.mxu0 %v976
  %1411 = vmatpush.bf16.msra.mxu0 %v972
  %1412 = vmatpush.bf16.msra.mxu0 %v968
  %1413 = vmatpush.bf16.msra.mxu0 %v964
  %1414 = vmatpush.bf16.msra.mxu0 %v960
  %1415 = vmatpush.bf16.msra.mxu0 %v956
  %1416 = vmatpush.bf16.msra.mxu0 %v952
  %1417 = vmatmul.bf16.gmra.mxu0 %v288
  %v1418 = vpop.f32.mrf.mxu0
  %v1419 = vadd.f32 %v1405, %v1418
  %v1420 = vpop.f32.mrf.mxu0
  %v1421 = vadd.f32 %v1407, %v1420
  %1422 = vdwg.mxu0
  %1423 = vmatpush.bf16.msra.mxu0 %v1012
  %1424 = vmatpush.bf16.msra.mxu0 %v1008
  %1425 = vmatpush.bf16.msra.mxu0 %v1004
  %1426 = vmatpush.bf16.msra.mxu0 %v1000
  %1427 = vmatpush.bf16.msra.mxu0 %v996
  %1428 = vmatpush.bf16.msra.mxu0 %v992
  %1429 = vmatpush.bf16.msra.mxu0 %v988
  %1430 = vmatpush.bf16.msra.mxu0 %v984
  %1431 = vmatmul.bf16.gmra.mxu0 %v289
  %v1432 = vpop.f32.mrf.mxu0
  %v1433 = vadd.f32 %v1419, %v1432
  %v1434 = vpop.f32.mrf.mxu0
  %v1435 = vadd.f32 %v1421, %v1434
  %1436 = vdwg.mxu0
  %1437 = vmatpush.bf16.msra.mxu0 %v1044
  %1438 = vmatpush.bf16.msra.mxu0 %v1040
  %1439 = vmatpush.bf16.msra.mxu0 %v1036
  %1440 = vmatpush.bf16.msra.mxu0 %v1032
  %1441 = vmatpush.bf16.msra.mxu0 %v1028
  %1442 = vmatpush.bf16.msra.mxu0 %v1024
  %1443 = vmatpush.bf16.msra.mxu0 %v1020
  %1444 = vmatpush.bf16.msra.mxu0 %v1016
  %1445 = vmatmul.bf16.gmra.mxu0 %v290
  %v1446 = vpop.f32.mrf.mxu0
  %v1447 = vadd.f32 %v1433, %v1446
  %v1448 = vpop.f32.mrf.mxu0
  %v1449 = vadd.f32 %v1435, %v1448
  %1450 = vdwg.mxu0
  %1451 = vmatpush.bf16.msra.mxu0 %v1076
  %1452 = vmatpush.bf16.msra.mxu0 %v1072
  %1453 = vmatpush.bf16.msra.mxu0 %v1068
  %1454 = vmatpush.bf16.msra.mxu0 %v1064
  %1455 = vmatpush.bf16.msra.mxu0 %v1060
  %1456 = vmatpush.bf16.msra.mxu0 %v1056
  %1457 = vmatpush.bf16.msra.mxu0 %v1052
  %1458 = vmatpush.bf16.msra.mxu0 %v1048
  %1459 = vmatmul.bf16.gmra.mxu0 %v291
  %v1460 = vpop.f32.mrf.mxu0
  %v1461 = vadd.f32 %v1447, %v1460
  %v1462 = vpop.f32.mrf.mxu0
  %v1463 = vadd.f32 %v1449, %v1462
  %1464 = vdwg.mxu0
  %1465 = vmatpush.bf16.msra.mxu0 0
  %1466 = vmatpush.bf16.msra.mxu0 0
  %1467 = vmatpush.bf16.msra.mxu0 0
  %1468 = vmatpush.bf16.msra.mxu0 0
  %1469 = vmatpush.bf16.msra.mxu0 0
  %1470 = vmatpush.bf16.msra.mxu0 0
  %1471 = vmatpush.bf16.msra.mxu0 0
  %1472 = vmatpush.bf16.msra.mxu0 %v1080
  %1473 = vmatmul.bf16.gmra.mxu0 %v1281
  %v1474 = vpop.f32.mrf.mxu0
  %v1475 = vadd.f32 %v1461, %v1474
  %v1476 = vpop.f32.mrf.mxu0
  %v1477 = vadd.f32 %v1463, %v1476
  %1478 = vdwg.mxu0
  %1479 = vmatpush.bf16.msra.mxu0 %v917
  %1480 = vmatpush.bf16.msra.mxu0 %v913
  %1481 = vmatpush.bf16.msra.mxu0 %v909
  %1482 = vmatpush.bf16.msra.mxu0 %v905
  %1483 = vmatpush.bf16.msra.mxu0 %v901
  %1484 = vmatpush.bf16.msra.mxu0 %v897
  %1485 = vmatpush.bf16.msra.mxu0 %v893
  %1486 = vmatpush.bf16.msra.mxu0 %v889
  %1487 = vmatmul.bf16.gmra.mxu0 %v286
  %v1488 = vpop.f32.mrf.mxu0
  %v1489 = vadd.f32 %v258, %v1488
  %v1490 = vpop.f32.mrf.mxu0
  %v1491 = vadd.f32 %v258, %v1490
  %1492 = vdwg.mxu0
  %1493 = vmatpush.bf16.msra.mxu0 %v949
  %1494 = vmatpush.bf16.msra.mxu0 %v945
  %1495 = vmatpush.bf16.msra.mxu0 %v941
  %1496 = vmatpush.bf16.msra.mxu0 %v937
  %1497 = vmatpush.bf16.msra.mxu0 %v933
  %1498 = vmatpush.bf16.msra.mxu0 %v929
  %1499 = vmatpush.bf16.msra.mxu0 %v925
  %1500 = vmatpush.bf16.msra.mxu0 %v921
  %1501 = vmatmul.bf16.gmra.mxu0 %v287
  %v1502 = vpop.f32.mrf.mxu0
  %v1503 = vadd.f32 %v1489, %v1502
  %v1504 = vpop.f32.mrf.mxu0
  %v1505 = vadd.f32 %v1491, %v1504
  %1506 = vdwg.mxu0
  %1507 = vmatpush.bf16.msra.mxu0 %v981
  %1508 = vmatpush.bf16.msra.mxu0 %v977
  %1509 = vmatpush.bf16.msra.mxu0 %v973
  %1510 = vmatpush.bf16.msra.mxu0 %v969
  %1511 = vmatpush.bf16.msra.mxu0 %v965
  %1512 = vmatpush.bf16.msra.mxu0 %v961
  %1513 = vmatpush.bf16.msra.mxu0 %v957
  %1514 = vmatpush.bf16.msra.mxu0 %v953
  %1515 = vmatmul.bf16.gmra.mxu0 %v288
  %v1516 = vpop.f32.mrf.mxu0
  %v1517 = vadd.f32 %v1503, %v1516
  %v1518 = vpop.f32.mrf.mxu0
  %v1519 = vadd.f32 %v1505, %v1518
  %1520 = vdwg.mxu0
  %1521 = vmatpush.bf16.msra.mxu0 %v1013
  %1522 = vmatpush.bf16.msra.mxu0 %v1009
  %1523 = vmatpush.bf16.msra.mxu0 %v1005
  %1524 = vmatpush.bf16.msra.mxu0 %v1001
  %1525 = vmatpush.bf16.msra.mxu0 %v997
  %1526 = vmatpush.bf16.msra.mxu0 %v993
  %1527 = vmatpush.bf16.msra.mxu0 %v989
  %1528 = vmatpush.bf16.msra.mxu0 %v985
  %1529 = vmatmul.bf16.gmra.mxu0 %v289
  %v1530 = vpop.f32.mrf.mxu0
  %v1531 = vadd.f32 %v1517, %v1530
  %v1532 = vpop.f32.mrf.mxu0
  %v1533 = vadd.f32 %v1519, %v1532
  %1534 = vdwg.mxu0
  %1535 = vmatpush.bf16.msra.mxu0 %v1045
  %1536 = vmatpush.bf16.msra.mxu0 %v1041
  %1537 = vmatpush.bf16.msra.mxu0 %v1037
  %1538 = vmatpush.bf16.msra.mxu0 %v1033
  %1539 = vmatpush.bf16.msra.mxu0 %v1029
  %1540 = vmatpush.bf16.msra.mxu0 %v1025
  %1541 = vmatpush.bf16.msra.mxu0 %v1021
  %1542 = vmatpush.bf16.msra.mxu0 %v1017
  %1543 = vmatmul.bf16.gmra.mxu0 %v290
  %v1544 = vpop.f32.mrf.mxu0
  %v1545 = vadd.f32 %v1531, %v1544
  %v1546 = vpop.f32.mrf.mxu0
  %v1547 = vadd.f32 %v1533, %v1546
  %1548 = vdwg.mxu0
  %1549 = vmatpush.bf16.msra.mxu0 %v1077
  %1550 = vmatpush.bf16.msra.mxu0 %v1073
  %1551 = vmatpush.bf16.msra.mxu0 %v1069
  %1552 = vmatpush.bf16.msra.mxu0 %v1065
  %1553 = vmatpush.bf16.msra.mxu0 %v1061
  %1554 = vmatpush.bf16.msra.mxu0 %v1057
  %1555 = vmatpush.bf16.msra.mxu0 %v1053
  %1556 = vmatpush.bf16.msra.mxu0 %v1049
  %1557 = vmatmul.bf16.gmra.mxu0 %v291
  %v1558 = vpop.f32.mrf.mxu0
  %v1559 = vadd.f32 %v1545, %v1558
  %v1560 = vpop.f32.mrf.mxu0
  %v1561 = vadd.f32 %v1547, %v1560
  %1562 = vdwg.mxu0
  %1563 = vmatpush.bf16.msra.mxu0 0
  %1564 = vmatpush.bf16.msra.mxu0 0
  %1565 = vmatpush.bf16.msra.mxu0 0
  %1566 = vmatpush.bf16.msra.mxu0 0
  %1567 = vmatpush.bf16.msra.mxu0 0
  %1568 = vmatpush.bf16.msra.mxu0 0
  %1569 = vmatpush.bf16.msra.mxu0 0
  %1570 = vmatpush.bf16.msra.mxu0 %v1081
  %1571 = vmatmul.bf16.gmra.mxu0 %v1281
  %v1572 = vpop.f32.mrf.mxu0
  %v1573 = vadd.f32 %v1559, %v1572
  %v1574 = vpop.f32.mrf.mxu0
  %v1575 = vadd.f32 %v1561, %v1574
  %1576 = vdwg.mxu0
  %1577 = vmatpush.bf16.msra.mxu0 %v918
  %1578 = vmatpush.bf16.msra.mxu0 %v914
  %1579 = vmatpush.bf16.msra.mxu0 %v910
  %1580 = vmatpush.bf16.msra.mxu0 %v906
  %1581 = vmatpush.bf16.msra.mxu0 %v902
  %1582 = vmatpush.bf16.msra.mxu0 %v898
  %1583 = vmatpush.bf16.msra.mxu0 %v894
  %1584 = vmatpush.bf16.msra.mxu0 %v890
  %1585 = vmatmul.bf16.gmra.mxu0 %v286
  %v1586 = vpop.f32.mrf.mxu0
  %v1587 = vadd.f32 %v259, %v1586
  %v1588 = vpop.f32.mrf.mxu0
  %v1589 = vadd.f32 %v259, %v1588
  %1590 = vdwg.mxu0
  %1591 = vmatpush.bf16.msra.mxu0 %v950
  %1592 = vmatpush.bf16.msra.mxu0 %v946
  %1593 = vmatpush.bf16.msra.mxu0 %v942
  %1594 = vmatpush.bf16.msra.mxu0 %v938
  %1595 = vmatpush.bf16.msra.mxu0 %v934
  %1596 = vmatpush.bf16.msra.mxu0 %v930
  %1597 = vmatpush.bf16.msra.mxu0 %v926
  %1598 = vmatpush.bf16.msra.mxu0 %v922
  %1599 = vmatmul.bf16.gmra.mxu0 %v287
  %v1600 = vpop.f32.mrf.mxu0
  %v1601 = vadd.f32 %v1587, %v1600
  %v1602 = vpop.f32.mrf.mxu0
  %v1603 = vadd.f32 %v1589, %v1602
  %1604 = vdwg.mxu0
  %1605 = vmatpush.bf16.msra.mxu0 %v982
  %1606 = vmatpush.bf16.msra.mxu0 %v978
  %1607 = vmatpush.bf16.msra.mxu0 %v974
  %1608 = vmatpush.bf16.msra.mxu0 %v970
  %1609 = vmatpush.bf16.msra.mxu0 %v966
  %1610 = vmatpush.bf16.msra.mxu0 %v962
  %1611 = vmatpush.bf16.msra.mxu0 %v958
  %1612 = vmatpush.bf16.msra.mxu0 %v954
  %1613 = vmatmul.bf16.gmra.mxu0 %v288
  %v1614 = vpop.f32.mrf.mxu0
  %v1615 = vadd.f32 %v1601, %v1614
  %v1616 = vpop.f32.mrf.mxu0
  %v1617 = vadd.f32 %v1603, %v1616
  %1618 = vdwg.mxu0
  %1619 = vmatpush.bf16.msra.mxu0 %v1014
  %1620 = vmatpush.bf16.msra.mxu0 %v1010
  %1621 = vmatpush.bf16.msra.mxu0 %v1006
  %1622 = vmatpush.bf16.msra.mxu0 %v1002
  %1623 = vmatpush.bf16.msra.mxu0 %v998
  %1624 = vmatpush.bf16.msra.mxu0 %v994
  %1625 = vmatpush.bf16.msra.mxu0 %v990
  %1626 = vmatpush.bf16.msra.mxu0 %v986
  %1627 = vmatmul.bf16.gmra.mxu0 %v289
  %v1628 = vpop.f32.mrf.mxu0
  %v1629 = vadd.f32 %v1615, %v1628
  %v1630 = vpop.f32.mrf.mxu0
  %v1631 = vadd.f32 %v1617, %v1630
  %1632 = vdwg.mxu0
  %1633 = vmatpush.bf16.msra.mxu0 %v1046
  %1634 = vmatpush.bf16.msra.mxu0 %v1042
  %1635 = vmatpush.bf16.msra.mxu0 %v1038
  %1636 = vmatpush.bf16.msra.mxu0 %v1034
  %1637 = vmatpush.bf16.msra.mxu0 %v1030
  %1638 = vmatpush.bf16.msra.mxu0 %v1026
  %1639 = vmatpush.bf16.msra.mxu0 %v1022
  %1640 = vmatpush.bf16.msra.mxu0 %v1018
  %1641 = vmatmul.bf16.gmra.mxu0 %v290
  %v1642 = vpop.f32.mrf.mxu0
  %v1643 = vadd.f32 %v1629, %v1642
  %v1644 = vpop.f32.mrf.mxu0
  %v1645 = vadd.f32 %v1631, %v1644
  %1646 = vdwg.mxu0
  %1647 = vmatpush.bf16.msra.mxu0 %v1078
  %1648 = vmatpush.bf16.msra.mxu0 %v1074
  %1649 = vmatpush.bf16.msra.mxu0 %v1070
  %1650 = vmatpush.bf16.msra.mxu0 %v1066
  %1651 = vmatpush.bf16.msra.mxu0 %v1062
  %1652 = vmatpush.bf16.msra.mxu0 %v1058
  %1653 = vmatpush.bf16.msra.mxu0 %v1054
  %1654 = vmatpush.bf16.msra.mxu0 %v1050
  %1655 = vmatmul.bf16.gmra.mxu0 %v291
  %v1656 = vpop.f32.mrf.mxu0
  %v1657 = vadd.f32 %v1643, %v1656
  %v1658 = vpop.f32.mrf.mxu0
  %v1659 = vadd.f32 %v1645, %v1658
  %1660 = vdwg.mxu0
  %1661 = vmatpush.bf16.msra.mxu0 0
  %1662 = vmatpush.bf16.msra.mxu0 0
  %1663 = vmatpush.bf16.msra.mxu0 0
  %1664 = vmatpush.bf16.msra.mxu0 0
  %1665 = vmatpush.bf16.msra.mxu0 0
  %1666 = vmatpush.bf16.msra.mxu0 0
  %1667 = vmatpush.bf16.msra.mxu0 0
  %1668 = vmatpush.bf16.msra.mxu0 %v1082
  %1669 = vmatmul.bf16.gmra.mxu0 %v1281
  %v1670 = vpop.f32.mrf.mxu0
  %v1671 = vadd.f32 %v1657, %v1670
  %v1672 = vpop.f32.mrf.mxu0
  %v1673 = vadd.f32 %v1659, %v1672
  %1674 = vdwg.mxu0
  %v1675 = vmax.f32 %v1377, 0.0
  %v1676 = vmax.f32 %v1475, 0.0
  %v1677 = vmax.f32 %v1573, 0.0
  %v1678 = vmax.f32 %v1671, 0.0
  %v1679 = vmax.f32 %v1379, 0.0
  %v1680 = vmax.f32 %v1477, 0.0
  %v1681 = vmax.f32 %v1575, 0.0
  %v1682 = vmax.f32 %v1673, 0.0
  %v1683 = vpack.c.bf16 %v1679, %v1675
  %v1684 = vpack.c.bf16 %v1680, %v1676
  %v1685 = vpack.c.bf16 %v1681, %v1677
  %v1686 = vpack.c.bf16 %v1682, %v1678
  %v1687 = vld [vmem:[%s4] sm:$0xff]
  %v1688 = vld [vmem:[%s4 + $0x8] sm:$0xff]
  %v1689 = vld [vmem:[%s4 + $0x10] sm:$0xff]
  %v1690 = vld [vmem:[%s4 + $0x18] sm:$0xff]
  %v1691 = vld [vmem:[%s4 + $0x20] sm:$0xff]
  %v1692 = vld [vmem:[%s4 + $0x28] sm:$0xff]
  %v1693 = vld [vmem:[%s4 + $0x30] sm:$0xff]
  %v1694 = vld [vmem:[%s4 + $0x38] sm:$0xff]
  %v1695 = vld [vmem:[%s4 + $0x40] sm:$0xff]
  %v1696 = vld [vmem:[%s4 + $0x48] sm:$0xff]
  %v1697 = vld [vmem:[%s4 + $0x50] sm:$0xff]
  %v1698 = vld [vmem:[%s4 + $0x58] sm:$0xff]
  %v1699 = vld [vmem:[%s4 + $0x60] sm:$0xff]
  %v1700 = vld [vmem:[%s4 + $0x68] sm:$0xff]
  %v1701 = vld [vmem:[%s4 + $0x70] sm:$0xff]
  %v1702 = vld [vmem:[%s4 + $0x78] sm:$0xff]
  %v1703 = vld [vmem:[%s4 + $0x80] sm:$0xff]
  %v1704 = vld [vmem:[%s4 + $0x88] sm:$0xff]
  %v1705 = vld [vmem:[%s4 + $0x90] sm:$0xff]
  %v1706 = vld [vmem:[%s4 + $0x98] sm:$0xff]
  %v1707 = vld [vmem:[%s4 + $0xa0] sm:$0xff]
  %v1708 = vld [vmem:[%s4 + $0xa8] sm:$0xff]
  %v1709 = vld [vmem:[%s4 + $0xb0] sm:$0xff]
  %v1710 = vld [vmem:[%s4 + $0xb8] sm:$0xff]
  %v1711 = vld [vmem:[%s4 + $0xc0] sm:$0xff]
  %v1712 = vld [vmem:[%s4 + $0xc8] sm:$0xff]
  %v1713 = vld [vmem:[%s4 + $0xd0] sm:$0xff]
  %v1714 = vld [vmem:[%s4 + $0xd8] sm:$0xff]
  %v1715 = vld [vmem:[%s4 + $0xe0] sm:$0xff]
  %v1716 = vld [vmem:[%s4 + $0xe8] sm:$0xff]
  %v1717 = vld [vmem:[%s4 + $0xf0] sm:$0xff]
  %v1718 = vld [vmem:[%s4 + $0xf8] sm:$0xff]
  %v1719 = vld [vmem:[%s4 + $0x100] sm:$0xff]
  %v1720 = vld [vmem:[%s4 + $0x108] sm:$0xff]
  %v1721 = vld [vmem:[%s4 + $0x110] sm:$0xff]
  %v1722 = vld [vmem:[%s4 + $0x118] sm:$0xff]
  %v1723 = vld [vmem:[%s4 + $0x120] sm:$0xff]
  %v1724 = vld [vmem:[%s4 + $0x128] sm:$0xff]
  %v1725 = vld [vmem:[%s4 + $0x130] sm:$0xff]
  %v1726 = vld [vmem:[%s4 + $0x138] sm:$0xff]
  %v1727 = vld [vmem:[%s4 + $0x140] sm:$0xff]
  %v1728 = vld [vmem:[%s4 + $0x148] sm:$0xff]
  %v1729 = vld [vmem:[%s4 + $0x150] sm:$0xff]
  %v1730 = vld [vmem:[%s4 + $0x158] sm:$0xff]
  %v1731 = vld [vmem:[%s4 + $0x160] sm:$0xff]
  %v1732 = vld [vmem:[%s4 + $0x168] sm:$0xff]
  %v1733 = vld [vmem:[%s4 + $0x170] sm:$0xff]
  %v1734 = vld [vmem:[%s4 + $0x178] sm:$0xff]
  %v1735 = vld [vmem:[%s4 + $0x180] sm:$0xff]
  %v1736 = vld [vmem:[%s4 + $0x188] sm:$0xff]
  %v1737 = vld [vmem:[%s4 + $0x190] sm:$0xff]
  %v1738 = vld [vmem:[%s4 + $0x198] sm:$0xff]
  %v1739 = vld [vmem:[%s4 + $0x1a0] sm:$0xff]
  %v1740 = vld [vmem:[%s4 + $0x1a8] sm:$0xff]
  %v1741 = vld [vmem:[%s4 + $0x1b0] sm:$0xff]
  %v1742 = vld [vmem:[%s4 + $0x1b8] sm:$0xff]
  %v1743 = vld [vmem:[%s4 + $0x1c0] sm:$0xff]
  %v1744 = vld [vmem:[%s4 + $0x1c8] sm:$0xff]
  %v1745 = vld [vmem:[%s4 + $0x1d0] sm:$0xff]
  %v1746 = vld [vmem:[%s4 + $0x1d8] sm:$0xff]
  %v1747 = vld [vmem:[%s4 + $0x1e0] sm:$0xff]
  %v1748 = vld [vmem:[%s4 + $0x1e8] sm:$0xff]
  %v1749 = vld [vmem:[%s4 + $0x1f0] sm:$0xff]
  %v1750 = vld [vmem:[%s4 + $0x1f8] sm:$0xff]
  %v1751 = vld [vmem:[%s5] sm:$0x3]
  %v1753 = vperm.slane %v1751, 0
  %v1754 = vperm.slane %v1751, 1
  %v1821 = vunpack.c.l.b16 %v1687
  %v1822 = vunpack.c.h.b16 %v1687
  %v1823 = vunpack.c.l.b16 %v1688
  %v1824 = vunpack.c.h.b16 %v1688
  %v1825 = vunpack.c.l.b16 %v1689
  %v1826 = vunpack.c.h.b16 %v1689
  %v1827 = vunpack.c.l.b16 %v1690
  %v1828 = vunpack.c.h.b16 %v1690
  %v1829 = vunpack.c.l.b16 %v1691
  %v1830 = vunpack.c.h.b16 %v1691
  %v1831 = vunpack.c.l.b16 %v1692
  %v1832 = vunpack.c.h.b16 %v1692
  %v1833 = vunpack.c.l.b16 %v1693
  %v1834 = vunpack.c.h.b16 %v1693
  %v1835 = vunpack.c.l.b16 %v1694
  %v1836 = vunpack.c.h.b16 %v1694
  %v1837 = vunpack.c.l.b16 %v1695
  %v1838 = vunpack.c.h.b16 %v1695
  %v1839 = vunpack.c.l.b16 %v1696
  %v1840 = vunpack.c.h.b16 %v1696
  %v1841 = vunpack.c.l.b16 %v1697
  %v1842 = vunpack.c.h.b16 %v1697
  %v1843 = vunpack.c.l.b16 %v1698
  %v1844 = vunpack.c.h.b16 %v1698
  %v1845 = vunpack.c.l.b16 %v1699
  %v1846 = vunpack.c.h.b16 %v1699
  %v1847 = vunpack.c.l.b16 %v1700
  %v1848 = vunpack.c.h.b16 %v1700
  %v1849 = vunpack.c.l.b16 %v1701
  %v1850 = vunpack.c.h.b16 %v1701
  %v1851 = vunpack.c.l.b16 %v1702
  %v1852 = vunpack.c.h.b16 %v1702
  %v1853 = vunpack.c.l.b16 %v1703
  %v1854 = vunpack.c.h.b16 %v1703
  %v1855 = vunpack.c.l.b16 %v1704
  %v1856 = vunpack.c.h.b16 %v1704
  %v1857 = vunpack.c.l.b16 %v1705
  %v1858 = vunpack.c.h.b16 %v1705
  %v1859 = vunpack.c.l.b16 %v1706
  %v1860 = vunpack.c.h.b16 %v1706
  %v1861 = vunpack.c.l.b16 %v1707
  %v1862 = vunpack.c.h.b16 %v1707
  %v1863 = vunpack.c.l.b16 %v1708
  %v1864 = vunpack.c.h.b16 %v1708
  %v1865 = vunpack.c.l.b16 %v1709
  %v1866 = vunpack.c.h.b16 %v1709
  %v1867 = vunpack.c.l.b16 %v1710
  %v1868 = vunpack.c.h.b16 %v1710
  %v1869 = vunpack.c.l.b16 %v1711
  %v1870 = vunpack.c.h.b16 %v1711
  %v1871 = vunpack.c.l.b16 %v1712
  %v1872 = vunpack.c.h.b16 %v1712
  %v1873 = vunpack.c.l.b16 %v1713
  %v1874 = vunpack.c.h.b16 %v1713
  %v1875 = vunpack.c.l.b16 %v1714
  %v1876 = vunpack.c.h.b16 %v1714
  %v1877 = vunpack.c.l.b16 %v1715
  %v1878 = vunpack.c.h.b16 %v1715
  %v1879 = vunpack.c.l.b16 %v1716
  %v1880 = vunpack.c.h.b16 %v1716
  %v1881 = vunpack.c.l.b16 %v1717
  %v1882 = vunpack.c.h.b16 %v1717
  %v1883 = vunpack.c.l.b16 %v1718
  %v1884 = vunpack.c.h.b16 %v1718
  %v1885 = vunpack.c.l.b16 %v1719
  %v1886 = vunpack.c.h.b16 %v1719
  %v1887 = vunpack.c.l.b16 %v1720
  %v1888 = vunpack.c.h.b16 %v1720
  %v1889 = vunpack.c.l.b16 %v1721
  %v1890 = vunpack.c.h.b16 %v1721
  %v1891 = vunpack.c.l.b16 %v1722
  %v1892 = vunpack.c.h.b16 %v1722
  %v1893 = vunpack.c.l.b16 %v1723
  %v1894 = vunpack.c.h.b16 %v1723
  %v1895 = vunpack.c.l.b16 %v1724
  %v1896 = vunpack.c.h.b16 %v1724
  %v1897 = vunpack.c.l.b16 %v1725
  %v1898 = vunpack.c.h.b16 %v1725
  %v1899 = vunpack.c.l.b16 %v1726
  %v1900 = vunpack.c.h.b16 %v1726
  %v1901 = vunpack.c.l.b16 %v1727
  %v1902 = vunpack.c.h.b16 %v1727
  %v1903 = vunpack.c.l.b16 %v1728
  %v1904 = vunpack.c.h.b16 %v1728
  %v1905 = vunpack.c.l.b16 %v1729
  %v1906 = vunpack.c.h.b16 %v1729
  %v1907 = vunpack.c.l.b16 %v1730
  %v1908 = vunpack.c.h.b16 %v1730
  %v1909 = vunpack.c.l.b16 %v1731
  %v1910 = vunpack.c.h.b16 %v1731
  %v1911 = vunpack.c.l.b16 %v1732
  %v1912 = vunpack.c.h.b16 %v1732
  %v1913 = vunpack.c.l.b16 %v1733
  %v1914 = vunpack.c.h.b16 %v1733
  %v1915 = vunpack.c.l.b16 %v1734
  %v1916 = vunpack.c.h.b16 %v1734
  %v1917 = vunpack.c.l.b16 %v1735
  %v1918 = vunpack.c.h.b16 %v1735
  %v1919 = vunpack.c.l.b16 %v1736
  %v1920 = vunpack.c.h.b16 %v1736
  %v1921 = vunpack.c.l.b16 %v1737
  %v1922 = vunpack.c.h.b16 %v1737
  %v1923 = vunpack.c.l.b16 %v1738
  %v1924 = vunpack.c.h.b16 %v1738
  %v1925 = vunpack.c.l.b16 %v1739
  %v1926 = vunpack.c.h.b16 %v1739
  %v1927 = vunpack.c.l.b16 %v1740
  %v1928 = vunpack.c.h.b16 %v1740
  %v1929 = vunpack.c.l.b16 %v1741
  %v1930 = vunpack.c.h.b16 %v1741
  %v1931 = vunpack.c.l.b16 %v1742
  %v1932 = vunpack.c.h.b16 %v1742
  %v1933 = vunpack.c.l.b16 %v1743
  %v1934 = vunpack.c.h.b16 %v1743
  %v1935 = vunpack.c.l.b16 %v1744
  %v1936 = vunpack.c.h.b16 %v1744
  %v1937 = vunpack.c.l.b16 %v1745
  %v1938 = vunpack.c.h.b16 %v1745
  %v1939 = vunpack.c.l.b16 %v1746
  %v1940 = vunpack.c.h.b16 %v1746
  %v1941 = vunpack.c.l.b16 %v1747
  %v1942 = vunpack.c.h.b16 %v1747
  %v1943 = vunpack.c.l.b16 %v1748
  %v1944 = vunpack.c.h.b16 %v1748
  %v1945 = vunpack.c.l.b16 %v1749
  %v1946 = vunpack.c.h.b16 %v1749
  %v1947 = vunpack.c.l.b16 %v1750
  %v1948 = vunpack.c.h.b16 %v1750
  %v1949 = vpack.c.b16 %v1823, %v1821
  %v1950 = vpack.c.b16 %v1824, %v1822
  %v1951 = vpack.c.b16 %v1827, %v1825
  %v1952 = vpack.c.b16 %v1828, %v1826
  %v1953 = vpack.c.b16 %v1831, %v1829
  %v1954 = vpack.c.b16 %v1832, %v1830
  %v1955 = vpack.c.b16 %v1835, %v1833
  %v1956 = vpack.c.b16 %v1836, %v1834
  %v1957 = vpack.c.b16 %v1839, %v1837
  %v1958 = vpack.c.b16 %v1840, %v1838
  %v1959 = vpack.c.b16 %v1843, %v1841
  %v1960 = vpack.c.b16 %v1844, %v1842
  %v1961 = vpack.c.b16 %v1847, %v1845
  %v1962 = vpack.c.b16 %v1848, %v1846
  %v1963 = vpack.c.b16 %v1851, %v1849
  %v1964 = vpack.c.b16 %v1852, %v1850
  %v1965 = vpack.c.b16 %v1855, %v1853
  %v1966 = vpack.c.b16 %v1856, %v1854
  %v1967 = vpack.c.b16 %v1859, %v1857
  %v1968 = vpack.c.b16 %v1860, %v1858
  %v1969 = vpack.c.b16 %v1863, %v1861
  %v1970 = vpack.c.b16 %v1864, %v1862
  %v1971 = vpack.c.b16 %v1867, %v1865
  %v1972 = vpack.c.b16 %v1868, %v1866
  %v1973 = vpack.c.b16 %v1871, %v1869
  %v1974 = vpack.c.b16 %v1872, %v1870
  %v1975 = vpack.c.b16 %v1875, %v1873
  %v1976 = vpack.c.b16 %v1876, %v1874
  %v1977 = vpack.c.b16 %v1879, %v1877
  %v1978 = vpack.c.b16 %v1880, %v1878
  %v1979 = vpack.c.b16 %v1883, %v1881
  %v1980 = vpack.c.b16 %v1884, %v1882
  %v1981 = vpack.c.b16 %v1887, %v1885
  %v1982 = vpack.c.b16 %v1888, %v1886
  %v1983 = vpack.c.b16 %v1891, %v1889
  %v1984 = vpack.c.b16 %v1892, %v1890
  %v1985 = vpack.c.b16 %v1895, %v1893
  %v1986 = vpack.c.b16 %v1896, %v1894
  %v1987 = vpack.c.b16 %v1899, %v1897
  %v1988 = vpack.c.b16 %v1900, %v1898
  %v1989 = vpack.c.b16 %v1903, %v1901
  %v1990 = vpack.c.b16 %v1904, %v1902
  %v1991 = vpack.c.b16 %v1907, %v1905
  %v1992 = vpack.c.b16 %v1908, %v1906
  %v1993 = vpack.c.b16 %v1911, %v1909
  %v1994 = vpack.c.b16 %v1912, %v1910
  %v1995 = vpack.c.b16 %v1915, %v1913
  %v1996 = vpack.c.b16 %v1916, %v1914
  %v1997 = vpack.c.b16 %v1919, %v1917
  %v1998 = vpack.c.b16 %v1920, %v1918
  %v1999 = vpack.c.b16 %v1923, %v1921
  %v2000 = vpack.c.b16 %v1924, %v1922
  %v2001 = vpack.c.b16 %v1927, %v1925
  %v2002 = vpack.c.b16 %v1928, %v1926
  %v2003 = vpack.c.b16 %v1931, %v1929
  %v2004 = vpack.c.b16 %v1932, %v1930
  %v2005 = vpack.c.b16 %v1935, %v1933
  %v2006 = vpack.c.b16 %v1936, %v1934
  %v2007 = vpack.c.b16 %v1939, %v1937
  %v2008 = vpack.c.b16 %v1940, %v1938
  %v2009 = vpack.c.b16 %v1943, %v1941
  %v2010 = vpack.c.b16 %v1944, %v1942
  %v2011 = vpack.c.b16 %v1947, %v1945
  %v2012 = vpack.c.b16 %v1948, %v1946
  %2077 = vmatpush.bf16.msra.mxu0 %v1963
  %2078 = vmatpush.bf16.msra.mxu0 %v1961
  %2079 = vmatpush.bf16.msra.mxu0 %v1959
  %2080 = vmatpush.bf16.msra.mxu0 %v1957
  %2081 = vmatpush.bf16.msra.mxu0 %v1955
  %2082 = vmatpush.bf16.msra.mxu0 %v1953
  %2083 = vmatpush.bf16.msra.mxu0 %v1951
  %2084 = vmatpush.bf16.msra.mxu0 %v1949
  %2085 = vmatmul.bf16.gmra.mxu0 %v1683
  %v2086 = vpop.f32.mrf.mxu0
  %v2087 = vadd.f32 %v1753, %v2086
  %v2088 = vpop.f32.mrf.mxu0
  %v2089 = vadd.f32 %v1753, %v2088
  %2090 = vdwg.mxu0
  %2091 = vmatpush.bf16.msra.mxu0 %v1979
  %2092 = vmatpush.bf16.msra.mxu0 %v1977
  %2093 = vmatpush.bf16.msra.mxu0 %v1975
  %2094 = vmatpush.bf16.msra.mxu0 %v1973
  %2095 = vmatpush.bf16.msra.mxu0 %v1971
  %2096 = vmatpush.bf16.msra.mxu0 %v1969
  %2097 = vmatpush.bf16.msra.mxu0 %v1967
  %2098 = vmatpush.bf16.msra.mxu0 %v1965
  %2099 = vmatmul.bf16.gmra.mxu0 %v1684
  %v2100 = vpop.f32.mrf.mxu0
  %v2101 = vadd.f32 %v2087, %v2100
  %v2102 = vpop.f32.mrf.mxu0
  %v2103 = vadd.f32 %v2089, %v2102
  %2104 = vdwg.mxu0
  %2105 = vmatpush.bf16.msra.mxu0 %v1995
  %2106 = vmatpush.bf16.msra.mxu0 %v1993
  %2107 = vmatpush.bf16.msra.mxu0 %v1991
  %2108 = vmatpush.bf16.msra.mxu0 %v1989
  %2109 = vmatpush.bf16.msra.mxu0 %v1987
  %2110 = vmatpush.bf16.msra.mxu0 %v1985
  %2111 = vmatpush.bf16.msra.mxu0 %v1983
  %2112 = vmatpush.bf16.msra.mxu0 %v1981
  %2113 = vmatmul.bf16.gmra.mxu0 %v1685
  %v2114 = vpop.f32.mrf.mxu0
  %v2115 = vadd.f32 %v2101, %v2114
  %v2116 = vpop.f32.mrf.mxu0
  %v2117 = vadd.f32 %v2103, %v2116
  %2118 = vdwg.mxu0
  %2119 = vmatpush.bf16.msra.mxu0 %v2011
  %2120 = vmatpush.bf16.msra.mxu0 %v2009
  %2121 = vmatpush.bf16.msra.mxu0 %v2007
  %2122 = vmatpush.bf16.msra.mxu0 %v2005
  %2123 = vmatpush.bf16.msra.mxu0 %v2003
  %2124 = vmatpush.bf16.msra.mxu0 %v2001
  %2125 = vmatpush.bf16.msra.mxu0 %v1999
  %2126 = vmatpush.bf16.msra.mxu0 %v1997
  %2127 = vmatmul.bf16.gmra.mxu0 %v1686
  %v2128 = vpop.f32.mrf.mxu0
  %v2129 = vadd.f32 %v2115, %v2128
  %v2130 = vpop.f32.mrf.mxu0
  %v2131 = vadd.f32 %v2117, %v2130
  %2132 = vdwg.mxu0
  %2133 = vmatpush.bf16.msra.mxu0 %v1964
  %2134 = vmatpush.bf16.msra.mxu0 %v1962
  %2135 = vmatpush.bf16.msra.mxu0 %v1960
  %2136 = vmatpush.bf16.msra.mxu0 %v1958
  %2137 = vmatpush.bf16.msra.mxu0 %v1956
  %2138 = vmatpush.bf16.msra.mxu0 %v1954
  %2139 = vmatpush.bf16.msra.mxu0 %v1952
  %2140 = vmatpush.bf16.msra.mxu0 %v1950
  %2141 = vmatmul.bf16.gmra.mxu0 %v1683
  %v2142 = vpop.f32.mrf.mxu0
  %v2143 = vadd.f32 %v1754, %v2142
  %v2144 = vpop.f32.mrf.mxu0
  %v2145 = vadd.f32 %v1754, %v2144
  %2146 = vdwg.mxu0
  %2147 = vmatpush.bf16.msra.mxu0 %v1980
  %2148 = vmatpush.bf16.msra.mxu0 %v1978
  %2149 = vmatpush.bf16.msra.mxu0 %v1976
  %2150 = vmatpush.bf16.msra.mxu0 %v1974
  %2151 = vmatpush.bf16.msra.mxu0 %v1972
  %2152 = vmatpush.bf16.msra.mxu0 %v1970
  %2153 = vmatpush.bf16.msra.mxu0 %v1968
  %2154 = vmatpush.bf16.msra.mxu0 %v1966
  %2155 = vmatmul.bf16.gmra.mxu0 %v1684
  %v2156 = vpop.f32.mrf.mxu0
  %v2157 = vadd.f32 %v2143, %v2156
  %v2158 = vpop.f32.mrf.mxu0
  %v2159 = vadd.f32 %v2145, %v2158
  %2160 = vdwg.mxu0
  %2161 = vmatpush.bf16.msra.mxu0 %v1996
  %2162 = vmatpush.bf16.msra.mxu0 %v1994
  %2163 = vmatpush.bf16.msra.mxu0 %v1992
  %2164 = vmatpush.bf16.msra.mxu0 %v1990
  %2165 = vmatpush.bf16.msra.mxu0 %v1988
  %2166 = vmatpush.bf16.msra.mxu0 %v1986
  %2167 = vmatpush.bf16.msra.mxu0 %v1984
  %2168 = vmatpush.bf16.msra.mxu0 %v1982
  %2169 = vmatmul.bf16.gmra.mxu0 %v1685
  %v2170 = vpop.f32.mrf.mxu0
  %v2171 = vadd.f32 %v2157, %v2170
  %v2172 = vpop.f32.mrf.mxu0
  %v2173 = vadd.f32 %v2159, %v2172
  %2174 = vdwg.mxu0
  %2175 = vmatpush.bf16.msra.mxu0 %v2012
  %2176 = vmatpush.bf16.msra.mxu0 %v2010
  %2177 = vmatpush.bf16.msra.mxu0 %v2008
  %2178 = vmatpush.bf16.msra.mxu0 %v2006
  %2179 = vmatpush.bf16.msra.mxu0 %v2004
  %2180 = vmatpush.bf16.msra.mxu0 %v2002
  %2181 = vmatpush.bf16.msra.mxu0 %v2000
  %2182 = vmatpush.bf16.msra.mxu0 %v1998
  %2183 = vmatmul.bf16.gmra.mxu0 %v1686
  %v2184 = vpop.f32.mrf.mxu0
  %v2185 = vadd.f32 %v2171, %v2184
  %v2186 = vpop.f32.mrf.mxu0
  %v2187 = vadd.f32 %v2173, %v2186
  %2188 = vdwg.mxu0
  %v2189 = vmax.f32 %v2129, 0.0
  %v2190 = vmax.f32 %v2185, 0.0
  %v2191 = vmax.f32 %v2131, 0.0
  %v2192 = vmax.f32 %v2187, 0.0
  %v2193 = vpack.c.bf16 %v2191, %v2189
  %v2194 = vpack.c.bf16 %v2192, %v2190
  %v2195 = vld [vmem:[%s6] sm:$0xff]
  %v2196 = vld [vmem:[%s6 + $0x8] sm:$0xff]
  %v2197 = vld [vmem:[%s6 + $0x10] sm:$0xff]
  %v2198 = vld [vmem:[%s6 + $0x18] sm:$0xff]
  %v2199 = vld [vmem:[%s6 + $0x20] sm:$0xff]
  %v2200 = vld [vmem:[%s6 + $0x28] sm:$0xff]
  %v2201 = vld [vmem:[%s6 + $0x30] sm:$0xff]
  %v2202 = vld [vmem:[%s6 + $0x38] sm:$0xff]
  %v2203 = vld [vmem:[%s6 + $0x40] sm:$0xff]
  %v2204 = vld [vmem:[%s6 + $0x48] sm:$0xff]
  %v2205 = vld [vmem:[%s6 + $0x50] sm:$0xff]
  %v2206 = vld [vmem:[%s6 + $0x58] sm:$0xff]
  %v2207 = vld [vmem:[%s6 + $0x60] sm:$0xff]
  %v2208 = vld [vmem:[%s6 + $0x68] sm:$0xff]
  %v2209 = vld [vmem:[%s6 + $0x70] sm:$0xff]
  %v2210 = vld [vmem:[%s6 + $0x78] sm:$0xff]
  %v2211 = vld [vmem:[%s6 + $0x80] sm:$0xff]
  %v2212 = vld [vmem:[%s6 + $0x88] sm:$0xff]
  %v2213 = vld [vmem:[%s6 + $0x90] sm:$0xff]
  %v2214 = vld [vmem:[%s6 + $0x98] sm:$0xff]
  %v2215 = vld [vmem:[%s6 + $0xa0] sm:$0xff]
  %v2216 = vld [vmem:[%s6 + $0xa8] sm:$0xff]
  %v2217 = vld [vmem:[%s6 + $0xb0] sm:$0xff]
  %v2218 = vld [vmem:[%s6 + $0xb8] sm:$0xff]
  %v2219 = vld [vmem:[%s6 + $0xc0] sm:$0xff]
  %v2220 = vld [vmem:[%s6 + $0xc8] sm:$0xff]
  %v2221 = vld [vmem:[%s6 + $0xd0] sm:$0xff]
  %v2222 = vld [vmem:[%s6 + $0xd8] sm:$0xff]
  %v2223 = vld [vmem:[%s6 + $0xe0] sm:$0xff]
  %v2224 = vld [vmem:[%s6 + $0xe8] sm:$0xff]
  %v2225 = vld [vmem:[%s6 + $0xf0] sm:$0xff]
  %v2226 = vld [vmem:[%s6 + $0xf8] sm:$0xff]
  %v2227 = vld [vmem:[%s7] sm:$0x3]
  %v2229 = vperm.slane %v2227, 0
  %v2230 = vperm.slane %v2227, 1
  %v2265 = vunpack.c.l.b16 %v2195
  %v2266 = vunpack.c.h.b16 %v2195
  %v2267 = vunpack.c.l.b16 %v2196
  %v2268 = vunpack.c.h.b16 %v2196
  %v2269 = vunpack.c.l.b16 %v2197
  %v2270 = vunpack.c.h.b16 %v2197
  %v2271 = vunpack.c.l.b16 %v2198
  %v2272 = vunpack.c.h.b16 %v2198
  %v2273 = vunpack.c.l.b16 %v2199
  %v2274 = vunpack.c.h.b16 %v2199
  %v2275 = vunpack.c.l.b16 %v2200
  %v2276 = vunpack.c.h.b16 %v2200
  %v2277 = vunpack.c.l.b16 %v2201
  %v2278 = vunpack.c.h.b16 %v2201
  %v2279 = vunpack.c.l.b16 %v2202
  %v2280 = vunpack.c.h.b16 %v2202
  %v2281 = vunpack.c.l.b16 %v2203
  %v2282 = vunpack.c.h.b16 %v2203
  %v2283 = vunpack.c.l.b16 %v2204
  %v2284 = vunpack.c.h.b16 %v2204
  %v2285 = vunpack.c.l.b16 %v2205
  %v2286 = vunpack.c.h.b16 %v2205
  %v2287 = vunpack.c.l.b16 %v2206
  %v2288 = vunpack.c.h.b16 %v2206
  %v2289 = vunpack.c.l.b16 %v2207
  %v2290 = vunpack.c.h.b16 %v2207
  %v2291 = vunpack.c.l.b16 %v2208
  %v2292 = vunpack.c.h.b16 %v2208
  %v2293 = vunpack.c.l.b16 %v2209
  %v2294 = vunpack.c.h.b16 %v2209
  %v2295 = vunpack.c.l.b16 %v2210
  %v2296 = vunpack.c.h.b16 %v2210
  %v2297 = vunpack.c.l.b16 %v2211
  %v2298 = vunpack.c.h.b16 %v2211
  %v2299 = vunpack.c.l.b16 %v2212
  %v2300 = vunpack.c.h.b16 %v2212
  %v2301 = vunpack.c.l.b16 %v2213
  %v2302 = vunpack.c.h.b16 %v2213
  %v2303 = vunpack.c.l.b16 %v2214
  %v2304 = vunpack.c.h.b16 %v2214
  %v2305 = vunpack.c.l.b16 %v2215
  %v2306 = vunpack.c.h.b16 %v2215
  %v2307 = vunpack.c.l.b16 %v2216
  %v2308 = vunpack.c.h.b16 %v2216
  %v2309 = vunpack.c.l.b16 %v2217
  %v2310 = vunpack.c.h.b16 %v2217
  %v2311 = vunpack.c.l.b16 %v2218
  %v2312 = vunpack.c.h.b16 %v2218
  %v2313 = vunpack.c.l.b16 %v2219
  %v2314 = vunpack.c.h.b16 %v2219
  %v2315 = vunpack.c.l.b16 %v2220
  %v2316 = vunpack.c.h.b16 %v2220
  %v2317 = vunpack.c.l.b16 %v2221
  %v2318 = vunpack.c.h.b16 %v2221
  %v2319 = vunpack.c.l.b16 %v2222
  %v2320 = vunpack.c.h.b16 %v2222
  %v2321 = vunpack.c.l.b16 %v2223
  %v2322 = vunpack.c.h.b16 %v2223
  %v2323 = vunpack.c.l.b16 %v2224
  %v2324 = vunpack.c.h.b16 %v2224
  %v2325 = vunpack.c.l.b16 %v2225
  %v2326 = vunpack.c.h.b16 %v2225
  %v2327 = vunpack.c.l.b16 %v2226
  %v2328 = vunpack.c.h.b16 %v2226
  %v2329 = vpack.c.b16 %v2267, %v2265
  %v2330 = vpack.c.b16 %v2268, %v2266
  %v2331 = vpack.c.b16 %v2271, %v2269
  %v2332 = vpack.c.b16 %v2272, %v2270
  %v2333 = vpack.c.b16 %v2275, %v2273
  %v2334 = vpack.c.b16 %v2276, %v2274
  %v2335 = vpack.c.b16 %v2279, %v2277
  %v2336 = vpack.c.b16 %v2280, %v2278
  %v2337 = vpack.c.b16 %v2283, %v2281
  %v2338 = vpack.c.b16 %v2284, %v2282
  %v2339 = vpack.c.b16 %v2287, %v2285
  %v2340 = vpack.c.b16 %v2288, %v2286
  %v2341 = vpack.c.b16 %v2291, %v2289
  %v2342 = vpack.c.b16 %v2292, %v2290
  %v2343 = vpack.c.b16 %v2295, %v2293
  %v2344 = vpack.c.b16 %v2296, %v2294
  %v2345 = vpack.c.b16 %v2299, %v2297
  %v2346 = vpack.c.b16 %v2300, %v2298
  %v2347 = vpack.c.b16 %v2303, %v2301
  %v2348 = vpack.c.b16 %v2304, %v2302
  %v2349 = vpack.c.b16 %v2307, %v2305
  %v2350 = vpack.c.b16 %v2308, %v2306
  %v2351 = vpack.c.b16 %v2311, %v2309
  %v2352 = vpack.c.b16 %v2312, %v2310
  %v2353 = vpack.c.b16 %v2315, %v2313
  %v2354 = vpack.c.b16 %v2316, %v2314
  %v2355 = vpack.c.b16 %v2319, %v2317
  %v2356 = vpack.c.b16 %v2320, %v2318
  %v2357 = vpack.c.b16 %v2323, %v2321
  %v2358 = vpack.c.b16 %v2324, %v2322
  %v2359 = vpack.c.b16 %v2327, %v2325
  %v2360 = vpack.c.b16 %v2328, %v2326
  %2393 = vmatpush.bf16.msra.mxu0 %v2343
  %2394 = vmatpush.bf16.msra.mxu0 %v2341
  %2395 = vmatpush.bf16.msra.mxu0 %v2339
  %2396 = vmatpush.bf16.msra.mxu0 %v2337
  %2397 = vmatpush.bf16.msra.mxu0 %v2335
  %2398 = vmatpush.bf16.msra.mxu0 %v2333
  %2399 = vmatpush.bf16.msra.mxu0 %v2331
  %2400 = vmatpush.bf16.msra.mxu0 %v2329
  %2401 = vmatmul.bf16.gmra.mxu0 %v2193
  %v2402 = vpop.f32.mrf.mxu0
  %v2403 = vadd.f32 %v2229, %v2402
  %v2404 = vpop.f32.mrf.mxu0
  %v2405 = vadd.f32 %v2229, %v2404
  %2406 = vdwg.mxu0
  %2407 = vmatpush.bf16.msra.mxu0 %v2359
  %2408 = vmatpush.bf16.msra.mxu0 %v2357
  %2409 = vmatpush.bf16.msra.mxu0 %v2355
  %2410 = vmatpush.bf16.msra.mxu0 %v2353
  %2411 = vmatpush.bf16.msra.mxu0 %v2351
  %2412 = vmatpush.bf16.msra.mxu0 %v2349
  %2413 = vmatpush.bf16.msra.mxu0 %v2347
  %2414 = vmatpush.bf16.msra.mxu0 %v2345
  %2415 = vmatmul.bf16.gmra.mxu0 %v2194
  %v2416 = vpop.f32.mrf.mxu0
  %v2417 = vadd.f32 %v2403, %v2416
  %v2418 = vpop.f32.mrf.mxu0
  %v2419 = vadd.f32 %v2405, %v2418
  %2420 = vdwg.mxu0
  %2421 = vmatpush.bf16.msra.mxu0 %v2344
  %2422 = vmatpush.bf16.msra.mxu0 %v2342
  %2423 = vmatpush.bf16.msra.mxu0 %v2340
  %2424 = vmatpush.bf16.msra.mxu0 %v2338
  %2425 = vmatpush.bf16.msra.mxu0 %v2336
  %2426 = vmatpush.bf16.msra.mxu0 %v2334
  %2427 = vmatpush.bf16.msra.mxu0 %v2332
  %2428 = vmatpush.bf16.msra.mxu0 %v2330
  %2429 = vmatmul.bf16.gmra.mxu0 %v2193
  %v2430 = vpop.f32.mrf.mxu0
  %v2431 = vadd.f32 %v2230, %v2430
  %v2432 = vpop.f32.mrf.mxu0
  %v2433 = vadd.f32 %v2230, %v2432
  %2434 = vdwg.mxu0
  %2435 = vmatpush.bf16.msra.mxu0 %v2360
  %2436 = vmatpush.bf16.msra.mxu0 %v2358
  %2437 = vmatpush.bf16.msra.mxu0 %v2356
  %2438 = vmatpush.bf16.msra.mxu0 %v2354
  %2439 = vmatpush.bf16.msra.mxu0 %v2352
  %2440 = vmatpush.bf16.msra.mxu0 %v2350
  %2441 = vmatpush.bf16.msra.mxu0 %v2348
  %2442 = vmatpush.bf16.msra.mxu0 %v2346
  %2443 = vmatmul.bf16.gmra.mxu0 %v2194
  %v2444 = vpop.f32.mrf.mxu0
  %v2445 = vadd.f32 %v2431, %v2444
  %v2446 = vpop.f32.mrf.mxu0
  %v2447 = vadd.f32 %v2433, %v2446
  %2448 = vdwg.mxu0
  %v2449 = vmul.f32 %v2445, 0.5
  %v2450 = vmul.f32 %v2447, 0.5
  %v2451 = vmul.f32 %v2449, 1.442695
  %v2452 = vpow.pop %v2451
  %v2453 = vmul.f32 %v2450, 1.442695
  %v2454 = vpow.pop %v2453
  %v2455 = vld [vmem:[%s1] sm:$0xf]
  %v2456 = vld [vmem:[%s1 + $0x4] sm:$0xf]
  %v2457 = vunpack.c.l.bf16 %v2455
  %v2458 = vunpack.c.l.bf16 %v2456
  %v2459 = vmul.f32 %v2457, %v2452
  %v2460 = vmul.f32 %v2458, %v2454
  %v2461 = vadd.f32 %v2417, %v2459
  %v2462 = vadd.f32 %v2419, %v2460
  %v2463 = vpack.c.bf16 %v2461, %v2461
  %v2464 = vpack.c.bf16 %v2462, %v2462
  %v2465 = vld [vmem:[%s8] sm:$0xff]
  %v2466 = vld [vmem:[%s8 + $0x8] sm:$0xff]
  %v2467 = vld [vmem:[%s8 + $0x10] sm:$0xff]
  %v2468 = vld [vmem:[%s8 + $0x18] sm:$0xff]
  %v2469 = vld [vmem:[%s8 + $0x20] sm:$0xff]
  %v2470 = vld [vmem:[%s8 + $0x28] sm:$0xff]
  %v2471 = vld [vmem:[%s8 + $0x30] sm:$0xff]
  %v2472 = vld [vmem:[%s8 + $0x38] sm:$0xff]
  %v2473 = vld [vmem:[%s8 + $0x40] sm:$0xff]
  %v2474 = vld [vmem:[%s8 + $0x48] sm:$0xff]
  %v2475 = vld [vmem:[%s8 + $0x50] sm:$0xff]
  %v2476 = vld [vmem:[%s8 + $0x58] sm:$0xff]
  %v2477 = vld [vmem:[%s8 + $0x60] sm:$0xff]
  %v2478 = vld [vmem:[%s8 + $0x68] sm:$0xff]
  %v2479 = vld [vmem:[%s8 + $0x70] sm:$0xff]
  %v2480 = vld [vmem:[%s8 + $0x78] sm:$0xff]
  %v2481 = vld [vmem:[%s9] sm:$0x3]
  %v2483 = vperm.slane %v2481, 0
  %v2484 = vperm.slane %v2481, 1
  %v2489 = vunpack.c.l.b16 %v2463
  %v2490 = vunpack.c.l.b16 %v2464
  %v2491 = vpack.c.b16 %v2490, %v2489
  %v2509 = vunpack.c.l.b16 %v2465
  %v2510 = vunpack.c.h.b16 %v2465
  %v2511 = vunpack.c.l.b16 %v2466
  %v2512 = vunpack.c.h.b16 %v2466
  %v2513 = vunpack.c.l.b16 %v2467
  %v2514 = vunpack.c.h.b16 %v2467
  %v2515 = vunpack.c.l.b16 %v2468
  %v2516 = vunpack.c.h.b16 %v2468
  %v2517 = vunpack.c.l.b16 %v2469
  %v2518 = vunpack.c.h.b16 %v2469
  %v2519 = vunpack.c.l.b16 %v2470
  %v2520 = vunpack.c.h.b16 %v2470
  %v2521 = vunpack.c.l.b16 %v2471
  %v2522 = vunpack.c.h.b16 %v2471
  %v2523 = vunpack.c.l.b16 %v2472
  %v2524 = vunpack.c.h.b16 %v2472
  %v2525 = vunpack.c.l.b16 %v2473
  %v2526 = vunpack.c.h.b16 %v2473
  %v2527 = vunpack.c.l.b16 %v2474
  %v2528 = vunpack.c.h.b16 %v2474
  %v2529 = vunpack.c.l.b16 %v2475
  %v2530 = vunpack.c.h.b16 %v2475
  %v2531 = vunpack.c.l.b16 %v2476
  %v2532 = vunpack.c.h.b16 %v2476
  %v2533 = vunpack.c.l.b16 %v2477
  %v2534 = vunpack.c.h.b16 %v2477
  %v2535 = vunpack.c.l.b16 %v2478
  %v2536 = vunpack.c.h.b16 %v2478
  %v2537 = vunpack.c.l.b16 %v2479
  %v2538 = vunpack.c.h.b16 %v2479
  %v2539 = vunpack.c.l.b16 %v2480
  %v2540 = vunpack.c.h.b16 %v2480
  %v2541 = vpack.c.b16 %v2511, %v2509
  %v2542 = vpack.c.b16 %v2512, %v2510
  %v2543 = vpack.c.b16 %v2515, %v2513
  %v2544 = vpack.c.b16 %v2516, %v2514
  %v2545 = vpack.c.b16 %v2519, %v2517
  %v2546 = vpack.c.b16 %v2520, %v2518
  %v2547 = vpack.c.b16 %v2523, %v2521
  %v2548 = vpack.c.b16 %v2524, %v2522
  %v2549 = vpack.c.b16 %v2527, %v2525
  %v2550 = vpack.c.b16 %v2528, %v2526
  %v2551 = vpack.c.b16 %v2531, %v2529
  %v2552 = vpack.c.b16 %v2532, %v2530
  %v2553 = vpack.c.b16 %v2535, %v2533
  %v2554 = vpack.c.b16 %v2536, %v2534
  %v2555 = vpack.c.b16 %v2539, %v2537
  %v2556 = vpack.c.b16 %v2540, %v2538
  %2573 = vmatpush.bf16.msra.mxu0 %v2555
  %2574 = vmatpush.bf16.msra.mxu0 %v2553
  %2575 = vmatpush.bf16.msra.mxu0 %v2551
  %2576 = vmatpush.bf16.msra.mxu0 %v2549
  %2577 = vmatpush.bf16.msra.mxu0 %v2547
  %2578 = vmatpush.bf16.msra.mxu0 %v2545
  %2579 = vmatpush.bf16.msra.mxu0 %v2543
  %2580 = vmatpush.bf16.msra.mxu0 %v2541
  %2581 = vmatmul.bf16.gmra.mxu0 %v2491
  %v2582 = vpop.f32.mrf.mxu0
  %v2583 = vadd.f32 %v2483, %v2582
  %v2584 = vpop.f32.mrf.mxu0
  %v2585 = vadd.f32 %v2483, %v2584
  %2586 = vdwg.mxu0
  %2587 = vmatpush.bf16.msra.mxu0 %v2556
  %2588 = vmatpush.bf16.msra.mxu0 %v2554
  %2589 = vmatpush.bf16.msra.mxu0 %v2552
  %2590 = vmatpush.bf16.msra.mxu0 %v2550
  %2591 = vmatpush.bf16.msra.mxu0 %v2548
  %2592 = vmatpush.bf16.msra.mxu0 %v2546
  %2593 = vmatpush.bf16.msra.mxu0 %v2544
  %2594 = vmatpush.bf16.msra.mxu0 %v2542
  %2595 = vmatmul.bf16.gmra.mxu0 %v2491
  %v2596 = vpop.f32.mrf.mxu0
  %v2597 = vadd.f32 %v2484, %v2596
  %v2598 = vpop.f32.mrf.mxu0
  %v2599 = vadd.f32 %v2484, %v2598
  %2600 = vdwg.mxu0
  %v2601 = vmax.f32 %v2583, 0.0
  %v2602 = vmax.f32 %v2597, 0.0
  %v2603 = vmax.f32 %v2585, 0.0
  %v2604 = vmax.f32 %v2599, 0.0
  %v2605 = vpack.c.bf16 %v2603, %v2601
  %v2606 = vpack.c.bf16 %v2604, %v2602
  %v2607 = vld [vmem:[%s10] sm:$0xff]
  %v2608 = vld [vmem:[%s10 + $0x8] sm:$0xff]
  %v2609 = vld [vmem:[%s10 + $0x10] sm:$0xff]
  %v2610 = vld [vmem:[%s10 + $0x18] sm:$0xff]
  %v2611 = vld [vmem:[%s10 + $0x20] sm:$0xff]
  %v2612 = vld [vmem:[%s10 + $0x28] sm:$0xff]
  %v2613 = vld [vmem:[%s10 + $0x30] sm:$0xff]
  %v2614 = vld [vmem:[%s10 + $0x38] sm:$0xff]
  %v2615 = vld [vmem:[%s10 + $0x40] sm:$0xff]
  %v2616 = vld [vmem:[%s10 + $0x48] sm:$0xff]
  %v2617 = vld [vmem:[%s10 + $0x50] sm:$0xff]
  %v2618 = vld [vmem:[%s10 + $0x58] sm:$0xff]
  %v2619 = vld [vmem:[%s10 + $0x60] sm:$0xff]
  %v2620 = vld [vmem:[%s10 + $0x68] sm:$0xff]
  %v2621 = vld [vmem:[%s10 + $0x70] sm:$0xff]
  %v2622 = vld [vmem:[%s10 + $0x78] sm:$0xff]
  %v2623 = vld [vmem:[%s10 + $0x80] sm:$0xff]
  %v2624 = vld [vmem:[%s10 + $0x88] sm:$0xff]
  %v2625 = vld [vmem:[%s10 + $0x90] sm:$0xff]
  %v2626 = vld [vmem:[%s10 + $0x98] sm:$0xff]
  %v2627 = vld [vmem:[%s10 + $0xa0] sm:$0xff]
  %v2628 = vld [vmem:[%s10 + $0xa8] sm:$0xff]
  %v2629 = vld [vmem:[%s10 + $0xb0] sm:$0xff]
  %v2630 = vld [vmem:[%s10 + $0xb8] sm:$0xff]
  %v2631 = vld [vmem:[%s10 + $0xc0] sm:$0xff]
  %v2632 = vld [vmem:[%s10 + $0xc8] sm:$0xff]
  %v2633 = vld [vmem:[%s10 + $0xd0] sm:$0xff]
  %v2634 = vld [vmem:[%s10 + $0xd8] sm:$0xff]
  %v2635 = vld [vmem:[%s10 + $0xe0] sm:$0xff]
  %v2636 = vld [vmem:[%s10 + $0xe8] sm:$0xff]
  %v2637 = vld [vmem:[%s10 + $0xf0] sm:$0xff]
  %v2638 = vld [vmem:[%s10 + $0xf8] sm:$0xff]
  %v2639 = vld [vmem:[%s10 + $0x100] sm:$0xff]
  %v2640 = vld [vmem:[%s10 + $0x108] sm:$0xff]
  %v2641 = vld [vmem:[%s10 + $0x110] sm:$0xff]
  %v2642 = vld [vmem:[%s10 + $0x118] sm:$0xff]
  %v2643 = vld [vmem:[%s10 + $0x120] sm:$0xff]
  %v2644 = vld [vmem:[%s10 + $0x128] sm:$0xff]
  %v2645 = vld [vmem:[%s10 + $0x130] sm:$0xff]
  %v2646 = vld [vmem:[%s10 + $0x138] sm:$0xff]
  %v2647 = vld [vmem:[%s10 + $0x140] sm:$0xff]
  %v2648 = vld [vmem:[%s10 + $0x148] sm:$0xff]
  %v2649 = vld [vmem:[%s10 + $0x150] sm:$0xff]
  %v2650 = vld [vmem:[%s10 + $0x158] sm:$0xff]
  %v2651 = vld [vmem:[%s10 + $0x160] sm:$0xff]
  %v2652 = vld [vmem:[%s10 + $0x168] sm:$0xff]
  %v2653 = vld [vmem:[%s10 + $0x170] sm:$0xff]
  %v2654 = vld [vmem:[%s10 + $0x178] sm:$0xff]
  %v2655 = vld [vmem:[%s10 + $0x180] sm:$0xff]
  %v2656 = vld [vmem:[%s10 + $0x188] sm:$0xff]
  %v2657 = vld [vmem:[%s10 + $0x190] sm:$0xff]
  %v2658 = vld [vmem:[%s10 + $0x198] sm:$0xff]
  %v2659 = vld [vmem:[%s10 + $0x1a0] sm:$0xff]
  %v2660 = vld [vmem:[%s10 + $0x1a8] sm:$0xff]
  %v2661 = vld [vmem:[%s10 + $0x1b0] sm:$0xff]
  %v2662 = vld [vmem:[%s10 + $0x1b8] sm:$0xff]
  %v2663 = vld [vmem:[%s10 + $0x1c0] sm:$0xff]
  %v2664 = vld [vmem:[%s10 + $0x1c8] sm:$0xff]
  %v2665 = vld [vmem:[%s10 + $0x1d0] sm:$0xff]
  %v2666 = vld [vmem:[%s10 + $0x1d8] sm:$0xff]
  %v2667 = vld [vmem:[%s10 + $0x1e0] sm:$0xff]
  %v2668 = vld [vmem:[%s10 + $0x1e8] sm:$0xff]
  %v2669 = vld [vmem:[%s10 + $0x1f0] sm:$0xff]
  %v2670 = vld [vmem:[%s10 + $0x1f8] sm:$0xff]
  %v2671 = vld [vmem:[%s11] sm:$0xf]
  %v2673 = vperm.slane %v2671, 0
  %v2674 = vperm.slane %v2671, 1
  %v2675 = vperm.slane %v2671, 2
  %v2676 = vperm.slane %v2671, 3
  %v2745 = vunpack.c.l.b16 %v2607
  %v2746 = vunpack.c.h.b16 %v2607
  %v2747 = vunpack.c.l.b16 %v2608
  %v2748 = vunpack.c.h.b16 %v2608
  %v2749 = vunpack.c.l.b16 %v2609
  %v2750 = vunpack.c.h.b16 %v2609
  %v2751 = vunpack.c.l.b16 %v2610
  %v2752 = vunpack.c.h.b16 %v2610
  %v2753 = vunpack.c.l.b16 %v2611
  %v2754 = vunpack.c.h.b16 %v2611
  %v2755 = vunpack.c.l.b16 %v2612
  %v2756 = vunpack.c.h.b16 %v2612
  %v2757 = vunpack.c.l.b16 %v2613
  %v2758 = vunpack.c.h.b16 %v2613
  %v2759 = vunpack.c.l.b16 %v2614
  %v2760 = vunpack.c.h.b16 %v2614
  %v2761 = vunpack.c.l.b16 %v2615
  %v2762 = vunpack.c.h.b16 %v2615
  %v2763 = vunpack.c.l.b16 %v2616
  %v2764 = vunpack.c.h.b16 %v2616
  %v2765 = vunpack.c.l.b16 %v2617
  %v2766 = vunpack.c.h.b16 %v2617
  %v2767 = vunpack.c.l.b16 %v2618
  %v2768 = vunpack.c.h.b16 %v2618
  %v2769 = vunpack.c.l.b16 %v2619
  %v2770 = vunpack.c.h.b16 %v2619
  %v2771 = vunpack.c.l.b16 %v2620
  %v2772 = vunpack.c.h.b16 %v2620
  %v2773 = vunpack.c.l.b16 %v2621
  %v2774 = vunpack.c.h.b16 %v2621
  %v2775 = vunpack.c.l.b16 %v2622
  %v2776 = vunpack.c.h.b16 %v2622
  %v2777 = vunpack.c.l.b16 %v2623
  %v2778 = vunpack.c.h.b16 %v2623
  %v2779 = vunpack.c.l.b16 %v2624
  %v2780 = vunpack.c.h.b16 %v2624
  %v2781 = vunpack.c.l.b16 %v2625
  %v2782 = vunpack.c.h.b16 %v2625
  %v2783 = vunpack.c.l.b16 %v2626
  %v2784 = vunpack.c.h.b16 %v2626
  %v2785 = vunpack.c.l.b16 %v2627
  %v2786 = vunpack.c.h.b16 %v2627
  %v2787 = vunpack.c.l.b16 %v2628
  %v2788 = vunpack.c.h.b16 %v2628
  %v2789 = vunpack.c.l.b16 %v2629
  %v2790 = vunpack.c.h.b16 %v2629
  %v2791 = vunpack.c.l.b16 %v2630
  %v2792 = vunpack.c.h.b16 %v2630
  %v2793 = vunpack.c.l.b16 %v2631
  %v2794 = vunpack.c.h.b16 %v2631
  %v2795 = vunpack.c.l.b16 %v2632
  %v2796 = vunpack.c.h.b16 %v2632
  %v2797 = vunpack.c.l.b16 %v2633
  %v2798 = vunpack.c.h.b16 %v2633
  %v2799 = vunpack.c.l.b16 %v2634
  %v2800 = vunpack.c.h.b16 %v2634
  %v2801 = vunpack.c.l.b16 %v2635
  %v2802 = vunpack.c.h.b16 %v2635
  %v2803 = vunpack.c.l.b16 %v2636
  %v2804 = vunpack.c.h.b16 %v2636
  %v2805 = vunpack.c.l.b16 %v2637
  %v2806 = vunpack.c.h.b16 %v2637
  %v2807 = vunpack.c.l.b16 %v2638
  %v2808 = vunpack.c.h.b16 %v2638
  %v2809 = vunpack.c.l.b16 %v2639
  %v2810 = vunpack.c.h.b16 %v2639
  %v2811 = vunpack.c.l.b16 %v2640
  %v2812 = vunpack.c.h.b16 %v2640
  %v2813 = vunpack.c.l.b16 %v2641
  %v2814 = vunpack.c.h.b16 %v2641
  %v2815 = vunpack.c.l.b16 %v2642
  %v2816 = vunpack.c.h.b16 %v2642
  %v2817 = vunpack.c.l.b16 %v2643
  %v2818 = vunpack.c.h.b16 %v2643
  %v2819 = vunpack.c.l.b16 %v2644
  %v2820 = vunpack.c.h.b16 %v2644
  %v2821 = vunpack.c.l.b16 %v2645
  %v2822 = vunpack.c.h.b16 %v2645
  %v2823 = vunpack.c.l.b16 %v2646
  %v2824 = vunpack.c.h.b16 %v2646
  %v2825 = vunpack.c.l.b16 %v2647
  %v2826 = vunpack.c.h.b16 %v2647
  %v2827 = vunpack.c.l.b16 %v2648
  %v2828 = vunpack.c.h.b16 %v2648
  %v2829 = vunpack.c.l.b16 %v2649
  %v2830 = vunpack.c.h.b16 %v2649
  %v2831 = vunpack.c.l.b16 %v2650
  %v2832 = vunpack.c.h.b16 %v2650
  %v2833 = vunpack.c.l.b16 %v2651
  %v2834 = vunpack.c.h.b16 %v2651
  %v2835 = vunpack.c.l.b16 %v2652
  %v2836 = vunpack.c.h.b16 %v2652
  %v2837 = vunpack.c.l.b16 %v2653
  %v2838 = vunpack.c.h.b16 %v2653
  %v2839 = vunpack.c.l.b16 %v2654
  %v2840 = vunpack.c.h.b16 %v2654
  %v2841 = vunpack.c.l.b16 %v2655
  %v2842 = vunpack.c.h.b16 %v2655
  %v2843 = vunpack.c.l.b16 %v2656
  %v2844 = vunpack.c.h.b16 %v2656
  %v2845 = vunpack.c.l.b16 %v2657
  %v2846 = vunpack.c.h.b16 %v2657
  %v2847 = vunpack.c.l.b16 %v2658
  %v2848 = vunpack.c.h.b16 %v2658
  %v2849 = vunpack.c.l.b16 %v2659
  %v2850 = vunpack.c.h.b16 %v2659
  %v2851 = vunpack.c.l.b16 %v2660
  %v2852 = vunpack.c.h.b16 %v2660
  %v2853 = vunpack.c.l.b16 %v2661
  %v2854 = vunpack.c.h.b16 %v2661
  %v2855 = vunpack.c.l.b16 %v2662
  %v2856 = vunpack.c.h.b16 %v2662
  %v2857 = vunpack.c.l.b16 %v2663
  %v2858 = vunpack.c.h.b16 %v2663
  %v2859 = vunpack.c.l.b16 %v2664
  %v2860 = vunpack.c.h.b16 %v2664
  %v2861 = vunpack.c.l.b16 %v2665
  %v2862 = vunpack.c.h.b16 %v2665
  %v2863 = vunpack.c.l.b16 %v2666
  %v2864 = vunpack.c.h.b16 %v2666
  %v2865 = vunpack.c.l.b16 %v2667
  %v2866 = vunpack.c.h.b16 %v2667
  %v2867 = vunpack.c.l.b16 %v2668
  %v2868 = vunpack.c.h.b16 %v2668
  %v2869 = vunpack.c.l.b16 %v2669
  %v2870 = vunpack.c.h.b16 %v2669
  %v2871 = vunpack.c.l.b16 %v2670
  %v2872 = vunpack.c.h.b16 %v2670
  %v2873 = vpack.c.b16 %v2749, %v2745
  %v2874 = vpack.c.b16 %v2750, %v2746
  %v2875 = vpack.c.b16 %v2751, %v2747
  %v2876 = vpack.c.b16 %v2752, %v2748
  %v2877 = vpack.c.b16 %v2757, %v2753
  %v2878 = vpack.c.b16 %v2758, %v2754
  %v2879 = vpack.c.b16 %v2759, %v2755
  %v2880 = vpack.c.b16 %v2760, %v2756
  %v2881 = vpack.c.b16 %v2765, %v2761
  %v2882 = vpack.c.b16 %v2766, %v2762
  %v2883 = vpack.c.b16 %v2767, %v2763
  %v2884 = vpack.c.b16 %v2768, %v2764
  %v2885 = vpack.c.b16 %v2773, %v2769
  %v2886 = vpack.c.b16 %v2774, %v2770
  %v2887 = vpack.c.b16 %v2775, %v2771
  %v2888 = vpack.c.b16 %v2776, %v2772
  %v2889 = vpack.c.b16 %v2781, %v2777
  %v2890 = vpack.c.b16 %v2782, %v2778
  %v2891 = vpack.c.b16 %v2783, %v2779
  %v2892 = vpack.c.b16 %v2784, %v2780
  %v2893 = vpack.c.b16 %v2789, %v2785
  %v2894 = vpack.c.b16 %v2790, %v2786
  %v2895 = vpack.c.b16 %v2791, %v2787
  %v2896 = vpack.c.b16 %v2792, %v2788
  %v2897 = vpack.c.b16 %v2797, %v2793
  %v2898 = vpack.c.b16 %v2798, %v2794
  %v2899 = vpack.c.b16 %v2799, %v2795
  %v2900 = vpack.c.b16 %v2800, %v2796
  %v2901 = vpack.c.b16 %v2805, %v2801
  %v2902 = vpack.c.b16 %v2806, %v2802
  %v2903 = vpack.c.b16 %v2807, %v2803
  %v2904 = vpack.c.b16 %v2808, %v2804
  %v2905 = vpack.c.b16 %v2813, %v2809
  %v2906 = vpack.c.b16 %v2814, %v2810
  %v2907 = vpack.c.b16 %v2815, %v2811
  %v2908 = vpack.c.b16 %v2816, %v2812
  %v2909 = vpack.c.b16 %v2821, %v2817
  %v2910 = vpack.c.b16 %v2822, %v2818
  %v2911 = vpack.c.b16 %v2823, %v2819
  %v2912 = vpack.c.b16 %v2824, %v2820
  %v2913 = vpack.c.b16 %v2829, %v2825
  %v2914 = vpack.c.b16 %v2830, %v2826
  %v2915 = vpack.c.b16 %v2831, %v2827
  %v2916 = vpack.c.b16 %v2832, %v2828
  %v2917 = vpack.c.b16 %v2837, %v2833
  %v2918 = vpack.c.b16 %v2838, %v2834
  %v2919 = vpack.c.b16 %v2839, %v2835
  %v2920 = vpack.c.b16 %v2840, %v2836
  %v2921 = vpack.c.b16 %v2845, %v2841
  %v2922 = vpack.c.b16 %v2846, %v2842
  %v2923 = vpack.c.b16 %v2847, %v2843
  %v2924 = vpack.c.b16 %v2848, %v2844
  %v2925 = vpack.c.b16 %v2853, %v2849
  %v2926 = vpack.c.b16 %v2854, %v2850
  %v2927 = vpack.c.b16 %v2855, %v2851
  %v2928 = vpack.c.b16 %v2856, %v2852
  %v2929 = vpack.c.b16 %v2861, %v2857
  %v2930 = vpack.c.b16 %v2862, %v2858
  %v2931 = vpack.c.b16 %v2863, %v2859
  %v2932 = vpack.c.b16 %v2864, %v2860
  %v2933 = vpack.c.b16 %v2869, %v2865
  %v2934 = vpack.c.b16 %v2870, %v2866
  %v2935 = vpack.c.b16 %v2871, %v2867
  %v2936 = vpack.c.b16 %v2872, %v2868
  %3001 = vmatpush.bf16.msra.mxu0 %v2901
  %3002 = vmatpush.bf16.msra.mxu0 %v2897
  %3003 = vmatpush.bf16.msra.mxu0 %v2893
  %3004 = vmatpush.bf16.msra.mxu0 %v2889
  %3005 = vmatpush.bf16.msra.mxu0 %v2885
  %3006 = vmatpush.bf16.msra.mxu0 %v2881
  %3007 = vmatpush.bf16.msra.mxu0 %v2877
  %3008 = vmatpush.bf16.msra.mxu0 %v2873
  %3009 = vmatmul.bf16.gmra.mxu0 %v2605
  %v3010 = vpop.f32.mrf.mxu0
  %v3011 = vadd.f32 %v2673, %v3010
  %v3012 = vpop.f32.mrf.mxu0
  %v3013 = vadd.f32 %v2673, %v3012
  %3014 = vdwg.mxu0
  %3015 = vmatpush.bf16.msra.mxu0 %v2933
  %3016 = vmatpush.bf16.msra.mxu0 %v2929
  %3017 = vmatpush.bf16.msra.mxu0 %v2925
  %3018 = vmatpush.bf16.msra.mxu0 %v2921
  %3019 = vmatpush.bf16.msra.mxu0 %v2917
  %3020 = vmatpush.bf16.msra.mxu0 %v2913
  %3021 = vmatpush.bf16.msra.mxu0 %v2909
  %3022 = vmatpush.bf16.msra.mxu0 %v2905
  %3023 = vmatmul.bf16.gmra.mxu0 %v2606
  %v3024 = vpop.f32.mrf.mxu0
  %v3025 = vadd.f32 %v3011, %v3024
  %v3026 = vpop.f32.mrf.mxu0
  %v3027 = vadd.f32 %v3013, %v3026
  %3028 = vdwg.mxu0
  %3029 = vmatpush.bf16.msra.mxu0 %v2902
  %3030 = vmatpush.bf16.msra.mxu0 %v2898
  %3031 = vmatpush.bf16.msra.mxu0 %v2894
  %3032 = vmatpush.bf16.msra.mxu0 %v2890
  %3033 = vmatpush.bf16.msra.mxu0 %v2886
  %3034 = vmatpush.bf16.msra.mxu0 %v2882
  %3035 = vmatpush.bf16.msra.mxu0 %v2878
  %3036 = vmatpush.bf16.msra.mxu0 %v2874
  %3037 = vmatmul.bf16.gmra.mxu0 %v2605
  %v3038 = vpop.f32.mrf.mxu0
  %v3039 = vadd.f32 %v2674, %v3038
  %v3040 = vpop.f32.mrf.mxu0
  %v3041 = vadd.f32 %v2674, %v3040
  %3042 = vdwg.mxu0
  %3043 = vmatpush.bf16.msra.mxu0 %v2934
  %3044 = vmatpush.bf16.msra.mxu0 %v2930
  %3045 = vmatpush.bf16.msra.mxu0 %v2926
  %3046 = vmatpush.bf16.msra.mxu0 %v2922
  %3047 = vmatpush.bf16.msra.mxu0 %v2918
  %3048 = vmatpush.bf16.msra.mxu0 %v2914
  %3049 = vmatpush.bf16.msra.mxu0 %v2910
  %3050 = vmatpush.bf16.msra.mxu0 %v2906
  %3051 = vmatmul.bf16.gmra.mxu0 %v2606
  %v3052 = vpop.f32.mrf.mxu0
  %v3053 = vadd.f32 %v3039, %v3052
  %v3054 = vpop.f32.mrf.mxu0
  %v3055 = vadd.f32 %v3041, %v3054
  %3056 = vdwg.mxu0
  %3057 = vmatpush.bf16.msra.mxu0 %v2903
  %3058 = vmatpush.bf16.msra.mxu0 %v2899
  %3059 = vmatpush.bf16.msra.mxu0 %v2895
  %3060 = vmatpush.bf16.msra.mxu0 %v2891
  %3061 = vmatpush.bf16.msra.mxu0 %v2887
  %3062 = vmatpush.bf16.msra.mxu0 %v2883
  %3063 = vmatpush.bf16.msra.mxu0 %v2879
  %3064 = vmatpush.bf16.msra.mxu0 %v2875
  %3065 = vmatmul.bf16.gmra.mxu0 %v2605
  %v3066 = vpop.f32.mrf.mxu0
  %v3067 = vadd.f32 %v2675, %v3066
  %v3068 = vpop.f32.mrf.mxu0
  %v3069 = vadd.f32 %v2675, %v3068
  %3070 = vdwg.mxu0
  %3071 = vmatpush.bf16.msra.mxu0 %v2935
  %3072 = vmatpush.bf16.msra.mxu0 %v2931
  %3073 = vmatpush.bf16.msra.mxu0 %v2927
  %3074 = vmatpush.bf16.msra.mxu0 %v2923
  %3075 = vmatpush.bf16.msra.mxu0 %v2919
  %3076 = vmatpush.bf16.msra.mxu0 %v2915
  %3077 = vmatpush.bf16.msra.mxu0 %v2911
  %3078 = vmatpush.bf16.msra.mxu0 %v2907
  %3079 = vmatmul.bf16.gmra.mxu0 %v2606
  %v3080 = vpop.f32.mrf.mxu0
  %v3081 = vadd.f32 %v3067, %v3080
  %v3082 = vpop.f32.mrf.mxu0
  %v3083 = vadd.f32 %v3069, %v3082
  %3084 = vdwg.mxu0
  %3085 = vmatpush.bf16.msra.mxu0 %v2904
  %3086 = vmatpush.bf16.msra.mxu0 %v2900
  %3087 = vmatpush.bf16.msra.mxu0 %v2896
  %3088 = vmatpush.bf16.msra.mxu0 %v2892
  %3089 = vmatpush.bf16.msra.mxu0 %v2888
  %3090 = vmatpush.bf16.msra.mxu0 %v2884
  %3091 = vmatpush.bf16.msra.mxu0 %v2880
  %3092 = vmatpush.bf16.msra.mxu0 %v2876
  %3093 = vmatmul.bf16.gmra.mxu0 %v2605
  %v3094 = vpop.f32.mrf.mxu0
  %v3095 = vadd.f32 %v2676, %v3094
  %v3096 = vpop.f32.mrf.mxu0
  %v3097 = vadd.f32 %v2676, %v3096
  %3098 = vdwg.mxu0
  %3099 = vmatpush.bf16.msra.mxu0 %v2936
  %3100 = vmatpush.bf16.msra.mxu0 %v2932
  %3101 = vmatpush.bf16.msra.mxu0 %v2928
  %3102 = vmatpush.bf16.msra.mxu0 %v2924
  %3103 = vmatpush.bf16.msra.mxu0 %v2920
  %3104 = vmatpush.bf16.msra.mxu0 %v2916
  %3105 = vmatpush.bf16.msra.mxu0 %v2912
  %3106 = vmatpush.bf16.msra.mxu0 %v2908
  %3107 = vmatmul.bf16.gmra.mxu0 %v2606
  %v3108 = vpop.f32.mrf.mxu0
  %v3109 = vadd.f32 %v3095, %v3108
  %v3110 = vpop.f32.mrf.mxu0
  %v3111 = vadd.f32 %v3097, %v3110
  %3112 = vdwg.mxu0
  %v3113 = vmax.f32 %v3025, 0.0
  %v3114 = vmax.f32 %v3053, 0.0
  %v3115 = vmax.f32 %v3081, 0.0
  %v3116 = vmax.f32 %v3109, 0.0
  %v3117 = vmax.f32 %v3027, 0.0
  %v3118 = vmax.f32 %v3055, 0.0
  %v3119 = vmax.f32 %v3083, 0.0
  %v3120 = vmax.f32 %v3111, 0.0
  %v3121 = vpack.c.bf16 %v3117, %v3113
  %v3122 = vpack.c.bf16 %v3118, %v3114
  %v3123 = vpack.c.bf16 %v3119, %v3115
  %v3124 = vpack.c.bf16 %v3120, %v3116
  %v3125 = vld [vmem:[%s12] sm:$0xff]
  %v3126 = vld [vmem:[%s12 + $0x8] sm:$0xff]
  %v3127 = vld [vmem:[%s12 + $0x10] sm:$0xff]
  %v3128 = vld [vmem:[%s12 + $0x18] sm:$0xf]
  %v3129 = vld [vmem:[%s12 + $0x1c] sm:$0xff]
  %v3130 = vld [vmem:[%s12 + $0x24] sm:$0xff]
  %v3131 = vld [vmem:[%s12 + $0x2c] sm:$0xff]
  %v3132 = vld [vmem:[%s12 + $0x34] sm:$0xf]
  %v3133 = vld [vmem:[%s12 + $0x38] sm:$0xff]
  %v3134 = vld [vmem:[%s12 + $0x40] sm:$0xff]
  %v3135 = vld [vmem:[%s12 + $0x48] sm:$0xff]
  %v3136 = vld [vmem:[%s12 + $0x50] sm:$0xf]
  %v3137 = vld [vmem:[%s12 + $0x54] sm:$0xff]
  %v3138 = vld [vmem:[%s12 + $0x5c] sm:$0xff]
  %v3139 = vld [vmem:[%s12 + $0x64] sm:$0xff]
  %v3140 = vld [vmem:[%s12 + $0x6c] sm:$0xf]
  %v3141 = vld [vmem:[%s12 + $0x70] sm:$0xff]
  %v3142 = vld [vmem:[%s12 + $0x78] sm:$0xff]
  %v3143 = vld [vmem:[%s12 + $0x80] sm:$0xff]
  %v3144 = vld [vmem:[%s12 + $0x88] sm:$0xf]
  %v3145 = vld [vmem:[%s12 + $0x8c] sm:$0xff]
  %v3146 = vld [vmem:[%s12 + $0x94] sm:$0xff]
  %v3147 = vld [vmem:[%s12 + $0x9c] sm:$0xff]
  %v3148 = vld [vmem:[%s12 + $0xa4] sm:$0xf]
  %v3149 = vld [vmem:[%s12 + $0xa8] sm:$0xff]
  %v3150 = vld [vmem:[%s12 + $0xb0] sm:$0xff]
  %v3151 = vld [vmem:[%s12 + $0xb8] sm:$0xff]
  %v3152 = vld [vmem:[%s12 + $0xc0] sm:$0xf]
  %v3153 = vld [vmem:[%s12 + $0xc4] sm:$0xff]
  %v3154 = vld [vmem:[%s12 + $0xcc] sm:$0xff]
  %v3155 = vld [vmem:[%s12 + $0xd4] sm:$0xff]
  %v3156 = vld [vmem:[%s12 + $0xdc] sm:$0xf]
  %v3157 = vld [vmem:[%s12 + $0xe0] sm:$0xff]
  %v3158 = vld [vmem:[%s12 + $0xe8] sm:$0xff]
  %v3159 = vld [vmem:[%s12 + $0xf0] sm:$0xff]
  %v3160 = vld [vmem:[%s12 + $0xf8] sm:$0xf]
  %v3161 = vld [vmem:[%s12 + $0xfc] sm:$0xff]
  %v3162 = vld [vmem:[%s12 + $0x104] sm:$0xff]
  %v3163 = vld [vmem:[%s12 + $0x10c] sm:$0xff]
  %v3164 = vld [vmem:[%s12 + $0x114] sm:$0xf]
  %v3165 = vld [vmem:[%s12 + $0x118] sm:$0xff]
  %v3166 = vld [vmem:[%s12 + $0x120] sm:$0xff]
  %v3167 = vld [vmem:[%s12 + $0x128] sm:$0xff]
  %v3168 = vld [vmem:[%s12 + $0x130] sm:$0xf]
  %v3169 = vld [vmem:[%s12 + $0x134] sm:$0xff]
  %v3170 = vld [vmem:[%s12 + $0x13c] sm:$0xff]
  %v3171 = vld [vmem:[%s12 + $0x144] sm:$0xff]
  %v3172 = vld [vmem:[%s12 + $0x14c] sm:$0xf]
  %v3173 = vld [vmem:[%s12 + $0x150] sm:$0xff]
  %v3174 = vld [vmem:[%s12 + $0x158] sm:$0xff]
  %v3175 = vld [vmem:[%s12 + $0x160] sm:$0xff]
  %v3176 = vld [vmem:[%s12 + $0x168] sm:$0xf]
  %v3177 = vld [vmem:[%s12 + $0x16c] sm:$0xff]
  %v3178 = vld [vmem:[%s12 + $0x174] sm:$0xff]
  %v3179 = vld [vmem:[%s12 + $0x17c] sm:$0xff]
  %v3180 = vld [vmem:[%s12 + $0x184] sm:$0xf]
  %v3181 = vld [vmem:[%s12 + $0x188] sm:$0xff]
  %v3182 = vld [vmem:[%s12 + $0x190] sm:$0xff]
  %v3183 = vld [vmem:[%s12 + $0x198] sm:$0xff]
  %v3184 = vld [vmem:[%s12 + $0x1a0] sm:$0xf]
  %v3185 = vld [vmem:[%s12 + $0x1a4] sm:$0xff]
  %v3186 = vld [vmem:[%s12 + $0x1ac] sm:$0xff]
  %v3187 = vld [vmem:[%s12 + $0x1b4] sm:$0xff]
  %v3188 = vld [vmem:[%s12 + $0x1bc] sm:$0xf]
  %v3189 = vld [vmem:[%s12 + $0x1c0] sm:$0xff]
  %v3190 = vld [vmem:[%s12 + $0x1c8] sm:$0xff]
  %v3191 = vld [vmem:[%s12 + $0x1d0] sm:$0xff]
  %v3192 = vld [vmem:[%s12 + $0x1d8] sm:$0xf]
  %v3193 = vld [vmem:[%s12 + $0x1dc] sm:$0xff]
  %v3194 = vld [vmem:[%s12 + $0x1e4] sm:$0xff]
  %v3195 = vld [vmem:[%s12 + $0x1ec] sm:$0xff]
  %v3196 = vld [vmem:[%s12 + $0x1f4] sm:$0xf]
  %v3197 = vld [vmem:[%s12 + $0x1f8] sm:$0xff]
  %v3198 = vld [vmem:[%s12 + $0x200] sm:$0xff]
  %v3199 = vld [vmem:[%s12 + $0x208] sm:$0xff]
  %v3200 = vld [vmem:[%s12 + $0x210] sm:$0xf]
  %v3201 = vld [vmem:[%s12 + $0x214] sm:$0xff]
  %v3202 = vld [vmem:[%s12 + $0x21c] sm:$0xff]
  %v3203 = vld [vmem:[%s12 + $0x224] sm:$0xff]
  %v3204 = vld [vmem:[%s12 + $0x22c] sm:$0xf]
  %v3205 = vld [vmem:[%s12 + $0x230] sm:$0xff]
  %v3206 = vld [vmem:[%s12 + $0x238] sm:$0xff]
  %v3207 = vld [vmem:[%s12 + $0x240] sm:$0xff]
  %v3208 = vld [vmem:[%s12 + $0x248] sm:$0xf]
  %v3209 = vld [vmem:[%s12 + $0x24c] sm:$0xff]
  %v3210 = vld [vmem:[%s12 + $0x254] sm:$0xff]
  %v3211 = vld [vmem:[%s12 + $0x25c] sm:$0xff]
  %v3212 = vld [vmem:[%s12 + $0x264] sm:$0xf]
  %v3213 = vld [vmem:[%s12 + $0x268] sm:$0xff]
  %v3214 = vld [vmem:[%s12 + $0x270] sm:$0xff]
  %v3215 = vld [vmem:[%s12 + $0x278] sm:$0xff]
  %v3216 = vld [vmem:[%s12 + $0x280] sm:$0xf]
  %v3217 = vld [vmem:[%s12 + $0x284] sm:$0xff]
  %v3218 = vld [vmem:[%s12 + $0x28c] sm:$0xff]
  %v3219 = vld [vmem:[%s12 + $0x294] sm:$0xff]
  %v3220 = vld [vmem:[%s12 + $0x29c] sm:$0xf]
  %v3221 = vld [vmem:[%s12 + $0x2a0] sm:$0xff]
  %v3222 = vld [vmem:[%s12 + $0x2a8] sm:$0xff]
  %v3223 = vld [vmem:[%s12 + $0x2b0] sm:$0xff]
  %v3224 = vld [vmem:[%s12 + $0x2b8] sm:$0xf]
  %v3225 = vld [vmem:[%s12 + $0x2bc] sm:$0xff]
  %v3226 = vld [vmem:[%s12 + $0x2c4] sm:$0xff]
  %v3227 = vld [vmem:[%s12 + $0x2cc] sm:$0xff]
  %v3228 = vld [vmem:[%s12 + $0x2d4] sm:$0xf]
  %v3229 = vld [vmem:[%s12 + $0x2d8] sm:$0xff]
  %v3230 = vld [vmem:[%s12 + $0x2e0] sm:$0xff]
  %v3231 = vld [vmem:[%s12 + $0x2e8] sm:$0xff]
  %v3232 = vld [vmem:[%s12 + $0x2f0] sm:$0xf]
  %v3233 = vld [vmem:[%s12 + $0x2f4] sm:$0xff]
  %v3234 = vld [vmem:[%s12 + $0x2fc] sm:$0xff]
  %v3235 = vld [vmem:[%s12 + $0x304] sm:$0xff]
  %v3236 = vld [vmem:[%s12 + $0x30c] sm:$0xf]
  %v3237 = vld [vmem:[%s12 + $0x310] sm:$0xff]
  %v3238 = vld [vmem:[%s12 + $0x318] sm:$0xff]
  %v3239 = vld [vmem:[%s12 + $0x320] sm:$0xff]
  %v3240 = vld [vmem:[%s12 + $0x328] sm:$0xf]
  %v3241 = vld [vmem:[%s12 + $0x32c] sm:$0xff]
  %v3242 = vld [vmem:[%s12 + $0x334] sm:$0xff]
  %v3243 = vld [vmem:[%s12 + $0x33c] sm:$0xff]
  %v3244 = vld [vmem:[%s12 + $0x344] sm:$0xf]
  %v3245 = vld [vmem:[%s12 + $0x348] sm:$0xff]
  %v3246 = vld [vmem:[%s12 + $0x350] sm:$0xff]
  %v3247 = vld [vmem:[%s12 + $0x358] sm:$0xff]
  %v3248 = vld [vmem:[%s12 + $0x360] sm:$0xf]
  %v3249 = vld [vmem:[%s12 + $0x364] sm:$0xff]
  %v3250 = vld [vmem:[%s12 + $0x36c] sm:$0xff]
  %v3251 = vld [vmem:[%s12 + $0x374] sm:$0xff]
  %v3252 = vld [vmem:[%s12 + $0x37c] sm:$0xf]
  %v3253 = vld [vmem:[%s12 + $0x380] sm:$0xff]
  %v3254 = vld [vmem:[%s12 + $0x388] sm:$0xff]
  %v3255 = vld [vmem:[%s12 + $0x390] sm:$0xff]
  %v3256 = vld [vmem:[%s12 + $0x398] sm:$0xf]
  %v3257 = vld [vmem:[%s12 + $0x39c] sm:$0xff]
  %v3258 = vld [vmem:[%s12 + $0x3a4] sm:$0xff]
  %v3259 = vld [vmem:[%s12 + $0x3ac] sm:$0xff]
  %v3260 = vld [vmem:[%s12 + $0x3b4] sm:$0xf]
  %v3261 = vld [vmem:[%s12 + $0x3b8] sm:$0xff]
  %v3262 = vld [vmem:[%s12 + $0x3c0] sm:$0xff]
  %v3263 = vld [vmem:[%s12 + $0x3c8] sm:$0xff]
  %v3264 = vld [vmem:[%s12 + $0x3d0] sm:$0xf]
  %v3265 = vld [vmem:[%s12 + $0x3d4] sm:$0xff]
  %v3266 = vld [vmem:[%s12 + $0x3dc] sm:$0xff]
  %v3267 = vld [vmem:[%s12 + $0x3e4] sm:$0xff]
  %v3268 = vld [vmem:[%s12 + $0x3ec] sm:$0xf]
  %v3269 = vld [vmem:[%s12 + $0x3f0] sm:$0xff]
  %v3270 = vld [vmem:[%s12 + $0x3f8] sm:$0xff]
  %v3271 = vld [vmem:[%s12 + $0x400] sm:$0xff]
  %v3272 = vld [vmem:[%s12 + $0x408] sm:$0xf]
  %v3273 = vld [vmem:[%s12 + $0x40c] sm:$0xff]
  %v3274 = vld [vmem:[%s12 + $0x414] sm:$0xff]
  %v3275 = vld [vmem:[%s12 + $0x41c] sm:$0xff]
  %v3276 = vld [vmem:[%s12 + $0x424] sm:$0xf]
  %v3277 = vld [vmem:[%s12 + $0x428] sm:$0xff]
  %v3278 = vld [vmem:[%s12 + $0x430] sm:$0xff]
  %v3279 = vld [vmem:[%s12 + $0x438] sm:$0xff]
  %v3280 = vld [vmem:[%s12 + $0x440] sm:$0xf]
  %v3281 = vld [vmem:[%s12 + $0x444] sm:$0xff]
  %v3282 = vld [vmem:[%s12 + $0x44c] sm:$0xff]
  %v3283 = vld [vmem:[%s12 + $0x454] sm:$0xff]
  %v3284 = vld [vmem:[%s12 + $0x45c] sm:$0xf]
  %v3285 = vld [vmem:[%s12 + $0x460] sm:$0xff]
  %v3286 = vld [vmem:[%s12 + $0x468] sm:$0xff]
  %v3287 = vld [vmem:[%s12 + $0x470] sm:$0xff]
  %v3288 = vld [vmem:[%s12 + $0x478] sm:$0xf]
  %v3289 = vld [vmem:[%s12 + $0x47c] sm:$0xff]
  %v3290 = vld [vmem:[%s12 + $0x484] sm:$0xff]
  %v3291 = vld [vmem:[%s12 + $0x48c] sm:$0xff]
  %v3292 = vld [vmem:[%s12 + $0x494] sm:$0xf]
  %v3293 = vld [vmem:[%s12 + $0x498] sm:$0xff]
  %v3294 = vld [vmem:[%s12 + $0x4a0] sm:$0xff]
  %v3295 = vld [vmem:[%s12 + $0x4a8] sm:$0xff]
  %v3296 = vld [vmem:[%s12 + $0x4b0] sm:$0xf]
  %v3297 = vld [vmem:[%s12 + $0x4b4] sm:$0xff]
  %v3298 = vld [vmem:[%s12 + $0x4bc] sm:$0xff]
  %v3299 = vld [vmem:[%s12 + $0x4c4] sm:$0xff]
  %v3300 = vld [vmem:[%s12 + $0x4cc] sm:$0xf]
  %v3301 = vld [vmem:[%s12 + $0x4d0] sm:$0xff]
  %v3302 = vld [vmem:[%s12 + $0x4d8] sm:$0xff]
  %v3303 = vld [vmem:[%s12 + $0x4e0] sm:$0xff]
  %v3304 = vld [vmem:[%s12 + $0x4e8] sm:$0xf]
  %v3305 = vld [vmem:[%s12 + $0x4ec] sm:$0xff]
  %v3306 = vld [vmem:[%s12 + $0x4f4] sm:$0xff]
  %v3307 = vld [vmem:[%s12 + $0x4fc] sm:$0xff]
  %v3308 = vld [vmem:[%s12 + $0x504] sm:$0xf]
  %v3309 = vld [vmem:[%s12 + $0x508] sm:$0xff]
  %v3310 = vld [vmem:[%s12 + $0x510] sm:$0xff]
  %v3311 = vld [vmem:[%s12 + $0x518] sm:$0xff]
  %v3312 = vld [vmem:[%s12 + $0x520] sm:$0xf]
  %v3313 = vld [vmem:[%s12 + $0x524] sm:$0xff]
  %v3314 = vld [vmem:[%s12 + $0x52c] sm:$0xff]
  %v3315 = vld [vmem:[%s12 + $0x534] sm:$0xff]
  %v3316 = vld [vmem:[%s12 + $0x53c] sm:$0xf]
  %v3317 = vld [vmem:[%s12 + $0x540] sm:$0xff]
  %v3318 = vld [vmem:[%s12 + $0x548] sm:$0xff]
  %v3319 = vld [vmem:[%s12 + $0x550] sm:$0xff]
  %v3320 = vld [vmem:[%s12 + $0x558] sm:$0xf]
  %v3321 = vld [vmem:[%s12 + $0x55c] sm:$0xff]
  %v3322 = vld [vmem:[%s12 + $0x564] sm:$0xff]
  %v3323 = vld [vmem:[%s12 + $0x56c] sm:$0xff]
  %v3324 = vld [vmem:[%s12 + $0x574] sm:$0xf]
  %v3325 = vld [vmem:[%s12 + $0x578] sm:$0xff]
  %v3326 = vld [vmem:[%s12 + $0x580] sm:$0xff]
  %v3327 = vld [vmem:[%s12 + $0x588] sm:$0xff]
  %v3328 = vld [vmem:[%s12 + $0x590] sm:$0xf]
  %v3329 = vld [vmem:[%s12 + $0x594] sm:$0xff]
  %v3330 = vld [vmem:[%s12 + $0x59c] sm:$0xff]
  %v3331 = vld [vmem:[%s12 + $0x5a4] sm:$0xff]
  %v3332 = vld [vmem:[%s12 + $0x5ac] sm:$0xf]
  %v3333 = vld [vmem:[%s12 + $0x5b0] sm:$0xff]
  %v3334 = vld [vmem:[%s12 + $0x5b8] sm:$0xff]
  %v3335 = vld [vmem:[%s12 + $0x5c0] sm:$0xff]
  %v3336 = vld [vmem:[%s12 + $0x5c8] sm:$0xf]
  %v3337 = vld [vmem:[%s12 + $0x5cc] sm:$0xff]
  %v3338 = vld [vmem:[%s12 + $0x5d4] sm:$0xff]
  %v3339 = vld [vmem:[%s12 + $0x5dc] sm:$0xff]
  %v3340 = vld [vmem:[%s12 + $0x5e4] sm:$0xf]
  %v3341 = vld [vmem:[%s12 + $0x5e8] sm:$0xff]
  %v3342 = vld [vmem:[%s12 + $0x5f0] sm:$0xff]
  %v3343 = vld [vmem:[%s12 + $0x5f8] sm:$0xff]
  %v3344 = vld [vmem:[%s12 + $0x600] sm:$0xf]
  %v3345 = vld [vmem:[%s12 + $0x604] sm:$0xff]
  %v3346 = vld [vmem:[%s12 + $0x60c] sm:$0xff]
  %v3347 = vld [vmem:[%s12 + $0x614] sm:$0xff]
  %v3348 = vld [vmem:[%s12 + $0x61c] sm:$0xf]
  %v3349 = vld [vmem:[%s12 + $0x620] sm:$0xff]
  %v3350 = vld [vmem:[%s12 + $0x628] sm:$0xff]
  %v3351 = vld [vmem:[%s12 + $0x630] sm:$0xff]
  %v3352 = vld [vmem:[%s12 + $0x638] sm:$0xf]
  %v3353 = vld [vmem:[%s12 + $0x63c] sm:$0xff]
  %v3354 = vld [vmem:[%s12 + $0x644] sm:$0xff]
  %v3355 = vld [vmem:[%s12 + $0x64c] sm:$0xff]
  %v3356 = vld [vmem:[%s12 + $0x654] sm:$0xf]
  %v3357 = vld [vmem:[%s12 + $0x658] sm:$0xff]
  %v3358 = vld [vmem:[%s12 + $0x660] sm:$0xff]
  %v3359 = vld [vmem:[%s12 + $0x668] sm:$0xff]
  %v3360 = vld [vmem:[%s12 + $0x670] sm:$0xf]
  %v3361 = vld [vmem:[%s12 + $0x674] sm:$0xff]
  %v3362 = vld [vmem:[%s12 + $0x67c] sm:$0xff]
  %v3363 = vld [vmem:[%s12 + $0x684] sm:$0xff]
  %v3364 = vld [vmem:[%s12 + $0x68c] sm:$0xf]
  %v3365 = vld [vmem:[%s12 + $0x690] sm:$0xff]
  %v3366 = vld [vmem:[%s12 + $0x698] sm:$0xff]
  %v3367 = vld [vmem:[%s12 + $0x6a0] sm:$0xff]
  %v3368 = vld [vmem:[%s12 + $0x6a8] sm:$0xf]
  %v3369 = vld [vmem:[%s12 + $0x6ac] sm:$0xff]
  %v3370 = vld [vmem:[%s12 + $0x6b4] sm:$0xff]
  %v3371 = vld [vmem:[%s12 + $0x6bc] sm:$0xff]
  %v3372 = vld [vmem:[%s12 + $0x6c4] sm:$0xf]
  %v3373 = vld [vmem:[%s12 + $0x6c8] sm:$0xff]
  %v3374 = vld [vmem:[%s12 + $0x6d0] sm:$0xff]
  %v3375 = vld [vmem:[%s12 + $0x6d8] sm:$0xff]
  %v3376 = vld [vmem:[%s12 + $0x6e0] sm:$0xf]
  %v3377 = vld [vmem:[%s12 + $0x6e4] sm:$0xff]
  %v3378 = vld [vmem:[%s12 + $0x6ec] sm:$0xff]
  %v3379 = vld [vmem:[%s12 + $0x6f4] sm:$0xff]
  %v3380 = vld [vmem:[%s12 + $0x6fc] sm:$0xf]
  %v3381 = vld [vmem:[%s13] sm:$0x7f]
  %v3383 = vperm.slane %v3381, 0
  %v3384 = vperm.slane %v3381, 1
  %v3385 = vperm.slane %v3381, 2
  %v3386 = vperm.slane %v3381, 3
  %v3387 = vperm.slane %v3381, 4
  %v3388 = vperm.slane %v3381, 5
  %v3389 = vperm.slane %v3381, 6
  %v3653 = vunpack.c.l.b16 %v3125
  %v3654 = vunpack.c.h.b16 %v3125
  %v3655 = vunpack.c.l.b16 %v3126
  %v3656 = vunpack.c.h.b16 %v3126
  %v3657 = vunpack.c.l.b16 %v3127
  %v3658 = vunpack.c.h.b16 %v3127
  %v3659 = vunpack.c.l.b16 %v3128
  %v3660 = vunpack.c.l.b16 %v3129
  %v3661 = vunpack.c.h.b16 %v3129
  %v3662 = vunpack.c.l.b16 %v3130
  %v3663 = vunpack.c.h.b16 %v3130
  %v3664 = vunpack.c.l.b16 %v3131
  %v3665 = vunpack.c.h.b16 %v3131
  %v3666 = vunpack.c.l.b16 %v3132
  %v3667 = vunpack.c.l.b16 %v3133
  %v3668 = vunpack.c.h.b16 %v3133
  %v3669 = vunpack.c.l.b16 %v3134
  %v3670 = vunpack.c.h.b16 %v3134
  %v3671 = vunpack.c.l.b16 %v3135
  %v3672 = vunpack.c.h.b16 %v3135
  %v3673 = vunpack.c.l.b16 %v3136
  %v3674 = vunpack.c.l.b16 %v3137
  %v3675 = vunpack.c.h.b16 %v3137
  %v3676 = vunpack.c.l.b16 %v3138
  %v3677 = vunpack.c.h.b16 %v3138
  %v3678 = vunpack.c.l.b16 %v3139
  %v3679 = vunpack.c.h.b16 %v3139
  %v3680 = vunpack.c.l.b16 %v3140
  %v3681 = vunpack.c.l.b16 %v3141
  %v3682 = vunpack.c.h.b16 %v3141
  %v3683 = vunpack.c.l.b16 %v3142
  %v3684 = vunpack.c.h.b16 %v3142
  %v3685 = vunpack.c.l.b16 %v3143
  %v3686 = vunpack.c.h.b16 %v3143
  %v3687 = vunpack.c.l.b16 %v3144
  %v3688 = vunpack.c.l.b16 %v3145
  %v3689 = vunpack.c.h.b16 %v3145
  %v3690 = vunpack.c.l.b16 %v3146
  %v3691 = vunpack.c.h.b16 %v3146
  %v3692 = vunpack.c.l.b16 %v3147
  %v3693 = vunpack.c.h.b16 %v3147
  %v3694 = vunpack.c.l.b16 %v3148
  %v3695 = vunpack.c.l.b16 %v3149
  %v3696 = vunpack.c.h.b16 %v3149
  %v3697 = vunpack.c.l.b16 %v3150
  %v3698 = vunpack.c.h.b16 %v3150
  %v3699 = vunpack.c.l.b16 %v3151
  %v3700 = vunpack.c.h.b16 %v3151
  %v3701 = vunpack.c.l.b16 %v3152
  %v3702 = vunpack.c.l.b16 %v3153
  %v3703 = vunpack.c.h.b16 %v3153
  %v3704 = vunpack.c.l.b16 %v3154
  %v3705 = vunpack.c.h.b16 %v3154
  %v3706 = vunpack.c.l.b16 %v3155
  %v3707 = vunpack.c.h.b16 %v3155
  %v3708 = vunpack.c.l.b16 %v3156
  %v3709 = vunpack.c.l.b16 %v3157
  %v3710 = vunpack.c.h.b16 %v3157
  %v3711 = vunpack.c.l.b16 %v3158
  %v3712 = vunpack.c.h.b16 %v3158
  %v3713 = vunpack.c.l.b16 %v3159
  %v3714 = vunpack.c.h.b16 %v3159
  %v3715 = vunpack.c.l.b16 %v3160
  %v3716 = vunpack.c.l.b16 %v3161
  %v3717 = vunpack.c.h.b16 %v3161
  %v3718 = vunpack.c.l.b16 %v3162
  %v3719 = vunpack.c.h.b16 %v3162
  %v3720 = vunpack.c.l.b16 %v3163
  %v3721 = vunpack.c.h.b16 %v3163
  %v3722 = vunpack.c.l.b16 %v3164
  %v3723 = vunpack.c.l.b16 %v3165
  %v3724 = vunpack.c.h.b16 %v3165
  %v3725 = vunpack.c.l.b16 %v3166
  %v3726 = vunpack.c.h.b16 %v3166
  %v3727 = vunpack.c.l.b16 %v3167
  %v3728 = vunpack.c.h.b16 %v3167
  %v3729 = vunpack.c.l.b16 %v3168
  %v3730 = vunpack.c.l.b16 %v3169
  %v3731 = vunpack.c.h.b16 %v3169
  %v3732 = vunpack.c.l.b16 %v3170
  %v3733 = vunpack.c.h.b16 %v3170
  %v3734 = vunpack.c.l.b16 %v3171
  %v3735 = vunpack.c.h.b16 %v3171
  %v3736 = vunpack.c.l.b16 %v3172
  %v3737 = vunpack.c.l.b16 %v3173
  %v3738 = vunpack.c.h.b16 %v3173
  %v3739 = vunpack.c.l.b16 %v3174
  %v3740 = vunpack.c.h.b16 %v3174
  %v3741 = vunpack.c.l.b16 %v3175
  %v3742 = vunpack.c.h.b16 %v3175
  %v3743 = vunpack.c.l.b16 %v3176
  %v3744 = vunpack.c.l.b16 %v3177
  %v3745 = vunpack.c.h.b16 %v3177
  %v3746 = vunpack.c.l.b16 %v3178
  %v3747 = vunpack.c.h.b16 %v3178
  %v3748 = vunpack.c.l.b16 %v3179
  %v3749 = vunpack.c.h.b16 %v3179
  %v3750 = vunpack.c.l.b16 %v3180
  %v3751 = vunpack.c.l.b16 %v3181
  %v3752 = vunpack.c.h.b16 %v3181
  %v3753 = vunpack.c.l.b16 %v3182
  %v3754 = vunpack.c.h.b16 %v3182
  %v3755 = vunpack.c.l.b16 %v3183
  %v3756 = vunpack.c.h.b16 %v3183
  %v3757 = vunpack.c.l.b16 %v3184
  %v3758 = vunpack.c.l.b16 %v3185
  %v3759 = vunpack.c.h.b16 %v3185
  %v3760 = vunpack.c.l.b16 %v3186
  %v3761 = vunpack.c.h.b16 %v3186
  %v3762 = vunpack.c.l.b16 %v3187
  %v3763 = vunpack.c.h.b16 %v3187
  %v3764 = vunpack.c.l.b16 %v3188
  %v3765 = vunpack.c.l.b16 %v3189
  %v3766 = vunpack.c.h.b16 %v3189
  %v3767 = vunpack.c.l.b16 %v3190
  %v3768 = vunpack.c.h.b16 %v3190
  %v3769 = vunpack.c.l.b16 %v3191
  %v3770 = vunpack.c.h.b16 %v3191
  %v3771 = vunpack.c.l.b16 %v3192
  %v3772 = vunpack.c.l.b16 %v3193
  %v3773 = vunpack.c.h.b16 %v3193
  %v3774 = vunpack.c.l.b16 %v3194
  %v3775 = vunpack.c.h.b16 %v3194
  %v3776 = vunpack.c.l.b16 %v3195
  %v3777 = vunpack.c.h.b16 %v3195
  %v3778 = vunpack.c.l.b16 %v3196
  %v3779 = vunpack.c.l.b16 %v3197
  %v3780 = vunpack.c.h.b16 %v3197
  %v3781 = vunpack.c.l.b16 %v3198
  %v3782 = vunpack.c.h.b16 %v3198
  %v3783 = vunpack.c.l.b16 %v3199
  %v3784 = vunpack.c.h.b16 %v3199
  %v3785 = vunpack.c.l.b16 %v3200
  %v3786 = vunpack.c.l.b16 %v3201
  %v3787 = vunpack.c.h.b16 %v3201
  %v3788 = vunpack.c.l.b16 %v3202
  %v3789 = vunpack.c.h.b16 %v3202
  %v3790 = vunpack.c.l.b16 %v3203
  %v3791 = vunpack.c.h.b16 %v3203
  %v3792 = vunpack.c.l.b16 %v3204
  %v3793 = vunpack.c.l.b16 %v3205
  %v3794 = vunpack.c.h.b16 %v3205
  %v3795 = vunpack.c.l.b16 %v3206
  %v3796 = vunpack.c.h.b16 %v3206
  %v3797 = vunpack.c.l.b16 %v3207
  %v3798 = vunpack.c.h.b16 %v3207
  %v3799 = vunpack.c.l.b16 %v3208
  %v3800 = vunpack.c.l.b16 %v3209
  %v3801 = vunpack.c.h.b16 %v3209
  %v3802 = vunpack.c.l.b16 %v3210
  %v3803 = vunpack.c.h.b16 %v3210
  %v3804 = vunpack.c.l.b16 %v3211
  %v3805 = vunpack.c.h.b16 %v3211
  %v3806 = vunpack.c.l.b16 %v3212
  %v3807 = vunpack.c.l.b16 %v3213
  %v3808 = vunpack.c.h.b16 %v3213
  %v3809 = vunpack.c.l.b16 %v3214
  %v3810 = vunpack.c.h.b16 %v3214
  %v3811 = vunpack.c.l.b16 %v3215
  %v3812 = vunpack.c.h.b16 %v3215
  %v3813 = vunpack.c.l.b16 %v3216
  %v3814 = vunpack.c.l.b16 %v3217
  %v3815 = vunpack.c.h.b16 %v3217
  %v3816 = vunpack.c.l.b16 %v3218
  %v3817 = vunpack.c.h.b16 %v3218
  %v3818 = vunpack.c.l.b16 %v3219
  %v3819 = vunpack.c.h.b16 %v3219
  %v3820 = vunpack.c.l.b16 %v3220
  %v3821 = vunpack.c.l.b16 %v3221
  %v3822 = vunpack.c.h.b16 %v3221
  %v3823 = vunpack.c.l.b16 %v3222
  %v3824 = vunpack.c.h.b16 %v3222
  %v3825 = vunpack.c.l.b16 %v3223
  %v3826 = vunpack.c.h.b16 %v3223
  %v3827 = vunpack.c.l.b16 %v3224
  %v3828 = vunpack.c.l.b16 %v3225
  %v3829 = vunpack.c.h.b16 %v3225
  %v3830 = vunpack.c.l.b16 %v3226
  %v3831 = vunpack.c.h.b16 %v3226
  %v3832 = vunpack.c.l.b16 %v3227
  %v3833 = vunpack.c.h.b16 %v3227
  %v3834 = vunpack.c.l.b16 %v3228
  %v3835 = vunpack.c.l.b16 %v3229
  %v3836 = vunpack.c.h.b16 %v3229
  %v3837 = vunpack.c.l.b16 %v3230
  %v3838 = vunpack.c.h.b16 %v3230
  %v3839 = vunpack.c.l.b16 %v3231
  %v3840 = vunpack.c.h.b16 %v3231
  %v3841 = vunpack.c.l.b16 %v3232
  %v3842 = vunpack.c.l.b16 %v3233
  %v3843 = vunpack.c.h.b16 %v3233
  %v3844 = vunpack.c.l.b16 %v3234
  %v3845 = vunpack.c.h.b16 %v3234
  %v3846 = vunpack.c.l.b16 %v3235
  %v3847 = vunpack.c.h.b16 %v3235
  %v3848 = vunpack.c.l.b16 %v3236
  %v3849 = vunpack.c.l.b16 %v3237
  %v3850 = vunpack.c.h.b16 %v3237
  %v3851 = vunpack.c.l.b16 %v3238
  %v3852 = vunpack.c.h.b16 %v3238
  %v3853 = vunpack.c.l.b16 %v3239
  %v3854 = vunpack.c.h.b16 %v3239
  %v3855 = vunpack.c.l.b16 %v3240
  %v3856 = vunpack.c.l.b16 %v3241
  %v3857 = vunpack.c.h.b16 %v3241
  %v3858 = vunpack.c.l.b16 %v3242
  %v3859 = vunpack.c.h.b16 %v3242
  %v3860 = vunpack.c.l.b16 %v3243
  %v3861 = vunpack.c.h.b16 %v3243
  %v3862 = vunpack.c.l.b16 %v3244
  %v3863 = vunpack.c.l.b16 %v3245
  %v3864 = vunpack.c.h.b16 %v3245
  %v3865 = vunpack.c.l.b16 %v3246
  %v3866 = vunpack.c.h.b16 %v3246
  %v3867 = vunpack.c.l.b16 %v3247
  %v3868 = vunpack.c.h.b16 %v3247
  %v3869 = vunpack.c.l.b16 %v3248
  %v3870 = vunpack.c.l.b16 %v3249
  %v3871 = vunpack.c.h.b16 %v3249
  %v3872 = vunpack.c.l.b16 %v3250
  %v3873 = vunpack.c.h.b16 %v3250
  %v3874 = vunpack.c.l.b16 %v3251
  %v3875 = vunpack.c.h.b16 %v3251
  %v3876 = vunpack.c.l.b16 %v3252
  %v3877 = vunpack.c.l.b16 %v3253
  %v3878 = vunpack.c.h.b16 %v3253
  %v3879 = vunpack.c.l.b16 %v3254
  %v3880 = vunpack.c.h.b16 %v3254
  %v3881 = vunpack.c.l.b16 %v3255
  %v3882 = vunpack.c.h.b16 %v3255
  %v3883 = vunpack.c.l.b16 %v3256
  %v3884 = vunpack.c.l.b16 %v3257
  %v3885 = vunpack.c.h.b16 %v3257
  %v3886 = vunpack.c.l.b16 %v3258
  %v3887 = vunpack.c.h.b16 %v3258
  %v3888 = vunpack.c.l.b16 %v3259
  %v3889 = vunpack.c.h.b16 %v3259
  %v3890 = vunpack.c.l.b16 %v3260
  %v3891 = vunpack.c.l.b16 %v3261
  %v3892 = vunpack.c.h.b16 %v3261
  %v3893 = vunpack.c.l.b16 %v3262
  %v3894 = vunpack.c.h.b16 %v3262
  %v3895 = vunpack.c.l.b16 %v3263
  %v3896 = vunpack.c.h.b16 %v3263
  %v3897 = vunpack.c.l.b16 %v3264
  %v3898 = vunpack.c.l.b16 %v3265
  %v3899 = vunpack.c.h.b16 %v3265
  %v3900 = vunpack.c.l.b16 %v3266
  %v3901 = vunpack.c.h.b16 %v3266
  %v3902 = vunpack.c.l.b16 %v3267
  %v3903 = vunpack.c.h.b16 %v3267
  %v3904 = vunpack.c.l.b16 %v3268
  %v3905 = vunpack.c.l.b16 %v3269
  %v3906 = vunpack.c.h.b16 %v3269
  %v3907 = vunpack.c.l.b16 %v3270
  %v3908 = vunpack.c.h.b16 %v3270
  %v3909 = vunpack.c.l.b16 %v3271
  %v3910 = vunpack.c.h.b16 %v3271
  %v3911 = vunpack.c.l.b16 %v3272
  %v3912 = vunpack.c.l.b16 %v3273
  %v3913 = vunpack.c.h.b16 %v3273
  %v3914 = vunpack.c.l.b16 %v3274
  %v3915 = vunpack.c.h.b16 %v3274
  %v3916 = vunpack.c.l.b16 %v3275
  %v3917 = vunpack.c.h.b16 %v3275
  %v3918 = vunpack.c.l.b16 %v3276
  %v3919 = vunpack.c.l.b16 %v3277
  %v3920 = vunpack.c.h.b16 %v3277
  %v3921 = vunpack.c.l.b16 %v3278
  %v3922 = vunpack.c.h.b16 %v3278
  %v3923 = vunpack.c.l.b16 %v3279
  %v3924 = vunpack.c.h.b16 %v3279
  %v3925 = vunpack.c.l.b16 %v3280
  %v3926 = vunpack.c.l.b16 %v3281
  %v3927 = vunpack.c.h.b16 %v3281
  %v3928 = vunpack.c.l.b16 %v3282
  %v3929 = vunpack.c.h.b16 %v3282
  %v3930 = vunpack.c.l.b16 %v3283
  %v3931 = vunpack.c.h.b16 %v3283
  %v3932 = vunpack.c.l.b16 %v3284
  %v3933 = vunpack.c.l.b16 %v3285
  %v3934 = vunpack.c.h.b16 %v3285
  %v3935 = vunpack.c.l.b16 %v3286
  %v3936 = vunpack.c.h.b16 %v3286
  %v3937 = vunpack.c.l.b16 %v3287
  %v3938 = vunpack.c.h.b16 %v3287
  %v3939 = vunpack.c.l.b16 %v3288
  %v3940 = vunpack.c.l.b16 %v3289
  %v3941 = vunpack.c.h.b16 %v3289
  %v3942 = vunpack.c.l.b16 %v3290
  %v3943 = vunpack.c.h.b16 %v3290
  %v3944 = vunpack.c.l.b16 %v3291
  %v3945 = vunpack.c.h.b16 %v3291
  %v3946 = vunpack.c.l.b16 %v3292
  %v3947 = vunpack.c.l.b16 %v3293
  %v3948 = vunpack.c.h.b16 %v3293
  %v3949 = vunpack.c.l.b16 %v3294
  %v3950 = vunpack.c.h.b16 %v3294
  %v3951 = vunpack.c.l.b16 %v3295
  %v3952 = vunpack.c.h.b16 %v3295
  %v3953 = vunpack.c.l.b16 %v3296
  %v3954 = vunpack.c.l.b16 %v3297
  %v3955 = vunpack.c.h.b16 %v3297
  %v3956 = vunpack.c.l.b16 %v3298
  %v3957 = vunpack.c.h.b16 %v3298
  %v3958 = vunpack.c.l.b16 %v3299
  %v3959 = vunpack.c.h.b16 %v3299
  %v3960 = vunpack.c.l.b16 %v3300
  %v3961 = vunpack.c.l.b16 %v3301
  %v3962 = vunpack.c.h.b16 %v3301
  %v3963 = vunpack.c.l.b16 %v3302
  %v3964 = vunpack.c.h.b16 %v3302
  %v3965 = vunpack.c.l.b16 %v3303
  %v3966 = vunpack.c.h.b16 %v3303
  %v3967 = vunpack.c.l.b16 %v3304
  %v3968 = vunpack.c.l.b16 %v3305
  %v3969 = vunpack.c.h.b16 %v3305
  %v3970 = vunpack.c.l.b16 %v3306
  %v3971 = vunpack.c.h.b16 %v3306
  %v3972 = vunpack.c.l.b16 %v3307
  %v3973 = vunpack.c.h.b16 %v3307
  %v3974 = vunpack.c.l.b16 %v3308
  %v3975 = vunpack.c.l.b16 %v3309
  %v3976 = vunpack.c.h.b16 %v3309
  %v3977 = vunpack.c.l.b16 %v3310
  %v3978 = vunpack.c.h.b16 %v3310
  %v3979 = vunpack.c.l.b16 %v3311
  %v3980 = vunpack.c.h.b16 %v3311
  %v3981 = vunpack.c.l.b16 %v3312
  %v3982 = vunpack.c.l.b16 %v3313
  %v3983 = vunpack.c.h.b16 %v3313
  %v3984 = vunpack.c.l.b16 %v3314
  %v3985 = vunpack.c.h.b16 %v3314
  %v3986 = vunpack.c.l.b16 %v3315
  %v3987 = vunpack.c.h.b16 %v3315
  %v3988 = vunpack.c.l.b16 %v3316
  %v3989 = vunpack.c.l.b16 %v3317
  %v3990 = vunpack.c.h.b16 %v3317
  %v3991 = vunpack.c.l.b16 %v3318
  %v3992 = vunpack.c.h.b16 %v3318
  %v3993 = vunpack.c.l.b16 %v3319
  %v3994 = vunpack.c.h.b16 %v3319
  %v3995 = vunpack.c.l.b16 %v3320
  %v3996 = vunpack.c.l.b16 %v3321
  %v3997 = vunpack.c.h.b16 %v3321
  %v3998 = vunpack.c.l.b16 %v3322
  %v3999 = vunpack.c.h.b16 %v3322
  %v4000 = vunpack.c.l.b16 %v3323
  %v4001 = vunpack.c.h.b16 %v3323
  %v4002 = vunpack.c.l.b16 %v3324
  %v4003 = vunpack.c.l.b16 %v3325
  %v4004 = vunpack.c.h.b16 %v3325
  %v4005 = vunpack.c.l.b16 %v3326
  %v4006 = vunpack.c.h.b16 %v3326
  %v4007 = vunpack.c.l.b16 %v3327
  %v4008 = vunpack.c.h.b16 %v3327
  %v4009 = vunpack.c.l.b16 %v3328
  %v4010 = vunpack.c.l.b16 %v3329
  %v4011 = vunpack.c.h.b16 %v3329
  %v4012 = vunpack.c.l.b16 %v3330
  %v4013 = vunpack.c.h.b16 %v3330
  %v4014 = vunpack.c.l.b16 %v3331
  %v4015 = vunpack.c.h.b16 %v3331
  %v4016 = vunpack.c.l.b16 %v3332
  %v4017 = vunpack.c.l.b16 %v3333
  %v4018 = vunpack.c.h.b16 %v3333
  %v4019 = vunpack.c.l.b16 %v3334
  %v4020 = vunpack.c.h.b16 %v3334
  %v4021 = vunpack.c.l.b16 %v3335
  %v4022 = vunpack.c.h.b16 %v3335
  %v4023 = vunpack.c.l.b16 %v3336
  %v4024 = vunpack.c.l.b16 %v3337
  %v4025 = vunpack.c.h.b16 %v3337
  %v4026 = vunpack.c.l.b16 %v3338
  %v4027 = vunpack.c.h.b16 %v3338
  %v4028 = vunpack.c.l.b16 %v3339
  %v4029 = vunpack.c.h.b16 %v3339
  %v4030 = vunpack.c.l.b16 %v3340
  %v4031 = vunpack.c.l.b16 %v3341
  %v4032 = vunpack.c.h.b16 %v3341
  %v4033 = vunpack.c.l.b16 %v3342
  %v4034 = vunpack.c.h.b16 %v3342
  %v4035 = vunpack.c.l.b16 %v3343
  %v4036 = vunpack.c.h.b16 %v3343
  %v4037 = vunpack.c.l.b16 %v3344
  %v4038 = vunpack.c.l.b16 %v3345
  %v4039 = vunpack.c.h.b16 %v3345
  %v4040 = vunpack.c.l.b16 %v3346
  %v4041 = vunpack.c.h.b16 %v3346
  %v4042 = vunpack.c.l.b16 %v3347
  %v4043 = vunpack.c.h.b16 %v3347
  %v4044 = vunpack.c.l.b16 %v3348
  %v4045 = vunpack.c.l.b16 %v3349
  %v4046 = vunpack.c.h.b16 %v3349
  %v4047 = vunpack.c.l.b16 %v3350
  %v4048 = vunpack.c.h.b16 %v3350
  %v4049 = vunpack.c.l.b16 %v3351
  %v4050 = vunpack.c.h.b16 %v3351
  %v4051 = vunpack.c.l.b16 %v3352
  %v4052 = vunpack.c.l.b16 %v3353
  %v4053 = vunpack.c.h.b16 %v3353
  %v4054 = vunpack.c.l.b16 %v3354
  %v4055 = vunpack.c.h.b16 %v3354
  %v4056 = vunpack.c.l.b16 %v3355
  %v4057 = vunpack.c.h.b16 %v3355
  %v4058 = vunpack.c.l.b16 %v3356
  %v4059 = vunpack.c.l.b16 %v3357
  %v4060 = vunpack.c.h.b16 %v3357
  %v4061 = vunpack.c.l.b16 %v3358
  %v4062 = vunpack.c.h.b16 %v3358
  %v4063 = vunpack.c.l.b16 %v3359
  %v4064 = vunpack.c.h.b16 %v3359
  %v4065 = vunpack.c.l.b16 %v3360
  %v4066 = vunpack.c.l.b16 %v3361
  %v4067 = vunpack.c.h.b16 %v3361
  %v4068 = vunpack.c.l.b16 %v3362
  %v4069 = vunpack.c.h.b16 %v3362
  %v4070 = vunpack.c.l.b16 %v3363
  %v4071 = vunpack.c.h.b16 %v3363
  %v4072 = vunpack.c.l.b16 %v3364
  %v4073 = vunpack.c.l.b16 %v3365
  %v4074 = vunpack.c.h.b16 %v3365
  %v4075 = vunpack.c.l.b16 %v3366
  %v4076 = vunpack.c.h.b16 %v3366
  %v4077 = vunpack.c.l.b16 %v3367
  %v4078 = vunpack.c.h.b16 %v3367
  %v4079 = vunpack.c.l.b16 %v3368
  %v4080 = vunpack.c.l.b16 %v3369
  %v4081 = vunpack.c.h.b16 %v3369
  %v4082 = vunpack.c.l.b16 %v3370
  %v4083 = vunpack.c.h.b16 %v3370
  %v4084 = vunpack.c.l.b16 %v3371
  %v4085 = vunpack.c.h.b16 %v3371
  %v4086 = vunpack.c.l.b16 %v3372
  %v4087 = vunpack.c.l.b16 %v3373
  %v4088 = vunpack.c.h.b16 %v3373
  %v4089 = vunpack.c.l.b16 %v3374
  %v4090 = vunpack.c.h.b16 %v3374
  %v4091 = vunpack.c.l.b16 %v3375
  %v4092 = vunpack.c.h.b16 %v3375
  %v4093 = vunpack.c.l.b16 %v3376
  %v4094 = vunpack.c.l.b16 %v3377
  %v4095 = vunpack.c.h.b16 %v3377
  %v4096 = vunpack.c.l.b16 %v3378
  %v4097 = vunpack.c.h.b16 %v3378
  %v4098 = vunpack.c.l.b16 %v3379
  %v4099 = vunpack.c.h.b16 %v3379
  %v4100 = vunpack.c.l.b16 %v3380
  %v4101 = vpack.c.b16 %v3660, %v3653
  %v4102 = vpack.c.b16 %v3661, %v3654
  %v4103 = vpack.c.b16 %v3662, %v3655
  %v4104 = vpack.c.b16 %v3663, %v3656
  %v4105 = vpack.c.b16 %v3664, %v3657
  %v4106 = vpack.c.b16 %v3665, %v3658
  %v4107 = vpack.c.b16 %v3666, %v3659
  %v4108 = vpack.c.b16 %v3674, %v3667
  %v4109 = vpack.c.b16 %v3675, %v3668
  %v4110 = vpack.c.b16 %v3676, %v3669
  %v4111 = vpack.c.b16 %v3677, %v3670
  %v4112 = vpack.c.b16 %v3678, %v3671
  %v4113 = vpack.c.b16 %v3679, %v3672
  %v4114 = vpack.c.b16 %v3680, %v3673
  %v4115 = vpack.c.b16 %v3688, %v3681
  %v4116 = vpack.c.b16 %v3689, %v3682
  %v4117 = vpack.c.b16 %v3690, %v3683
  %v4118 = vpack.c.b16 %v3691, %v3684
  %v4119 = vpack.c.b16 %v3692, %v3685
  %v4120 = vpack.c.b16 %v3693, %v3686
  %v4121 = vpack.c.b16 %v3694, %v3687
  %v4122 = vpack.c.b16 %v3702, %v3695
  %v4123 = vpack.c.b16 %v3703, %v3696
  %v4124 = vpack.c.b16 %v3704, %v3697
  %v4125 = vpack.c.b16 %v3705, %v3698
  %v4126 = vpack.c.b16 %v3706, %v3699
  %v4127 = vpack.c.b16 %v3707, %v3700
  %v4128 = vpack.c.b16 %v3708, %v3701
  %v4129 = vpack.c.b16 %v3716, %v3709
  %v4130 = vpack.c.b16 %v3717, %v3710
  %v4131 = vpack.c.b16 %v3718, %v3711
  %v4132 = vpack.c.b16 %v3719, %v3712
  %v4133 = vpack.c.b16 %v3720, %v3713
  %v4134 = vpack.c.b16 %v3721, %v3714
  %v4135 = vpack.c.b16 %v3722, %v3715
  %v4136 = vpack.c.b16 %v3730, %v3723
  %v4137 = vpack.c.b16 %v3731, %v3724
  %v4138 = vpack.c.b16 %v3732, %v3725
  %v4139 = vpack.c.b16 %v3733, %v3726
  %v4140 = vpack.c.b16 %v3734, %v3727
  %v4141 = vpack.c.b16 %v3735, %v3728
  %v4142 = vpack.c.b16 %v3736, %v3729
  %v4143 = vpack.c.b16 %v3744, %v3737
  %v4144 = vpack.c.b16 %v3745, %v3738
  %v4145 = vpack.c.b16 %v3746, %v3739
  %v4146 = vpack.c.b16 %v3747, %v3740
  %v4147 = vpack.c.b16 %v3748, %v3741
  %v4148 = vpack.c.b16 %v3749, %v3742
  %v4149 = vpack.c.b16 %v3750, %v3743
  %v4150 = vpack.c.b16 %v3758, %v3751
  %v4151 = vpack.c.b16 %v3759, %v3752
  %v4152 = vpack.c.b16 %v3760, %v3753
  %v4153 = vpack.c.b16 %v3761, %v3754
  %v4154 = vpack.c.b16 %v3762, %v3755
  %v4155 = vpack.c.b16 %v3763, %v3756
  %v4156 = vpack.c.b16 %v3764, %v3757
  %v4157 = vpack.c.b16 %v3772, %v3765
  %v4158 = vpack.c.b16 %v3773, %v3766
  %v4159 = vpack.c.b16 %v3774, %v3767
  %v4160 = vpack.c.b16 %v3775, %v3768
  %v4161 = vpack.c.b16 %v3776, %v3769
  %v4162 = vpack.c.b16 %v3777, %v3770
  %v4163 = vpack.c.b16 %v3778, %v3771
  %v4164 = vpack.c.b16 %v3786, %v3779
  %v4165 = vpack.c.b16 %v3787, %v3780
  %v4166 = vpack.c.b16 %v3788, %v3781
  %v4167 = vpack.c.b16 %v3789, %v3782
  %v4168 = vpack.c.b16 %v3790, %v3783
  %v4169 = vpack.c.b16 %v3791, %v3784
  %v4170 = vpack.c.b16 %v3792, %v3785
  %v4171 = vpack.c.b16 %v3800, %v3793
  %v4172 = vpack.c.b16 %v3801, %v3794
  %v4173 = vpack.c.b16 %v3802, %v3795
  %v4174 = vpack.c.b16 %v3803, %v3796
  %v4175 = vpack.c.b16 %v3804, %v3797
  %v4176 = vpack.c.b16 %v3805, %v3798
  %v4177 = vpack.c.b16 %v3806, %v3799
  %v4178 = vpack.c.b16 %v3814, %v3807
  %v4179 = vpack.c.b16 %v3815, %v3808
  %v4180 = vpack.c.b16 %v3816, %v3809
  %v4181 = vpack.c.b16 %v3817, %v3810
  %v4182 = vpack.c.b16 %v3818, %v3811
  %v4183 = vpack.c.b16 %v3819, %v3812
  %v4184 = vpack.c.b16 %v3820, %v3813
  %v4185 = vpack.c.b16 %v3828, %v3821
  %v4186 = vpack.c.b16 %v3829, %v3822
  %v4187 = vpack.c.b16 %v3830, %v3823
  %v4188 = vpack.c.b16 %v3831, %v3824
  %v4189 = vpack.c.b16 %v3832, %v3825
  %v4190 = vpack.c.b16 %v3833, %v3826
  %v4191 = vpack.c.b16 %v3834, %v3827
  %v4192 = vpack.c.b16 %v3842, %v3835
  %v4193 = vpack.c.b16 %v3843, %v3836
  %v4194 = vpack.c.b16 %v3844, %v3837
  %v4195 = vpack.c.b16 %v3845, %v3838
  %v4196 = vpack.c.b16 %v3846, %v3839
  %v4197 = vpack.c.b16 %v3847, %v3840
  %v4198 = vpack.c.b16 %v3848, %v3841
  %v4199 = vpack.c.b16 %v3856, %v3849
  %v4200 = vpack.c.b16 %v3857, %v3850
  %v4201 = vpack.c.b16 %v3858, %v3851
  %v4202 = vpack.c.b16 %v3859, %v3852
  %v4203 = vpack.c.b16 %v3860, %v3853
  %v4204 = vpack.c.b16 %v3861, %v3854
  %v4205 = vpack.c.b16 %v3862, %v3855
  %v4206 = vpack.c.b16 %v3870, %v3863
  %v4207 = vpack.c.b16 %v3871, %v3864
  %v4208 = vpack.c.b16 %v3872, %v3865
  %v4209 = vpack.c.b16 %v3873, %v3866
  %v4210 = vpack.c.b16 %v3874, %v3867
  %v4211 = vpack.c.b16 %v3875, %v3868
  %v4212 = vpack.c.b16 %v3876, %v3869
  %v4213 = vpack.c.b16 %v3884, %v3877
  %v4214 = vpack.c.b16 %v3885, %v3878
  %v4215 = vpack.c.b16 %v3886, %v3879
  %v4216 = vpack.c.b16 %v3887, %v3880
  %v4217 = vpack.c.b16 %v3888, %v3881
  %v4218 = vpack.c.b16 %v3889, %v3882
  %v4219 = vpack.c.b16 %v3890, %v3883
  %v4220 = vpack.c.b16 %v3898, %v3891
  %v4221 = vpack.c.b16 %v3899, %v3892
  %v4222 = vpack.c.b16 %v3900, %v3893
  %v4223 = vpack.c.b16 %v3901, %v3894
  %v4224 = vpack.c.b16 %v3902, %v3895
  %v4225 = vpack.c.b16 %v3903, %v3896
  %v4226 = vpack.c.b16 %v3904, %v3897
  %v4227 = vpack.c.b16 %v3912, %v3905
  %v4228 = vpack.c.b16 %v3913, %v3906
  %v4229 = vpack.c.b16 %v3914, %v3907
  %v4230 = vpack.c.b16 %v3915, %v3908
  %v4231 = vpack.c.b16 %v3916, %v3909
  %v4232 = vpack.c.b16 %v3917, %v3910
  %v4233 = vpack.c.b16 %v3918, %v3911
  %v4234 = vpack.c.b16 %v3926, %v3919
  %v4235 = vpack.c.b16 %v3927, %v3920
  %v4236 = vpack.c.b16 %v3928, %v3921
  %v4237 = vpack.c.b16 %v3929, %v3922
  %v4238 = vpack.c.b16 %v3930, %v3923
  %v4239 = vpack.c.b16 %v3931, %v3924
  %v4240 = vpack.c.b16 %v3932, %v3925
  %v4241 = vpack.c.b16 %v3940, %v3933
  %v4242 = vpack.c.b16 %v3941, %v3934
  %v4243 = vpack.c.b16 %v3942, %v3935
  %v4244 = vpack.c.b16 %v3943, %v3936
  %v4245 = vpack.c.b16 %v3944, %v3937
  %v4246 = vpack.c.b16 %v3945, %v3938
  %v4247 = vpack.c.b16 %v3946, %v3939
  %v4248 = vpack.c.b16 %v3954, %v3947
  %v4249 = vpack.c.b16 %v3955, %v3948
  %v4250 = vpack.c.b16 %v3956, %v3949
  %v4251 = vpack.c.b16 %v3957, %v3950
  %v4252 = vpack.c.b16 %v3958, %v3951
  %v4253 = vpack.c.b16 %v3959, %v3952
  %v4254 = vpack.c.b16 %v3960, %v3953
  %v4255 = vpack.c.b16 %v3968, %v3961
  %v4256 = vpack.c.b16 %v3969, %v3962
  %v4257 = vpack.c.b16 %v3970, %v3963
  %v4258 = vpack.c.b16 %v3971, %v3964
  %v4259 = vpack.c.b16 %v3972, %v3965
  %v4260 = vpack.c.b16 %v3973, %v3966
  %v4261 = vpack.c.b16 %v3974, %v3967
  %v4262 = vpack.c.b16 %v3982, %v3975
  %v4263 = vpack.c.b16 %v3983, %v3976
  %v4264 = vpack.c.b16 %v3984, %v3977
  %v4265 = vpack.c.b16 %v3985, %v3978
  %v4266 = vpack.c.b16 %v3986, %v3979
  %v4267 = vpack.c.b16 %v3987, %v3980
  %v4268 = vpack.c.b16 %v3988, %v3981
  %v4269 = vpack.c.b16 %v3996, %v3989
  %v4270 = vpack.c.b16 %v3997, %v3990
  %v4271 = vpack.c.b16 %v3998, %v3991
  %v4272 = vpack.c.b16 %v3999, %v3992
  %v4273 = vpack.c.b16 %v4000, %v3993
  %v4274 = vpack.c.b16 %v4001, %v3994
  %v4275 = vpack.c.b16 %v4002, %v3995
  %v4276 = vpack.c.b16 %v4010, %v4003
  %v4277 = vpack.c.b16 %v4011, %v4004
  %v4278 = vpack.c.b16 %v4012, %v4005
  %v4279 = vpack.c.b16 %v4013, %v4006
  %v4280 = vpack.c.b16 %v4014, %v4007
  %v4281 = vpack.c.b16 %v4015, %v4008
  %v4282 = vpack.c.b16 %v4016, %v4009
  %v4283 = vpack.c.b16 %v4024, %v4017
  %v4284 = vpack.c.b16 %v4025, %v4018
  %v4285 = vpack.c.b16 %v4026, %v4019
  %v4286 = vpack.c.b16 %v4027, %v4020
  %v4287 = vpack.c.b16 %v4028, %v4021
  %v4288 = vpack.c.b16 %v4029, %v4022
  %v4289 = vpack.c.b16 %v4030, %v4023
  %v4290 = vpack.c.b16 %v4038, %v4031
  %v4291 = vpack.c.b16 %v4039, %v4032
  %v4292 = vpack.c.b16 %v4040, %v4033
  %v4293 = vpack.c.b16 %v4041, %v4034
  %v4294 = vpack.c.b16 %v4042, %v4035
  %v4295 = vpack.c.b16 %v4043, %v4036
  %v4296 = vpack.c.b16 %v4044, %v4037
  %v4297 = vpack.c.b16 %v4052, %v4045
  %v4298 = vpack.c.b16 %v4053, %v4046
  %v4299 = vpack.c.b16 %v4054, %v4047
  %v4300 = vpack.c.b16 %v4055, %v4048
  %v4301 = vpack.c.b16 %v4056, %v4049
  %v4302 = vpack.c.b16 %v4057, %v4050
  %v4303 = vpack.c.b16 %v4058, %v4051
  %v4304 = vpack.c.b16 %v4066, %v4059
  %v4305 = vpack.c.b16 %v4067, %v4060
  %v4306 = vpack.c.b16 %v4068, %v4061
  %v4307 = vpack.c.b16 %v4069, %v4062
  %v4308 = vpack.c.b16 %v4070, %v4063
  %v4309 = vpack.c.b16 %v4071, %v4064
  %v4310 = vpack.c.b16 %v4072, %v4065
  %v4311 = vpack.c.b16 %v4080, %v4073
  %v4312 = vpack.c.b16 %v4081, %v4074
  %v4313 = vpack.c.b16 %v4082, %v4075
  %v4314 = vpack.c.b16 %v4083, %v4076
  %v4315 = vpack.c.b16 %v4084, %v4077
  %v4316 = vpack.c.b16 %v4085, %v4078
  %v4317 = vpack.c.b16 %v4086, %v4079
  %v4318 = vpack.c.b16 %v4094, %v4087
  %v4319 = vpack.c.b16 %v4095, %v4088
  %v4320 = vpack.c.b16 %v4096, %v4089
  %v4321 = vpack.c.b16 %v4097, %v4090
  %v4322 = vpack.c.b16 %v4098, %v4091
  %v4323 = vpack.c.b16 %v4099, %v4092
  %v4324 = vpack.c.b16 %v4100, %v4093
  %4549 = vmatpush.bf16.msra.mxu0 %v4150
  %4550 = vmatpush.bf16.msra.mxu0 %v4143
  %4551 = vmatpush.bf16.msra.mxu0 %v4136
  %4552 = vmatpush.bf16.msra.mxu0 %v4129
  %4553 = vmatpush.bf16.msra.mxu0 %v4122
  %4554 = vmatpush.bf16.msra.mxu0 %v4115
  %4555 = vmatpush.bf16.msra.mxu0 %v4108
  %4556 = vmatpush.bf16.msra.mxu0 %v4101
  %4557 = vmatmul.bf16.gmra.mxu0 %v3121
  %v4558 = vpop.f32.mrf.mxu0
  %v4559 = vadd.f32 %v3383, %v4558
  %v4560 = vpop.f32.mrf.mxu0
  %v4561 = vadd.f32 %v3383, %v4560
  %4562 = vdwg.mxu0
  %4563 = vmatpush.bf16.msra.mxu0 %v4206
  %4564 = vmatpush.bf16.msra.mxu0 %v4199
  %4565 = vmatpush.bf16.msra.mxu0 %v4192
  %4566 = vmatpush.bf16.msra.mxu0 %v4185
  %4567 = vmatpush.bf16.msra.mxu0 %v4178
  %4568 = vmatpush.bf16.msra.mxu0 %v4171
  %4569 = vmatpush.bf16.msra.mxu0 %v4164
  %4570 = vmatpush.bf16.msra.mxu0 %v4157
  %4571 = vmatmul.bf16.gmra.mxu0 %v3122
  %v4572 = vpop.f32.mrf.mxu0
  %v4573 = vadd.f32 %v4559, %v4572
  %v4574 = vpop.f32.mrf.mxu0
  %v4575 = vadd.f32 %v4561, %v4574
  %4576 = vdwg.mxu0
  %4577 = vmatpush.bf16.msra.mxu0 %v4262
  %4578 = vmatpush.bf16.msra.mxu0 %v4255
  %4579 = vmatpush.bf16.msra.mxu0 %v4248
  %4580 = vmatpush.bf16.msra.mxu0 %v4241
  %4581 = vmatpush.bf16.msra.mxu0 %v4234
  %4582 = vmatpush.bf16.msra.mxu0 %v4227
  %4583 = vmatpush.bf16.msra.mxu0 %v4220
  %4584 = vmatpush.bf16.msra.mxu0 %v4213
  %4585 = vmatmul.bf16.gmra.mxu0 %v3123
  %v4586 = vpop.f32.mrf.mxu0
  %v4587 = vadd.f32 %v4573, %v4586
  %v4588 = vpop.f32.mrf.mxu0
  %v4589 = vadd.f32 %v4575, %v4588
  %4590 = vdwg.mxu0
  %4591 = vmatpush.bf16.msra.mxu0 %v4318
  %4592 = vmatpush.bf16.msra.mxu0 %v4311
  %4593 = vmatpush.bf16.msra.mxu0 %v4304
  %4594 = vmatpush.bf16.msra.mxu0 %v4297
  %4595 = vmatpush.bf16.msra.mxu0 %v4290
  %4596 = vmatpush.bf16.msra.mxu0 %v4283
  %4597 = vmatpush.bf16.msra.mxu0 %v4276
  %4598 = vmatpush.bf16.msra.mxu0 %v4269
  %4599 = vmatmul.bf16.gmra.mxu0 %v3124
  %v4600 = vpop.f32.mrf.mxu0
  %v4601 = vadd.f32 %v4587, %v4600
  %v4602 = vpop.f32.mrf.mxu0
  %v4603 = vadd.f32 %v4589, %v4602
  %4604 = vdwg.mxu0
  %4605 = vmatpush.bf16.msra.mxu0 %v4151
  %4606 = vmatpush.bf16.msra.mxu0 %v4144
  %4607 = vmatpush.bf16.msra.mxu0 %v4137
  %4608 = vmatpush.bf16.msra.mxu0 %v4130
  %4609 = vmatpush.bf16.msra.mxu0 %v4123
  %4610 = vmatpush.bf16.msra.mxu0 %v4116
  %4611 = vmatpush.bf16.msra.mxu0 %v4109
  %4612 = vmatpush.bf16.msra.mxu0 %v4102
  %4613 = vmatmul.bf16.gmra.mxu0 %v3121
  %v4614 = vpop.f32.mrf.mxu0
  %v4615 = vadd.f32 %v3384, %v4614
  %v4616 = vpop.f32.mrf.mxu0
  %v4617 = vadd.f32 %v3384, %v4616
  %4618 = vdwg.mxu0
  %4619 = vmatpush.bf16.msra.mxu0 %v4207
  %4620 = vmatpush.bf16.msra.mxu0 %v4200
  %4621 = vmatpush.bf16.msra.mxu0 %v4193
  %4622 = vmatpush.bf16.msra.mxu0 %v4186
  %4623 = vmatpush.bf16.msra.mxu0 %v4179
  %4624 = vmatpush.bf16.msra.mxu0 %v4172
  %4625 = vmatpush.bf16.msra.mxu0 %v4165
  %4626 = vmatpush.bf16.msra.mxu0 %v4158
  %4627 = vmatmul.bf16.gmra.mxu0 %v3122
  %v4628 = vpop.f32.mrf.mxu0
  %v4629 = vadd.f32 %v4615, %v4628
  %v4630 = vpop.f32.mrf.mxu0
  %v4631 = vadd.f32 %v4617, %v4630
  %4632 = vdwg.mxu0
  %4633 = vmatpush.bf16.msra.mxu0 %v4263
  %4634 = vmatpush.bf16.msra.mxu0 %v4256
  %4635 = vmatpush.bf16.msra.mxu0 %v4249
  %4636 = vmatpush.bf16.msra.mxu0 %v4242
  %4637 = vmatpush.bf16.msra.mxu0 %v4235
  %4638 = vmatpush.bf16.msra.mxu0 %v4228
  %4639 = vmatpush.bf16.msra.mxu0 %v4221
  %4640 = vmatpush.bf16.msra.mxu0 %v4214
  %4641 = vmatmul.bf16.gmra.mxu0 %v3123
  %v4642 = vpop.f32.mrf.mxu0
  %v4643 = vadd.f32 %v4629, %v4642
  %v4644 = vpop.f32.mrf.mxu0
  %v4645 = vadd.f32 %v4631, %v4644
  %4646 = vdwg.mxu0
  %4647 = vmatpush.bf16.msra.mxu0 %v4319
  %4648 = vmatpush.bf16.msra.mxu0 %v4312
  %4649 = vmatpush.bf16.msra.mxu0 %v4305
  %4650 = vmatpush.bf16.msra.mxu0 %v4298
  %4651 = vmatpush.bf16.msra.mxu0 %v4291
  %4652 = vmatpush.bf16.msra.mxu0 %v4284
  %4653 = vmatpush.bf16.msra.mxu0 %v4277
  %4654 = vmatpush.bf16.msra.mxu0 %v4270
  %4655 = vmatmul.bf16.gmra.mxu0 %v3124
  %v4656 = vpop.f32.mrf.mxu0
  %v4657 = vadd.f32 %v4643, %v4656
  %v4658 = vpop.f32.mrf.mxu0
  %v4659 = vadd.f32 %v4645, %v4658
  %4660 = vdwg.mxu0
  %4661 = vmatpush.bf16.msra.mxu0 %v4152
  %4662 = vmatpush.bf16.msra.mxu0 %v4145
  %4663 = vmatpush.bf16.msra.mxu0 %v4138
  %4664 = vmatpush.bf16.msra.mxu0 %v4131
  %4665 = vmatpush.bf16.msra.mxu0 %v4124
  %4666 = vmatpush.bf16.msra.mxu0 %v4117
  %4667 = vmatpush.bf16.msra.mxu0 %v4110
  %4668 = vmatpush.bf16.msra.mxu0 %v4103
  %4669 = vmatmul.bf16.gmra.mxu0 %v3121
  %v4670 = vpop.f32.mrf.mxu0
  %v4671 = vadd.f32 %v3385, %v4670
  %v4672 = vpop.f32.mrf.mxu0
  %v4673 = vadd.f32 %v3385, %v4672
  %4674 = vdwg.mxu0
  %4675 = vmatpush.bf16.msra.mxu0 %v4208
  %4676 = vmatpush.bf16.msra.mxu0 %v4201
  %4677 = vmatpush.bf16.msra.mxu0 %v4194
  %4678 = vmatpush.bf16.msra.mxu0 %v4187
  %4679 = vmatpush.bf16.msra.mxu0 %v4180
  %4680 = vmatpush.bf16.msra.mxu0 %v4173
  %4681 = vmatpush.bf16.msra.mxu0 %v4166
  %4682 = vmatpush.bf16.msra.mxu0 %v4159
  %4683 = vmatmul.bf16.gmra.mxu0 %v3122
  %v4684 = vpop.f32.mrf.mxu0
  %v4685 = vadd.f32 %v4671, %v4684
  %v4686 = vpop.f32.mrf.mxu0
  %v4687 = vadd.f32 %v4673, %v4686
  %4688 = vdwg.mxu0
  %4689 = vmatpush.bf16.msra.mxu0 %v4264
  %4690 = vmatpush.bf16.msra.mxu0 %v4257
  %4691 = vmatpush.bf16.msra.mxu0 %v4250
  %4692 = vmatpush.bf16.msra.mxu0 %v4243
  %4693 = vmatpush.bf16.msra.mxu0 %v4236
  %4694 = vmatpush.bf16.msra.mxu0 %v4229
  %4695 = vmatpush.bf16.msra.mxu0 %v4222
  %4696 = vmatpush.bf16.msra.mxu0 %v4215
  %4697 = vmatmul.bf16.gmra.mxu0 %v3123
  %v4698 = vpop.f32.mrf.mxu0
  %v4699 = vadd.f32 %v4685, %v4698
  %v4700 = vpop.f32.mrf.mxu0
  %v4701 = vadd.f32 %v4687, %v4700
  %4702 = vdwg.mxu0
  %4703 = vmatpush.bf16.msra.mxu0 %v4320
  %4704 = vmatpush.bf16.msra.mxu0 %v4313
  %4705 = vmatpush.bf16.msra.mxu0 %v4306
  %4706 = vmatpush.bf16.msra.mxu0 %v4299
  %4707 = vmatpush.bf16.msra.mxu0 %v4292
  %4708 = vmatpush.bf16.msra.mxu0 %v4285
  %4709 = vmatpush.bf16.msra.mxu0 %v4278
  %4710 = vmatpush.bf16.msra.mxu0 %v4271
  %4711 = vmatmul.bf16.gmra.mxu0 %v3124
  %v4712 = vpop.f32.mrf.mxu0
  %v4713 = vadd.f32 %v4699, %v4712
  %v4714 = vpop.f32.mrf.mxu0
  %v4715 = vadd.f32 %v4701, %v4714
  %4716 = vdwg.mxu0
  %4717 = vmatpush.bf16.msra.mxu0 %v4153
  %4718 = vmatpush.bf16.msra.mxu0 %v4146
  %4719 = vmatpush.bf16.msra.mxu0 %v4139
  %4720 = vmatpush.bf16.msra.mxu0 %v4132
  %4721 = vmatpush.bf16.msra.mxu0 %v4125
  %4722 = vmatpush.bf16.msra.mxu0 %v4118
  %4723 = vmatpush.bf16.msra.mxu0 %v4111
  %4724 = vmatpush.bf16.msra.mxu0 %v4104
  %4725 = vmatmul.bf16.gmra.mxu0 %v3121
  %v4726 = vpop.f32.mrf.mxu0
  %v4727 = vadd.f32 %v3386, %v4726
  %v4728 = vpop.f32.mrf.mxu0
  %v4729 = vadd.f32 %v3386, %v4728
  %4730 = vdwg.mxu0
  %4731 = vmatpush.bf16.msra.mxu0 %v4209
  %4732 = vmatpush.bf16.msra.mxu0 %v4202
  %4733 = vmatpush.bf16.msra.mxu0 %v4195
  %4734 = vmatpush.bf16.msra.mxu0 %v4188
  %4735 = vmatpush.bf16.msra.mxu0 %v4181
  %4736 = vmatpush.bf16.msra.mxu0 %v4174
  %4737 = vmatpush.bf16.msra.mxu0 %v4167
  %4738 = vmatpush.bf16.msra.mxu0 %v4160
  %4739 = vmatmul.bf16.gmra.mxu0 %v3122
  %v4740 = vpop.f32.mrf.mxu0
  %v4741 = vadd.f32 %v4727, %v4740
  %v4742 = vpop.f32.mrf.mxu0
  %v4743 = vadd.f32 %v4729, %v4742
  %4744 = vdwg.mxu0
  %4745 = vmatpush.bf16.msra.mxu0 %v4265
  %4746 = vmatpush.bf16.msra.mxu0 %v4258
  %4747 = vmatpush.bf16.msra.mxu0 %v4251
  %4748 = vmatpush.bf16.msra.mxu0 %v4244
  %4749 = vmatpush.bf16.msra.mxu0 %v4237
  %4750 = vmatpush.bf16.msra.mxu0 %v4230
  %4751 = vmatpush.bf16.msra.mxu0 %v4223
  %4752 = vmatpush.bf16.msra.mxu0 %v4216
  %4753 = vmatmul.bf16.gmra.mxu0 %v3123
  %v4754 = vpop.f32.mrf.mxu0
  %v4755 = vadd.f32 %v4741, %v4754
  %v4756 = vpop.f32.mrf.mxu0
  %v4757 = vadd.f32 %v4743, %v4756
  %4758 = vdwg.mxu0
  %4759 = vmatpush.bf16.msra.mxu0 %v4321
  %4760 = vmatpush.bf16.msra.mxu0 %v4314
  %4761 = vmatpush.bf16.msra.mxu0 %v4307
  %4762 = vmatpush.bf16.msra.mxu0 %v4300
  %4763 = vmatpush.bf16.msra.mxu0 %v4293
  %4764 = vmatpush.bf16.msra.mxu0 %v4286
  %4765 = vmatpush.bf16.msra.mxu0 %v4279
  %4766 = vmatpush.bf16.msra.mxu0 %v4272
  %4767 = vmatmul.bf16.gmra.mxu0 %v3124
  %v4768 = vpop.f32.mrf.mxu0
  %v4769 = vadd.f32 %v4755, %v4768
  %v4770 = vpop.f32.mrf.mxu0
  %v4771 = vadd.f32 %v4757, %v4770
  %4772 = vdwg.mxu0
  %4773 = vmatpush.bf16.msra.mxu0 %v4154
  %4774 = vmatpush.bf16.msra.mxu0 %v4147
  %4775 = vmatpush.bf16.msra.mxu0 %v4140
  %4776 = vmatpush.bf16.msra.mxu0 %v4133
  %4777 = vmatpush.bf16.msra.mxu0 %v4126
  %4778 = vmatpush.bf16.msra.mxu0 %v4119
  %4779 = vmatpush.bf16.msra.mxu0 %v4112
  %4780 = vmatpush.bf16.msra.mxu0 %v4105
  %4781 = vmatmul.bf16.gmra.mxu0 %v3121
  %v4782 = vpop.f32.mrf.mxu0
  %v4783 = vadd.f32 %v3387, %v4782
  %v4784 = vpop.f32.mrf.mxu0
  %v4785 = vadd.f32 %v3387, %v4784
  %4786 = vdwg.mxu0
  %4787 = vmatpush.bf16.msra.mxu0 %v4210
  %4788 = vmatpush.bf16.msra.mxu0 %v4203
  %4789 = vmatpush.bf16.msra.mxu0 %v4196
  %4790 = vmatpush.bf16.msra.mxu0 %v4189
  %4791 = vmatpush.bf16.msra.mxu0 %v4182
  %4792 = vmatpush.bf16.msra.mxu0 %v4175
  %4793 = vmatpush.bf16.msra.mxu0 %v4168
  %4794 = vmatpush.bf16.msra.mxu0 %v4161
  %4795 = vmatmul.bf16.gmra.mxu0 %v3122
  %v4796 = vpop.f32.mrf.mxu0
  %v4797 = vadd.f32 %v4783, %v4796
  %v4798 = vpop.f32.mrf.mxu0
  %v4799 = vadd.f32 %v4785, %v4798
  %4800 = vdwg.mxu0
  %4801 = vmatpush.bf16.msra.mxu0 %v4266
  %4802 = vmatpush.bf16.msra.mxu0 %v4259
  %4803 = vmatpush.bf16.msra.mxu0 %v4252
  %4804 = vmatpush.bf16.msra.mxu0 %v4245
  %4805 = vmatpush.bf16.msra.mxu0 %v4238
  %4806 = vmatpush.bf16.msra.mxu0 %v4231
  %4807 = vmatpush.bf16.msra.mxu0 %v4224
  %4808 = vmatpush.bf16.msra.mxu0 %v4217
  %4809 = vmatmul.bf16.gmra.mxu0 %v3123
  %v4810 = vpop.f32.mrf.mxu0
  %v4811 = vadd.f32 %v4797, %v4810
  %v4812 = vpop.f32.mrf.mxu0
  %v4813 = vadd.f32 %v4799, %v4812
  %4814 = vdwg.mxu0
  %4815 = vmatpush.bf16.msra.mxu0 %v4322
  %4816 = vmatpush.bf16.msra.mxu0 %v4315
  %4817 = vmatpush.bf16.msra.mxu0 %v4308
  %4818 = vmatpush.bf16.msra.mxu0 %v4301
  %4819 = vmatpush.bf16.msra.mxu0 %v4294
  %4820 = vmatpush.bf16.msra.mxu0 %v4287
  %4821 = vmatpush.bf16.msra.mxu0 %v4280
  %4822 = vmatpush.bf16.msra.mxu0 %v4273
  %4823 = vmatmul.bf16.gmra.mxu0 %v3124
  %v4824 = vpop.f32.mrf.mxu0
  %v4825 = vadd.f32 %v4811, %v4824
  %v4826 = vpop.f32.mrf.mxu0
  %v4827 = vadd.f32 %v4813, %v4826
  %4828 = vdwg.mxu0
  %4829 = vmatpush.bf16.msra.mxu0 %v4155
  %4830 = vmatpush.bf16.msra.mxu0 %v4148
  %4831 = vmatpush.bf16.msra.mxu0 %v4141
  %4832 = vmatpush.bf16.msra.mxu0 %v4134
  %4833 = vmatpush.bf16.msra.mxu0 %v4127
  %4834 = vmatpush.bf16.msra.mxu0 %v4120
  %4835 = vmatpush.bf16.msra.mxu0 %v4113
  %4836 = vmatpush.bf16.msra.mxu0 %v4106
  %4837 = vmatmul.bf16.gmra.mxu0 %v3121
  %v4838 = vpop.f32.mrf.mxu0
  %v4839 = vadd.f32 %v3388, %v4838
  %v4840 = vpop.f32.mrf.mxu0
  %v4841 = vadd.f32 %v3388, %v4840
  %4842 = vdwg.mxu0
  %4843 = vmatpush.bf16.msra.mxu0 %v4211
  %4844 = vmatpush.bf16.msra.mxu0 %v4204
  %4845 = vmatpush.bf16.msra.mxu0 %v4197
  %4846 = vmatpush.bf16.msra.mxu0 %v4190
  %4847 = vmatpush.bf16.msra.mxu0 %v4183
  %4848 = vmatpush.bf16.msra.mxu0 %v4176
  %4849 = vmatpush.bf16.msra.mxu0 %v4169
  %4850 = vmatpush.bf16.msra.mxu0 %v4162
  %4851 = vmatmul.bf16.gmra.mxu0 %v3122
  %v4852 = vpop.f32.mrf.mxu0
  %v4853 = vadd.f32 %v4839, %v4852
  %v4854 = vpop.f32.mrf.mxu0
  %v4855 = vadd.f32 %v4841, %v4854
  %4856 = vdwg.mxu0
  %4857 = vmatpush.bf16.msra.mxu0 %v4267
  %4858 = vmatpush.bf16.msra.mxu0 %v4260
  %4859 = vmatpush.bf16.msra.mxu0 %v4253
  %4860 = vmatpush.bf16.msra.mxu0 %v4246
  %4861 = vmatpush.bf16.msra.mxu0 %v4239
  %4862 = vmatpush.bf16.msra.mxu0 %v4232
  %4863 = vmatpush.bf16.msra.mxu0 %v4225
  %4864 = vmatpush.bf16.msra.mxu0 %v4218
  %4865 = vmatmul.bf16.gmra.mxu0 %v3123
  %v4866 = vpop.f32.mrf.mxu0
  %v4867 = vadd.f32 %v4853, %v4866
  %v4868 = vpop.f32.mrf.mxu0
  %v4869 = vadd.f32 %v4855, %v4868
  %4870 = vdwg.mxu0
  %4871 = vmatpush.bf16.msra.mxu0 %v4323
  %4872 = vmatpush.bf16.msra.mxu0 %v4316
  %4873 = vmatpush.bf16.msra.mxu0 %v4309
  %4874 = vmatpush.bf16.msra.mxu0 %v4302
  %4875 = vmatpush.bf16.msra.mxu0 %v4295
  %4876 = vmatpush.bf16.msra.mxu0 %v4288
  %4877 = vmatpush.bf16.msra.mxu0 %v4281
  %4878 = vmatpush.bf16.msra.mxu0 %v4274
  %4879 = vmatmul.bf16.gmra.mxu0 %v3124
  %v4880 = vpop.f32.mrf.mxu0
  %v4881 = vadd.f32 %v4867, %v4880
  %v4882 = vpop.f32.mrf.mxu0
  %v4883 = vadd.f32 %v4869, %v4882
  %4884 = vdwg.mxu0
  %4885 = vmatpush.bf16.msra.mxu0 %v4156
  %4886 = vmatpush.bf16.msra.mxu0 %v4149
  %4887 = vmatpush.bf16.msra.mxu0 %v4142
  %4888 = vmatpush.bf16.msra.mxu0 %v4135
  %4889 = vmatpush.bf16.msra.mxu0 %v4128
  %4890 = vmatpush.bf16.msra.mxu0 %v4121
  %4891 = vmatpush.bf16.msra.mxu0 %v4114
  %4892 = vmatpush.bf16.msra.mxu0 %v4107
  %4893 = vmatmul.bf16.gmra.mxu0 %v3121
  %v4894 = vpop.f32.mrf.mxu0
  %v4895 = vadd.f32 %v3389, %v4894
  %v4896 = vpop.f32.mrf.mxu0
  %v4897 = vadd.f32 %v3389, %v4896
  %4898 = vdwg.mxu0
  %4899 = vmatpush.bf16.msra.mxu0 %v4212
  %4900 = vmatpush.bf16.msra.mxu0 %v4205
  %4901 = vmatpush.bf16.msra.mxu0 %v4198
  %4902 = vmatpush.bf16.msra.mxu0 %v4191
  %4903 = vmatpush.bf16.msra.mxu0 %v4184
  %4904 = vmatpush.bf16.msra.mxu0 %v4177
  %4905 = vmatpush.bf16.msra.mxu0 %v4170
  %4906 = vmatpush.bf16.msra.mxu0 %v4163
  %4907 = vmatmul.bf16.gmra.mxu0 %v3122
  %v4908 = vpop.f32.mrf.mxu0
  %v4909 = vadd.f32 %v4895, %v4908
  %v4910 = vpop.f32.mrf.mxu0
  %v4911 = vadd.f32 %v4897, %v4910
  %4912 = vdwg.mxu0
  %4913 = vmatpush.bf16.msra.mxu0 %v4268
  %4914 = vmatpush.bf16.msra.mxu0 %v4261
  %4915 = vmatpush.bf16.msra.mxu0 %v4254
  %4916 = vmatpush.bf16.msra.mxu0 %v4247
  %4917 = vmatpush.bf16.msra.mxu0 %v4240
  %4918 = vmatpush.bf16.msra.mxu0 %v4233
  %4919 = vmatpush.bf16.msra.mxu0 %v4226
  %4920 = vmatpush.bf16.msra.mxu0 %v4219
  %4921 = vmatmul.bf16.gmra.mxu0 %v3123
  %v4922 = vpop.f32.mrf.mxu0
  %v4923 = vadd.f32 %v4909, %v4922
  %v4924 = vpop.f32.mrf.mxu0
  %v4925 = vadd.f32 %v4911, %v4924
  %4926 = vdwg.mxu0
  %4927 = vmatpush.bf16.msra.mxu0 %v4324
  %4928 = vmatpush.bf16.msra.mxu0 %v4317
  %4929 = vmatpush.bf16.msra.mxu0 %v4310
  %4930 = vmatpush.bf16.msra.mxu0 %v4303
  %4931 = vmatpush.bf16.msra.mxu0 %v4296
  %4932 = vmatpush.bf16.msra.mxu0 %v4289
  %4933 = vmatpush.bf16.msra.mxu0 %v4282
  %4934 = vmatpush.bf16.msra.mxu0 %v4275
  %4935 = vmatmul.bf16.gmra.mxu0 %v3124
  %v4936 = vpop.f32.mrf.mxu0
  %v4937 = vadd.f32 %v4923, %v4936
  %v4938 = vpop.f32.mrf.mxu0
  %v4939 = vadd.f32 %v4925, %v4938
  %4940 = vdwg.mxu0
  %v4941 = vmul.f32 %v4601, 0.5
  %v4942 = vmul.f32 %v4657, 0.5
  %v4943 = vmul.f32 %v4713, 0.5
  %v4944 = vmul.f32 %v4769, 0.5
  %v4945 = vmul.f32 %v4825, 0.5
  %v4946 = vmul.f32 %v4881, 0.5
  %v4947 = vmul.f32 %v4937, 0.5
  %v4948 = vmul.f32 %v4603, 0.5
  %v4949 = vmul.f32 %v4659, 0.5
  %v4950 = vmul.f32 %v4715, 0.5
  %v4951 = vmul.f32 %v4771, 0.5
  %v4952 = vmul.f32 %v4827, 0.5
  %v4953 = vmul.f32 %v4883, 0.5
  %v4954 = vmul.f32 %v4939, 0.5
  %v4955 = vtanh.pop %v4941
  %v4956 = vtanh.pop %v4942
  %v4957 = vtanh.pop %v4943
  %v4958 = vtanh.pop %v4944
  %v4959 = vtanh.pop %v4945
  %v4960 = vtanh.pop %v4946
  %v4961 = vtanh.pop %v4947
  %v4962 = vtanh.pop %v4948
  %v4963 = vtanh.pop %v4949
  %v4964 = vtanh.pop %v4950
  %v4965 = vtanh.pop %v4951
  %v4966 = vtanh.pop %v4952
  %v4967 = vtanh.pop %v4953
  %v4968 = vtanh.pop %v4954
  %v4969 = vmul.f32 %v4955, 0.5
  %v4970 = vmul.f32 %v4956, 0.5
  %v4971 = vmul.f32 %v4957, 0.5
  %v4972 = vmul.f32 %v4958, 0.5
  %v4973 = vmul.f32 %v4959, 0.5
  %v4974 = vmul.f32 %v4960, 0.5
  %v4975 = vmul.f32 %v4961, 0.5
  %v4976 = vmul.f32 %v4962, 0.5
  %v4977 = vmul.f32 %v4963, 0.5
  %v4978 = vmul.f32 %v4964, 0.5
  %v4979 = vmul.f32 %v4965, 0.5
  %v4980 = vmul.f32 %v4966, 0.5
  %v4981 = vmul.f32 %v4967, 0.5
  %v4982 = vmul.f32 %v4968, 0.5
  %v4983 = vadd.f32 %v4969, 0.5
  %v4984 = vadd.f32 %v4970, 0.5
  %v4985 = vadd.f32 %v4971, 0.5
  %v4986 = vadd.f32 %v4972, 0.5
  %v4987 = vadd.f32 %v4973, 0.5
  %v4988 = vadd.f32 %v4974, 0.5
  %v4989 = vadd.f32 %v4975, 0.5
  %v4990 = vadd.f32 %v4976, 0.5
  %v4991 = vadd.f32 %v4977, 0.5
  %v4992 = vadd.f32 %v4978, 0.5
  %v4993 = vadd.f32 %v4979, 0.5
  %v4994 = vadd.f32 %v4980, 0.5
  %v4995 = vadd.f32 %v4981, 0.5
  %v4996 = vadd.f32 %v4982, 0.5
  %v4997 = vpack.c.bf16 %v4984, %v4983
  %v4998 = vpack.c.bf16 %v4986, %v4985
  %v4999 = vpack.c.bf16 %v4988, %v4987
  %v5000 = vpack.c.bf16 %v4989, %v4989
  %v5001 = vpack.c.bf16 %v4991, %v4990
  %v5002 = vpack.c.bf16 %v4993, %v4992
  %v5003 = vpack.c.bf16 %v4995, %v4994
  %v5004 = vpack.c.bf16 %v4996, %v4996
  %5005 = vst [vmem:[%s14] sm:$0xff] %v4997
  %5006 = vst [vmem:[%s14 + $0x8] sm:$0xff] %v4998
  %5007 = vst [vmem:[%s14 + $0x10] sm:$0xff] %v4999
  %vm5008 = vcmask 125952
  %5009 = vst.msk [vmem:[%s14 + $0x18] sm:$0xf] %vm5008, %v5000
  %5010 = vst [vmem:[%s14 + $0x1c] sm:$0xff] %v5001
  %5011 = vst [vmem:[%s14 + $0x24] sm:$0xff] %v5002
  %5012 = vst [vmem:[%s14 + $0x2c] sm:$0xff] %v5003
  %5013 = vst.msk [vmem:[%s14 + $0x34] sm:$0xf] %vm5008, %v5004
  %v5014 = vpack.c.bf16 %v2445, %v2417
  %v5015 = vpack.c.bf16 %v2447, %v2419
  %5016 = vst [vmem:[%s15] sm:$0xff] %v5014
  %5017 = vst [vmem:[%s15 + $0xc] sm:$0xff] %v5015
  %5018 = vst [vmem:[%s15 + $0x8] sm:$0xf] %v2463
  %5019 = vst [vmem:[%s15 + $0x14] sm:$0xf] %v2464
  // Predicated region
  $region58: #{vae_forward.1} parent=0 // pred_check
    _
  $region59: #{vae_forward.1} parent=0 // pred_check_branch
    %5021 = sbr.rel (0) target = $region61
  $region60: #{vae_forward.1} parent=0 // pred_region
    _
  $region61: #{vae_forward.1} parent=0 // pred_fallthru
    _
  // Predicated region
  $region62: #{vae_forward.1} parent=0 // pred_check
    _
  $region63: #{vae_forward.1} parent=0 // pred_check_branch
    %5023 = sbr.rel (0) target = $region65
  $region64: #{vae_forward.1} parent=0 // pred_region
    _
  $region65: #{vae_forward.1} parent=0 // pred_fallthru
    _
  // Predicated region
  $region66: #{vae_forward.1} parent=0 // pred_check
    _
  $region67: #{vae_forward.1} parent=0 // pred_check_branch
    %5025 = sbr.rel (0) target = $region69
  $region68: #{vae_forward.1} parent=0 // pred_region
    _
  $region69: #{vae_forward.1} parent=0 // pred_fallthru
    _
  // Predicated region
  $region70: #{vae_forward.1} parent=0 // pred_check
    _
  $region71: #{vae_forward.1} parent=0 // pred_check_branch
    %5027 = sbr.rel (0) target = $region73
  $region72: #{vae_forward.1} parent=0 // pred_region
    _
  $region73: #{vae_forward.1} parent=0 // pred_fallthru
    _

</llo_original>
